<compile_context>
chip_gen: v7x
topology: tpu7x:2x2x1
jax: 0.10.0
libtpu: 0.0.40
codegen_flags: <defaults>
</compile_context>

<pallas_src>
import jax
import jax.numpy as jnp
from jax.experimental import pallas as pl
from jax.experimental.pallas import tpu as pltpu

HIDDEN = 32          # hidden_size (small synthetic config)
OUTPUT_SIZE = 20     # output_size (vocab)
MAX_WORDS = 5        # max_length
DECODE_STEPS = 8     # number of fused decoder steps in the demo


def _decoder_kernel(tok_ref,                                  # (T,) int32 in SMEM (scalar prefetch)
                    emb_ref, hid0_ref, enc_ref,               # (V,H), (1,H), (L,H)
                    wa_e_ref, wa_h_ref, ba_ref,               # (H,L), (H,L), (1,L)
                    wc_e_ref, wc_c_ref, bc_ref,               # (H,H), (H,H), (1,H)
                    w_ih_ref, b_ih_ref, w_hh_ref, b_hh_ref,   # (H,3H), (1,3H), (H,3H), (1,3H)
                    w_out_ref, b_out_ref,                     # (H,V), (1,V)
                    logp_ref, hseq_ref, attn_ref,             # (T,V), (T,H), (T,L) outputs
                    e_scr):                                    # (T,H) VMEM scratch
    f32 = jnp.float32
    H = HIDDEN
    T = hseq_ref.shape[0]

    # ---- prologue: gather all T embedding rows once (off the recurrent chain) ----
    for t in range(T):
        e_scr[pl.ds(t, 1), :] = emb_ref[pl.ds(tok_ref[t], 1), :]
    E = e_scr[...]                                                           # (T, H)
    # (dropout: eval-mode identity, see TODO above)

    # ---- prologue: embedding-dependent halves as batched T-row MXU matmuls ----
    att_e = jnp.dot(E, wa_e_ref[...], preferred_element_type=f32) + ba_ref[...]   # (T, L)
    comb_e = jnp.dot(E, wc_e_ref[...], preferred_element_type=f32) + bc_ref[...]  # (T, H)

    enc = enc_ref[...]
    wa_h = wa_h_ref[...]
    wc_c = wc_c_ref[...]
    w_ih = w_ih_ref[...]
    b_ih = b_ih_ref[...]
    w_hh = w_hh_ref[...]
    b_hh = b_hh_ref[...]

    # ---- serial recurrence: only the hidden-dependent work stays on the chain ----
    h = hid0_ref[...]                                                        # (1, H)
    for t in range(T):
        # attention_weights = softmax(Linear(cat(embedded, hidden)))
        att_logits = att_e[t:t + 1, :] + jnp.dot(h, wa_h, preferred_element_type=f32)   # (1, L)
        m = jnp.max(att_logits, axis=-1, keepdims=True)
        p = jnp.exp(att_logits - m)
        aw = p * pl.reciprocal(jnp.sum(p, axis=-1, keepdims=True))           # (1, L) exact recip

        # attention_applied = bmm(attn_weights, encoder_outputs)
        ctx = jnp.dot(aw, enc, preferred_element_type=f32)                   # (1, H)

        # attention_combine(cat(embedded, context)) + ReLU
        x = jnp.maximum(
            comb_e[t:t + 1, :] + jnp.dot(ctx, wc_c, preferred_element_type=f32), 0.0)

        # single GRU step (PyTorch semantics, gate order r, z, n)
        gi = jnp.dot(x, w_ih, preferred_element_type=f32) + b_ih             # (1, 3H)
        gh = jnp.dot(h, w_hh, preferred_element_type=f32) + b_hh             # (1, 3H)
        r = jax.nn.sigmoid(gi[:, 0:H] + gh[:, 0:H])
        z = jax.nn.sigmoid(gi[:, H:2 * H] + gh[:, H:2 * H])
        n = jnp.tanh(gi[:, 2 * H:3 * H] + r * gh[:, 2 * H:3 * H])
        h = (1.0 - z) * n + z * h                                            # (1, H)

        # store per-step results into the resident outputs (static row offsets)
        hseq_ref[pl.ds(t, 1), :] = h
        attn_ref[pl.ds(t, 1), :] = aw

    # ---- epilogue: batched output projection + log_softmax (one (T,H)x(H,V) matmul) ----
    h_all = hseq_ref[...]                                                    # (T, H)
    logits = jnp.dot(h_all, w_out_ref[...], preferred_element_type=f32) + b_out_ref[...]
    lm = jnp.max(logits, axis=-1, keepdims=True)
    lse = jnp.log(jnp.sum(jnp.exp(logits - lm), axis=-1, keepdims=True)) + lm
    logp_ref[...] = logits - lse


@jax.jit
def attention_decoder_decode(tokens, hidden, encoder_outputs, params):
    """Run T fused decoder steps (each step == the PyTorch module's forward)."""
    T = tokens.shape[0]
    H, V, L = HIDDEN, OUTPUT_SIZE, MAX_WORDS

    tensor_args = [
        params['embedding'],                 # (V, H) flat table, row-gathered in prologue
        hidden.reshape(1, H),                # initial hidden
        encoder_outputs,                     # (L, H)
        params['wa'][:H, :], params['wa'][H:, :], params['ba'],     # attention halves + bias
        params['wc'][:H, :], params['wc'][H:, :], params['bc'],     # combine halves + bias
        params['w_ih'], params['b_ih'],      # GRU input weights
        params['w_hh'], params['b_hh'],      # GRU hidden weights
        params['w_out'], params['b_out'],    # out projection
    ]

    def resident(shape):
        nd = len(shape)
        # whole array, constant block index -> DMA'd once, stays resident in VMEM
        return pl.BlockSpec(shape, lambda i, tok, nd=nd: (0,) * nd)

    flops = (T * 2 * (H * L + L * H + H * H + 2 * H * 3 * H)        # recurrent chain
             + T * 2 * (H * L + H * H + H * V))                     # prologue + epilogue
    transcendentals = T * (L + 1 + 2 * H + H + V + 1)
    bytes_accessed = (sum(a.size * 4 for a in tensor_args)
                      + T * (V + H + L) * 4 + T * 4)

    logp, h_seq, attn = pl.pallas_call(
        _decoder_kernel,
        out_shape=(jax.ShapeDtypeStruct((T, V), jnp.float32),
                   jax.ShapeDtypeStruct((T, H), jnp.float32),
                   jax.ShapeDtypeStruct((T, L), jnp.float32)),
        grid_spec=pltpu.PrefetchScalarGridSpec(
            num_scalar_prefetch=1,
            grid=(1,),                       # single grid step; decode loop is fused in-kernel
            in_specs=[resident(a.shape) for a in tensor_args],
            out_specs=[pl.BlockSpec((T, V), lambda i, tok: (0, 0)),
                       pl.BlockSpec((T, H), lambda i, tok: (0, 0)),
                       pl.BlockSpec((T, L), lambda i, tok: (0, 0))],
            scratch_shapes=[pltpu.VMEM((T, H), jnp.float32)],
        ),
        compiler_params=pltpu.CompilerParams(
            dimension_semantics=("arbitrary",)),
        cost_estimate=pl.CostEstimate(
            flops=flops, transcendentals=transcendentals,
            bytes_accessed=bytes_accessed),
    )(tokens, *tensor_args)

    return logp, h_seq, attn


def attention_decoder_forward(tok, hidden, encoder_outputs, params):
    """Single-step API matching the PyTorch forward(input, hidden, encoder_outputs)."""
    logp, h_seq, attn = attention_decoder_decode(tok.reshape(1), hidden,
                                                 encoder_outputs, params)
    return logp, h_seq[-1].reshape(1, 1, HIDDEN), attn


def init_params(key):
    H, V, L = HIDDEN, OUTPUT_SIZE, MAX_WORDS
    ks = jax.random.split(key, 12)

    def mat(k, shape, scale=0.1):
        return (scale * jax.random.normal(k, shape)).astype(jnp.float32)

    return {
        'embedding': mat(ks[0], (V, H), 1.0),
        # attention: Linear(2H -> L), rows [embedded ; hidden]
        'wa': mat(ks[1], (2 * H, L)), 'ba': mat(ks[2], (1, L)),
        # attention_combine: Linear(2H -> H), rows [embedded ; context]
        'wc': mat(ks[3], (2 * H, H)), 'bc': mat(ks[4], (1, H)),
        # GRU weight_ih / weight_hh packed as [r | z | n] columns, plus both biases
        'w_ih': mat(ks[5], (H, 3 * H)), 'b_ih': mat(ks[6], (1, 3 * H)),
        'w_hh': mat(ks[7], (H, 3 * H)), 'b_hh': mat(ks[8], (1, 3 * H)),
        # out: Linear(H -> V)
        'w_out': mat(ks[9], (H, V)), 'b_out': mat(ks[10], (1, V)),
    }


def reference_decode(tokens, hidden, enc, p):
    """Pure-JAX reference: T sequential applications of the PyTorch forward (eval-mode dropout)."""
    H = HIDDEN
    h = hidden.reshape(1, H)
    logps, hs, attns = [], [], []
    for i in range(int(tokens.shape[0])):
        e = p['embedding'][tokens[i]][None, :]
        att = jax.nn.softmax(jnp.concatenate([e, h], axis=1) @ p['wa'] + p['ba'], axis=-1)
        ctx = att @ enc
        x = jax.nn.relu(jnp.concatenate([e, ctx], axis=1) @ p['wc'] + p['bc'])
        gi = x @ p['w_ih'] + p['b_ih']
        gh = h @ p['w_hh'] + p['b_hh']
        r = jax.nn.sigmoid(gi[:, :H] + gh[:, :H])
        z = jax.nn.sigmoid(gi[:, H:2 * H] + gh[:, H:2 * H])
        n = jnp.tanh(gi[:, 2 * H:] + r * gh[:, 2 * H:])
        h = (1.0 - z) * n + z * h
        logp = jax.nn.log_softmax(h @ p['w_out'] + p['b_out'], axis=-1)
        logps.append(logp)
        hs.append(h)
        attns.append(att)
    return (jnp.concatenate(logps, 0), jnp.concatenate(hs, 0), jnp.concatenate(attns, 0))


if __name__ == "__main__":
    key = jax.random.PRNGKey(0)
    k_par, k_enc, k_tok = jax.random.split(key, 3)

    params = init_params(k_par)
    hidden = jnp.zeros((1, 1, HIDDEN), dtype=jnp.float32)               # initHidden()
    encoder_outputs = jax.random.normal(k_enc, (MAX_WORDS, HIDDEN)).astype(jnp.float32)

    # ---- multi-step decode: one fused pallas_call over DECODE_STEPS tokens ----
    tokens = jax.random.randint(k_tok, (DECODE_STEPS,), 0, OUTPUT_SIZE, dtype=jnp.int32)
    logp, h_seq, attn = attention_decoder_decode(tokens, hidden, encoder_outputs, params)
    jax.block_until_ready((logp, h_seq, attn))

    logp_r, h_r, attn_r = reference_decode(tokens, hidden, encoder_outputs, params)
    assert logp.shape == (DECODE_STEPS, OUTPUT_SIZE)
    assert h_seq.shape == (DECODE_STEPS, HIDDEN)
    assert attn.shape == (DECODE_STEPS, MAX_WORDS)
    assert jnp.allclose(logp, logp_r, atol=1e-4)
    assert jnp.allclose(h_seq, h_r, atol=1e-4)
    assert jnp.allclose(attn, attn_r, atol=1e-4)

    # ---- single-step call matching the PyTorch module signature ----
    tok = jnp.array([3], dtype=jnp.int32)
    logp1, h1, attn1 = attention_decoder_forward(tok, hidden, encoder_outputs, params)
    jax.block_until_ready((logp1, h1, attn1))
    logp1_r, h1_r, attn1_r = reference_decode(tok, hidden, encoder_outputs, params)
    assert logp1.shape == (1, OUTPUT_SIZE)
    assert h1.shape == (1, 1, HIDDEN)
    assert attn1.shape == (1, MAX_WORDS)
    assert jnp.allclose(logp1, logp1_r, atol=1e-4)
    assert jnp.allclose(h1.reshape(1, HIDDEN), h1_r, atol=1e-4)
    assert jnp.allclose(attn1, attn1_r, atol=1e-4)

    print("KERNEL_OK")
</pallas_src>

<mosaic_0001>
module attributes {stable_mosaic.version = 11 : i64} {
  func.func @_decoder_kernel(%arg0: i32, %arg1: memref<8xi32, #tpu.memory_space<smem>>, %arg2: memref<20x32xf32, #tpu.memory_space<vmem>>, %arg3: memref<1x32xf32, #tpu.memory_space<vmem>>, %arg4: memref<5x32xf32, #tpu.memory_space<vmem>>, %arg5: memref<32x5xf32, #tpu.memory_space<vmem>>, %arg6: memref<32x5xf32, #tpu.memory_space<vmem>>, %arg7: memref<1x5xf32, #tpu.memory_space<vmem>>, %arg8: memref<32x32xf32, #tpu.memory_space<vmem>>, %arg9: memref<32x32xf32, #tpu.memory_space<vmem>>, %arg10: memref<1x32xf32, #tpu.memory_space<vmem>>, %arg11: memref<32x96xf32, #tpu.memory_space<vmem>>, %arg12: memref<1x96xf32, #tpu.memory_space<vmem>>, %arg13: memref<32x96xf32, #tpu.memory_space<vmem>>, %arg14: memref<1x96xf32, #tpu.memory_space<vmem>>, %arg15: memref<32x20xf32, #tpu.memory_space<vmem>>, %arg16: memref<1x20xf32, #tpu.memory_space<vmem>>, %arg17: memref<8x20xf32, #tpu.memory_space<vmem>>, %arg18: memref<8x32xf32, #tpu.memory_space<vmem>>, %arg19: memref<8x5xf32, #tpu.memory_space<vmem>>, %arg20: memref<8x32xf32, #tpu.memory_space<vmem>>) attributes {dimension_semantics = [#tpu.dimension_semantics<arbitrary>], iteration_bounds = array<i64: 1>, scalar_prefetch = 1 : i64, scratch_operands = 1 : i64, tpu.core_type = #tpu.core_type<tc>, window_params = [{pipeline_mode = #tpu.pipeline_mode<synchronous>, transform_indices = @transform_0, window_bounds = array<i64: 20, 32>}, {pipeline_mode = #tpu.pipeline_mode<synchronous>, transform_indices = @transform_1, window_bounds = array<i64: 1, 32>}, {pipeline_mode = #tpu.pipeline_mode<synchronous>, transform_indices = @transform_2, window_bounds = array<i64: 5, 32>}, {pipeline_mode = #tpu.pipeline_mode<synchronous>, transform_indices = @transform_3, window_bounds = array<i64: 32, 5>}, {pipeline_mode = #tpu.pipeline_mode<synchronous>, transform_indices = @transform_4, window_bounds = array<i64: 32, 5>}, {pipeline_mode = #tpu.pipeline_mode<synchronous>, transform_indices = @transform_5, window_bounds = array<i64: 1, 5>}, {pipeline_mode = #tpu.pipeline_mode<synchronous>, transform_indices = @transform_6, window_bounds = array<i64: 32, 32>}, {pipeline_mode = #tpu.pipeline_mode<synchronous>, transform_indices = @transform_7, window_bounds = array<i64: 32, 32>}, {pipeline_mode = #tpu.pipeline_mode<synchronous>, transform_indices = @transform_8, window_bounds = array<i64: 1, 32>}, {pipeline_mode = #tpu.pipeline_mode<synchronous>, transform_indices = @transform_9, window_bounds = array<i64: 32, 96>}, {pipeline_mode = #tpu.pipeline_mode<synchronous>, transform_indices = @transform_10, window_bounds = array<i64: 1, 96>}, {pipeline_mode = #tpu.pipeline_mode<synchronous>, transform_indices = @transform_11, window_bounds = array<i64: 32, 96>}, {pipeline_mode = #tpu.pipeline_mode<synchronous>, transform_indices = @transform_12, window_bounds = array<i64: 1, 96>}, {pipeline_mode = #tpu.pipeline_mode<synchronous>, transform_indices = @transform_13, window_bounds = array<i64: 32, 20>}, {pipeline_mode = #tpu.pipeline_mode<synchronous>, transform_indices = @transform_14, window_bounds = array<i64: 1, 20>}, {pipeline_mode = #tpu.pipeline_mode<synchronous>, transform_indices = @transform_15, window_bounds = array<i64: 8, 20>}, {pipeline_mode = #tpu.pipeline_mode<synchronous>, transform_indices = @transform_16, window_bounds = array<i64: 8, 32>}, {pipeline_mode = #tpu.pipeline_mode<synchronous>, transform_indices = @transform_17, window_bounds = array<i64: 8, 5>}]} {
    %c0 = arith.constant 0 : index
    %0 = memref.load %arg1[%c0] : memref<8xi32, #tpu.memory_space<smem>>
    %1 = arith.index_cast %0 : i32 to index
    %c0_0 = arith.constant 0 : index
    %2 = vector.load %arg2[%1, %c0_0] : memref<20x32xf32, #tpu.memory_space<vmem>>, vector<1x32xf32>
    %c0_1 = arith.constant 0 : index
    %c0_2 = arith.constant 0 : index
    %3 = vector.load %arg20[%c0_1, %c0_2] : memref<8x32xf32, #tpu.memory_space<vmem>>, vector<1x32xf32>
    tpu.vector_store %arg20[%c0_1, %c0_2], %2 {strides = array<i32>} : memref<8x32xf32, #tpu.memory_space<vmem>>, vector<1x32xf32>,
    %c1 = arith.constant 1 : index
    %4 = memref.load %arg1[%c1] : memref<8xi32, #tpu.memory_space<smem>>
    %5 = arith.index_cast %4 : i32 to index
    %c0_3 = arith.constant 0 : index
    %6 = vector.load %arg2[%5, %c0_3] : memref<20x32xf32, #tpu.memory_space<vmem>>, vector<1x32xf32>
    %c1_4 = arith.constant 1 : index
    %c0_5 = arith.constant 0 : index
    %7 = vector.load %arg20[%c1_4, %c0_5] : memref<8x32xf32, #tpu.memory_space<vmem>>, vector<1x32xf32>
    tpu.vector_store %arg20[%c1_4, %c0_5], %6 {strides = array<i32>} : memref<8x32xf32, #tpu.memory_space<vmem>>, vector<1x32xf32>,
    %c2 = arith.constant 2 : index
    %8 = memref.load %arg1[%c2] : memref<8xi32, #tpu.memory_space<smem>>
    %9 = arith.index_cast %8 : i32 to index
    %c0_6 = arith.constant 0 : index
    %10 = vector.load %arg2[%9, %c0_6] : memref<20x32xf32, #tpu.memory_space<vmem>>, vector<1x32xf32>
    %c2_7 = arith.constant 2 : index
    %c0_8 = arith.constant 0 : index
    %11 = vector.load %arg20[%c2_7, %c0_8] : memref<8x32xf32, #tpu.memory_space<vmem>>, vector<1x32xf32>
    tpu.vector_store %arg20[%c2_7, %c0_8], %10 {strides = array<i32>} : memref<8x32xf32, #tpu.memory_space<vmem>>, vector<1x32xf32>,
    %c3 = arith.constant 3 : index
    %12 = memref.load %arg1[%c3] : memref<8xi32, #tpu.memory_space<smem>>
    %13 = arith.index_cast %12 : i32 to index
    %c0_9 = arith.constant 0 : index
    %14 = vector.load %arg2[%13, %c0_9] : memref<20x32xf32, #tpu.memory_space<vmem>>, vector<1x32xf32>
    %c3_10 = arith.constant 3 : index
    %c0_11 = arith.constant 0 : index
    %15 = vector.load %arg20[%c3_10, %c0_11] : memref<8x32xf32, #tpu.memory_space<vmem>>, vector<1x32xf32>
    tpu.vector_store %arg20[%c3_10, %c0_11], %14 {strides = array<i32>} : memref<8x32xf32, #tpu.memory_space<vmem>>, vector<1x32xf32>,
    %c4 = arith.constant 4 : index
    %16 = memref.load %arg1[%c4] : memref<8xi32, #tpu.memory_space<smem>>
    %17 = arith.index_cast %16 : i32 to index
    %c0_12 = arith.constant 0 : index
    %18 = vector.load %arg2[%17, %c0_12] : memref<20x32xf32, #tpu.memory_space<vmem>>, vector<1x32xf32>
    %c4_13 = arith.constant 4 : index
    %c0_14 = arith.constant 0 : index
    %19 = vector.load %arg20[%c4_13, %c0_14] : memref<8x32xf32, #tpu.memory_space<vmem>>, vector<1x32xf32>
    tpu.vector_store %arg20[%c4_13, %c0_14], %18 {strides = array<i32>} : memref<8x32xf32, #tpu.memory_space<vmem>>, vector<1x32xf32>,
    %c5 = arith.constant 5 : index
    %20 = memref.load %arg1[%c5] : memref<8xi32, #tpu.memory_space<smem>>
    %21 = arith.index_cast %20 : i32 to index
    %c0_15 = arith.constant 0 : index
    %22 = vector.load %arg2[%21, %c0_15] : memref<20x32xf32, #tpu.memory_space<vmem>>, vector<1x32xf32>
    %c5_16 = arith.constant 5 : index
    %c0_17 = arith.constant 0 : index
    %23 = vector.load %arg20[%c5_16, %c0_17] : memref<8x32xf32, #tpu.memory_space<vmem>>, vector<1x32xf32>
    tpu.vector_store %arg20[%c5_16, %c0_17], %22 {strides = array<i32>} : memref<8x32xf32, #tpu.memory_space<vmem>>, vector<1x32xf32>,
    %c6 = arith.constant 6 : index
    %24 = memref.load %arg1[%c6] : memref<8xi32, #tpu.memory_space<smem>>
    %25 = arith.index_cast %24 : i32 to index
    %c0_18 = arith.constant 0 : index
    %26 = vector.load %arg2[%25, %c0_18] : memref<20x32xf32, #tpu.memory_space<vmem>>, vector<1x32xf32>
    %c6_19 = arith.constant 6 : index
    %c0_20 = arith.constant 0 : index
    %27 = vector.load %arg20[%c6_19, %c0_20] : memref<8x32xf32, #tpu.memory_space<vmem>>, vector<1x32xf32>
    tpu.vector_store %arg20[%c6_19, %c0_20], %26 {strides = array<i32>} : memref<8x32xf32, #tpu.memory_space<vmem>>, vector<1x32xf32>,
    %c7 = arith.constant 7 : index
    %28 = memref.load %arg1[%c7] : memref<8xi32, #tpu.memory_space<smem>>
    %29 = arith.index_cast %28 : i32 to index
    %c0_21 = arith.constant 0 : index
    %30 = vector.load %arg2[%29, %c0_21] : memref<20x32xf32, #tpu.memory_space<vmem>>, vector<1x32xf32>
    %c7_22 = arith.constant 7 : index
    %c0_23 = arith.constant 0 : index
    %31 = vector.load %arg20[%c7_22, %c0_23] : memref<8x32xf32, #tpu.memory_space<vmem>>, vector<1x32xf32>
    tpu.vector_store %arg20[%c7_22, %c0_23], %30 {strides = array<i32>} : memref<8x32xf32, #tpu.memory_space<vmem>>, vector<1x32xf32>,
    %c0_24 = arith.constant 0 : index
    %c0_25 = arith.constant 0 : index
    %32 = vector.load %arg20[%c0_24, %c0_25] : memref<8x32xf32, #tpu.memory_space<vmem>>, vector<8x32xf32>
    %c0_26 = arith.constant 0 : index
    %c0_27 = arith.constant 0 : index
    %33 = vector.load %arg5[%c0_26, %c0_27] : memref<32x5xf32, #tpu.memory_space<vmem>>, vector<32x5xf32>
    %cst = arith.constant dense<0.000000e+00> : vector<8x5xf32>
    %34 = tpu.matmul %32, %33, %cst {dimension_numbers = #tpu.dot_dimension_numbers<[1], [0], [0], [1], [0, 0, 1, 1], [], []>} : vector<8x32xf32>, vector<32x5xf32>, vector<8x5xf32> -> vector<8x5xf32>
    %c0_28 = arith.constant 0 : index
    %c0_29 = arith.constant 0 : index
    %35 = vector.load %arg7[%c0_28, %c0_29] : memref<1x5xf32, #tpu.memory_space<vmem>>, vector<1x5xf32>
    %36 = vector.broadcast %35 : vector<1x5xf32> to vector<8x5xf32>
    %37 = arith.addf %34, %36 : vector<8x5xf32>
    %c0_30 = arith.constant 0 : index
    %c0_31 = arith.constant 0 : index
    %38 = vector.load %arg8[%c0_30, %c0_31] : memref<32x32xf32, #tpu.memory_space<vmem>>, vector<32x32xf32>
    %cst_32 = arith.constant dense<0.000000e+00> : vector<8x32xf32>
    %39 = tpu.matmul %32, %38, %cst_32 {dimension_numbers = #tpu.dot_dimension_numbers<[1], [0], [0], [1], [0, 0, 1, 1], [], []>} : vector<8x32xf32>, vector<32x32xf32>, vector<8x32xf32> -> vector<8x32xf32>
    %c0_33 = arith.constant 0 : index
    %c0_34 = arith.constant 0 : index
    %40 = vector.load %arg10[%c0_33, %c0_34] : memref<1x32xf32, #tpu.memory_space<vmem>>, vector<1x32xf32>
    %41 = vector.broadcast %40 : vector<1x32xf32> to vector<8x32xf32>
    %42 = arith.addf %39, %41 : vector<8x32xf32>
    %c0_35 = arith.constant 0 : index
    %c0_36 = arith.constant 0 : index
    %43 = vector.load %arg4[%c0_35, %c0_36] : memref<5x32xf32, #tpu.memory_space<vmem>>, vector<5x32xf32>
    %c0_37 = arith.constant 0 : index
    %c0_38 = arith.constant 0 : index
    %44 = vector.load %arg6[%c0_37, %c0_38] : memref<32x5xf32, #tpu.memory_space<vmem>>, vector<32x5xf32>
    %c0_39 = arith.constant 0 : index
    %c0_40 = arith.constant 0 : index
    %45 = vector.load %arg9[%c0_39, %c0_40] : memref<32x32xf32, #tpu.memory_space<vmem>>, vector<32x32xf32>
    %c0_41 = arith.constant 0 : index
    %c0_42 = arith.constant 0 : index
    %46 = vector.load %arg11[%c0_41, %c0_42] : memref<32x96xf32, #tpu.memory_space<vmem>>, vector<32x96xf32>
    %c0_43 = arith.constant 0 : index
    %c0_44 = arith.constant 0 : index
    %47 = vector.load %arg12[%c0_43, %c0_44] : memref<1x96xf32, #tpu.memory_space<vmem>>, vector<1x96xf32>
    %c0_45 = arith.constant 0 : index
    %c0_46 = arith.constant 0 : index
    %48 = vector.load %arg13[%c0_45, %c0_46] : memref<32x96xf32, #tpu.memory_space<vmem>>, vector<32x96xf32>
    %c0_47 = arith.constant 0 : index
    %c0_48 = arith.constant 0 : index
    %49 = vector.load %arg14[%c0_47, %c0_48] : memref<1x96xf32, #tpu.memory_space<vmem>>, vector<1x96xf32>
    %c0_49 = arith.constant 0 : index
    %c0_50 = arith.constant 0 : index
    %50 = vector.load %arg3[%c0_49, %c0_50] : memref<1x32xf32, #tpu.memory_space<vmem>>, vector<1x32xf32>
    %51 = vector.extract_strided_slice %37 {offsets = [0, 0], sizes = [1, 5], strides = [1, 1]} : vector<8x5xf32> to vector<1x5xf32>
    %cst_51 = arith.constant dense<0.000000e+00> : vector<1x5xf32>
    %52 = tpu.matmul %50, %44, %cst_51 {dimension_numbers = #tpu.dot_dimension_numbers<[1], [0], [0], [1], [0, 0, 1, 1], [], []>} : vector<1x32xf32>, vector<32x5xf32>, vector<1x5xf32> -> vector<1x5xf32>
    %53 = arith.addf %51, %52 : vector<1x5xf32>
    %cst_52 = arith.constant dense<0xFF800000> : vector<1xf32>
    %54 = vector.multi_reduction <maximumf>, %53, %cst_52 [1] : vector<1x5xf32> to vector<1xf32>
    %55 = vector.shape_cast %54 : vector<1xf32> to vector<1x1xf32>
    %56 = vector.broadcast %55 : vector<1x1xf32> to vector<1x5xf32>
    %57 = arith.subf %53, %56 : vector<1x5xf32>
    %58 = math.exp %57 : vector<1x5xf32>
    %cst_53 = arith.constant dense<0.000000e+00> : vector<1xf32>
    %59 = vector.multi_reduction <add>, %58, %cst_53 [1] : vector<1x5xf32> to vector<1xf32>
    %60 = vector.shape_cast %59 : vector<1xf32> to vector<1x1xf32>
    %61 = tpu.reciprocal %60 : vector<1x1xf32> -> vector<1x1xf32>
    %62 = vector.broadcast %61 : vector<1x1xf32> to vector<1x5xf32>
    %63 = arith.mulf %58, %62 : vector<1x5xf32>
    %cst_54 = arith.constant dense<0.000000e+00> : vector<1x32xf32>
    %64 = tpu.matmul %63, %43, %cst_54 {dimension_numbers = #tpu.dot_dimension_numbers<[1], [0], [0], [1], [0, 0, 1, 1], [], []>} : vector<1x5xf32>, vector<5x32xf32>, vector<1x32xf32> -> vector<1x32xf32>
    %65 = vector.extract_strided_slice %42 {offsets = [0, 0], sizes = [1, 32], strides = [1, 1]} : vector<8x32xf32> to vector<1x32xf32>
    %cst_55 = arith.constant dense<0.000000e+00> : vector<1x32xf32>
    %66 = tpu.matmul %64, %45, %cst_55 {dimension_numbers = #tpu.dot_dimension_numbers<[1], [0], [0], [1], [0, 0, 1, 1], [], []>} : vector<1x32xf32>, vector<32x32xf32>, vector<1x32xf32> -> vector<1x32xf32>
    %67 = arith.addf %65, %66 : vector<1x32xf32>
    %cst_56 = arith.constant 0.000000e+00 : f32
    %68 = vector.broadcast %cst_56 : f32 to vector<1x32xf32>
    %69 = arith.maximumf %67, %68 : vector<1x32xf32>
    %cst_57 = arith.constant dense<0.000000e+00> : vector<1x96xf32>
    %70 = tpu.matmul %69, %46, %cst_57 {dimension_numbers = #tpu.dot_dimension_numbers<[1], [0], [0], [1], [0, 0, 1, 1], [], []>} : vector<1x32xf32>, vector<32x96xf32>, vector<1x96xf32> -> vector<1x96xf32>
    %71 = arith.addf %70, %47 : vector<1x96xf32>
    %cst_58 = arith.constant dense<0.000000e+00> : vector<1x96xf32>
    %72 = tpu.matmul %50, %48, %cst_58 {dimension_numbers = #tpu.dot_dimension_numbers<[1], [0], [0], [1], [0, 0, 1, 1], [], []>} : vector<1x32xf32>, vector<32x96xf32>, vector<1x96xf32> -> vector<1x96xf32>
    %73 = arith.addf %72, %49 : vector<1x96xf32>
    %74 = vector.extract_strided_slice %71 {offsets = [0, 0], sizes = [1, 32], strides = [1, 1]} : vector<1x96xf32> to vector<1x32xf32>
    %75 = vector.extract_strided_slice %73 {offsets = [0, 0], sizes = [1, 32], strides = [1, 1]} : vector<1x96xf32> to vector<1x32xf32>
    %76 = arith.addf %74, %75 : vector<1x32xf32>
    %77 = arith.negf %76 : vector<1x32xf32>
    %78 = math.exp %77 : vector<1x32xf32>
    %cst_59 = arith.constant 1.000000e+00 : f32
    %79 = vector.broadcast %cst_59 : f32 to vector<1x32xf32>
    %80 = arith.addf %79, %78 : vector<1x32xf32>
    %81 = arith.divf %79, %80 : vector<1x32xf32>
    %82 = vector.extract_strided_slice %71 {offsets = [0, 32], sizes = [1, 32], strides = [1, 1]} : vector<1x96xf32> to vector<1x32xf32>
    %83 = vector.extract_strided_slice %73 {offsets = [0, 32], sizes = [1, 32], strides = [1, 1]} : vector<1x96xf32> to vector<1x32xf32>
    %84 = arith.addf %82, %83 : vector<1x32xf32>
    %85 = arith.negf %84 : vector<1x32xf32>
    %86 = math.exp %85 : vector<1x32xf32>
    %cst_60 = arith.constant 1.000000e+00 : f32
    %87 = vector.broadcast %cst_60 : f32 to vector<1x32xf32>
    %88 = arith.addf %87, %86 : vector<1x32xf32>
    %89 = arith.divf %87, %88 : vector<1x32xf32>
    %90 = vector.extract_strided_slice %71 {offsets = [0, 64], sizes = [1, 32], strides = [1, 1]} : vector<1x96xf32> to vector<1x32xf32>
    %91 = vector.extract_strided_slice %73 {offsets = [0, 64], sizes = [1, 32], strides = [1, 1]} : vector<1x96xf32> to vector<1x32xf32>
    %92 = arith.mulf %81, %91 : vector<1x32xf32>
    %93 = arith.addf %90, %92 : vector<1x32xf32>
    %94 = math.tanh %93 : vector<1x32xf32>
    %cst_61 = arith.constant 1.000000e+00 : f32
    %95 = vector.broadcast %cst_61 : f32 to vector<1x32xf32>
    %96 = arith.subf %95, %89 : vector<1x32xf32>
    %97 = arith.mulf %96, %94 : vector<1x32xf32>
    %98 = arith.mulf %89, %50 : vector<1x32xf32>
    %99 = arith.addf %97, %98 : vector<1x32xf32>
    %c0_62 = arith.constant 0 : index
    %c0_63 = arith.constant 0 : index
    %100 = vector.load %arg18[%c0_62, %c0_63] : memref<8x32xf32, #tpu.memory_space<vmem>>, vector<1x32xf32>
    tpu.vector_store %arg18[%c0_62, %c0_63], %99 {strides = array<i32>} : memref<8x32xf32, #tpu.memory_space<vmem>>, vector<1x32xf32>,
    %c0_64 = arith.constant 0 : index
    %c0_65 = arith.constant 0 : index
    %101 = vector.load %arg19[%c0_64, %c0_65] : memref<8x5xf32, #tpu.memory_space<vmem>>, vector<1x5xf32>
    tpu.vector_store %arg19[%c0_64, %c0_65], %63 {strides = array<i32>} : memref<8x5xf32, #tpu.memory_space<vmem>>, vector<1x5xf32>,
    %102 = vector.extract_strided_slice %37 {offsets = [1, 0], sizes = [1, 5], strides = [1, 1]} : vector<8x5xf32> to vector<1x5xf32>
    %cst_66 = arith.constant dense<0.000000e+00> : vector<1x5xf32>
    %103 = tpu.matmul %99, %44, %cst_66 {dimension_numbers = #tpu.dot_dimension_numbers<[1], [0], [0], [1], [0, 0, 1, 1], [], []>} : vector<1x32xf32>, vector<32x5xf32>, vector<1x5xf32> -> vector<1x5xf32>
    %104 = arith.addf %102, %103 : vector<1x5xf32>
    %cst_67 = arith.constant dense<0xFF800000> : vector<1xf32>
    %105 = vector.multi_reduction <maximumf>, %104, %cst_67 [1] : vector<1x5xf32> to vector<1xf32>
    %106 = vector.shape_cast %105 : vector<1xf32> to vector<1x1xf32>
    %107 = vector.broadcast %106 : vector<1x1xf32> to vector<1x5xf32>
    %108 = arith.subf %104, %107 : vector<1x5xf32>
    %109 = math.exp %108 : vector<1x5xf32>
    %cst_68 = arith.constant dense<0.000000e+00> : vector<1xf32>
    %110 = vector.multi_reduction <add>, %109, %cst_68 [1] : vector<1x5xf32> to vector<1xf32>
    %111 = vector.shape_cast %110 : vector<1xf32> to vector<1x1xf32>
    %112 = tpu.reciprocal %111 : vector<1x1xf32> -> vector<1x1xf32>
    %113 = vector.broadcast %112 : vector<1x1xf32> to vector<1x5xf32>
    %114 = arith.mulf %109, %113 : vector<1x5xf32>
    %cst_69 = arith.constant dense<0.000000e+00> : vector<1x32xf32>
    %115 = tpu.matmul %114, %43, %cst_69 {dimension_numbers = #tpu.dot_dimension_numbers<[1], [0], [0], [1], [0, 0, 1, 1], [], []>} : vector<1x5xf32>, vector<5x32xf32>, vector<1x32xf32> -> vector<1x32xf32>
    %116 = vector.extract_strided_slice %42 {offsets = [1, 0], sizes = [1, 32], strides = [1, 1]} : vector<8x32xf32> to vector<1x32xf32>
    %cst_70 = arith.constant dense<0.000000e+00> : vector<1x32xf32>
    %117 = tpu.matmul %115, %45, %cst_70 {dimension_numbers = #tpu.dot_dimension_numbers<[1], [0], [0], [1], [0, 0, 1, 1], [], []>} : vector<1x32xf32>, vector<32x32xf32>, vector<1x32xf32> -> vector<1x32xf32>
    %118 = arith.addf %116, %117 : vector<1x32xf32>
    %cst_71 = arith.constant 0.000000e+00 : f32
    %119 = vector.broadcast %cst_71 : f32 to vector<1x32xf32>
    %120 = arith.maximumf %118, %119 : vector<1x32xf32>
    %cst_72 = arith.constant dense<0.000000e+00> : vector<1x96xf32>
    %121 = tpu.matmul %120, %46, %cst_72 {dimension_numbers = #tpu.dot_dimension_numbers<[1], [0], [0], [1], [0, 0, 1, 1], [], []>} : vector<1x32xf32>, vector<32x96xf32>, vector<1x96xf32> -> vector<1x96xf32>
    %122 = arith.addf %121, %47 : vector<1x96xf32>
    %cst_73 = arith.constant dense<0.000000e+00> : vector<1x96xf32>
    %123 = tpu.matmul %99, %48, %cst_73 {dimension_numbers = #tpu.dot_dimension_numbers<[1], [0], [0], [1], [0, 0, 1, 1], [], []>} : vector<1x32xf32>, vector<32x96xf32>, vector<1x96xf32> -> vector<1x96xf32>
    %124 = arith.addf %123, %49 : vector<1x96xf32>
    %125 = vector.extract_strided_slice %122 {offsets = [0, 0], sizes = [1, 32], strides = [1, 1]} : vector<1x96xf32> to vector<1x32xf32>
    %126 = vector.extract_strided_slice %124 {offsets = [0, 0], sizes = [1, 32], strides = [1, 1]} : vector<1x96xf32> to vector<1x32xf32>
    %127 = arith.addf %125, %126 : vector<1x32xf32>
    %128 = arith.negf %127 : vector<1x32xf32>
    %129 = math.exp %128 : vector<1x32xf32>
    %cst_74 = arith.constant 1.000000e+00 : f32
    %130 = vector.broadcast %cst_74 : f32 to vector<1x32xf32>
    %131 = arith.addf %130, %129 : vector<1x32xf32>
    %132 = arith.divf %130, %131 : vector<1x32xf32>
    %133 = vector.extract_strided_slice %122 {offsets = [0, 32], sizes = [1, 32], strides = [1, 1]} : vector<1x96xf32> to vector<1x32xf32>
    %134 = vector.extract_strided_slice %124 {offsets = [0, 32], sizes = [1, 32], strides = [1, 1]} : vector<1x96xf32> to vector<1x32xf32>
    %135 = arith.addf %133, %134 : vector<1x32xf32>
    %136 = arith.negf %135 : vector<1x32xf32>
    %137 = math.exp %136 : vector<1x32xf32>
    %cst_75 = arith.constant 1.000000e+00 : f32
    %138 = vector.broadcast %cst_75 : f32 to vector<1x32xf32>
    %139 = arith.addf %138, %137 : vector<1x32xf32>
    %140 = arith.divf %138, %139 : vector<1x32xf32>
    %141 = vector.extract_strided_slice %122 {offsets = [0, 64], sizes = [1, 32], strides = [1, 1]} : vector<1x96xf32> to vector<1x32xf32>
    %142 = vector.extract_strided_slice %124 {offsets = [0, 64], sizes = [1, 32], strides = [1, 1]} : vector<1x96xf32> to vector<1x32xf32>
    %143 = arith.mulf %132, %142 : vector<1x32xf32>
    %144 = arith.addf %141, %143 : vector<1x32xf32>
    %145 = math.tanh %144 : vector<1x32xf32>
    %cst_76 = arith.constant 1.000000e+00 : f32
    %146 = vector.broadcast %cst_76 : f32 to vector<1x32xf32>
    %147 = arith.subf %146, %140 : vector<1x32xf32>
    %148 = arith.mulf %147, %145 : vector<1x32xf32>
    %149 = arith.mulf %140, %99 : vector<1x32xf32>
    %150 = arith.addf %148, %149 : vector<1x32xf32>
    %c1_77 = arith.constant 1 : index
    %c0_78 = arith.constant 0 : index
    %151 = vector.load %arg18[%c1_77, %c0_78] : memref<8x32xf32, #tpu.memory_space<vmem>>, vector<1x32xf32>
    tpu.vector_store %arg18[%c1_77, %c0_78], %150 {strides = array<i32>} : memref<8x32xf32, #tpu.memory_space<vmem>>, vector<1x32xf32>,
    %c1_79 = arith.constant 1 : index
    %c0_80 = arith.constant 0 : index
    %152 = vector.load %arg19[%c1_79, %c0_80] : memref<8x5xf32, #tpu.memory_space<vmem>>, vector<1x5xf32>
    tpu.vector_store %arg19[%c1_79, %c0_80], %114 {strides = array<i32>} : memref<8x5xf32, #tpu.memory_space<vmem>>, vector<1x5xf32>,
    %153 = vector.extract_strided_slice %37 {offsets = [2, 0], sizes = [1, 5], strides = [1, 1]} : vector<8x5xf32> to vector<1x5xf32>
    %cst_81 = arith.constant dense<0.000000e+00> : vector<1x5xf32>
    %154 = tpu.matmul %150, %44, %cst_81 {dimension_numbers = #tpu.dot_dimension_numbers<[1], [0], [0], [1], [0, 0, 1, 1], [], []>} : vector<1x32xf32>, vector<32x5xf32>, vector<1x5xf32> -> vector<1x5xf32>
    %155 = arith.addf %153, %154 : vector<1x5xf32>
    %cst_82 = arith.constant dense<0xFF800000> : vector<1xf32>
    %156 = vector.multi_reduction <maximumf>, %155, %cst_82 [1] : vector<1x5xf32> to vector<1xf32>
    %157 = vector.shape_cast %156 : vector<1xf32> to vector<1x1xf32>
    %158 = vector.broadcast %157 : vector<1x1xf32> to vector<1x5xf32>
    %159 = arith.subf %155, %158 : vector<1x5xf32>
    %160 = math.exp %159 : vector<1x5xf32>
    %cst_83 = arith.constant dense<0.000000e+00> : vector<1xf32>
    %161 = vector.multi_reduction <add>, %160, %cst_83 [1] : vector<1x5xf32> to vector<1xf32>
    %162 = vector.shape_cast %161 : vector<1xf32> to vector<1x1xf32>
    %163 = tpu.reciprocal %162 : vector<1x1xf32> -> vector<1x1xf32>
    %164 = vector.broadcast %163 : vector<1x1xf32> to vector<1x5xf32>
    %165 = arith.mulf %160, %164 : vector<1x5xf32>
    %cst_84 = arith.constant dense<0.000000e+00> : vector<1x32xf32>
    %166 = tpu.matmul %165, %43, %cst_84 {dimension_numbers = #tpu.dot_dimension_numbers<[1], [0], [0], [1], [0, 0, 1, 1], [], []>} : vector<1x5xf32>, vector<5x32xf32>, vector<1x32xf32> -> vector<1x32xf32>
    %167 = vector.extract_strided_slice %42 {offsets = [2, 0], sizes = [1, 32], strides = [1, 1]} : vector<8x32xf32> to vector<1x32xf32>
    %cst_85 = arith.constant dense<0.000000e+00> : vector<1x32xf32>
    %168 = tpu.matmul %166, %45, %cst_85 {dimension_numbers = #tpu.dot_dimension_numbers<[1], [0], [0], [1], [0, 0, 1, 1], [], []>} : vector<1x32xf32>, vector<32x32xf32>, vector<1x32xf32> -> vector<1x32xf32>
    %169 = arith.addf %167, %168 : vector<1x32xf32>
    %cst_86 = arith.constant 0.000000e+00 : f32
    %170 = vector.broadcast %cst_86 : f32 to vector<1x32xf32>
    %171 = arith.maximumf %169, %170 : vector<1x32xf32>
    %cst_87 = arith.constant dense<0.000000e+00> : vector<1x96xf32>
    %172 = tpu.matmul %171, %46, %cst_87 {dimension_numbers = #tpu.dot_dimension_numbers<[1], [0], [0], [1], [0, 0, 1, 1], [], []>} : vector<1x32xf32>, vector<32x96xf32>, vector<1x96xf32> -> vector<1x96xf32>
    %173 = arith.addf %172, %47 : vector<1x96xf32>
    %cst_88 = arith.constant dense<0.000000e+00> : vector<1x96xf32>
    %174 = tpu.matmul %150, %48, %cst_88 {dimension_numbers = #tpu.dot_dimension_numbers<[1], [0], [0], [1], [0, 0, 1, 1], [], []>} : vector<1x32xf32>, vector<32x96xf32>, vector<1x96xf32> -> vector<1x96xf32>
    %175 = arith.addf %174, %49 : vector<1x96xf32>
    %176 = vector.extract_strided_slice %173 {offsets = [0, 0], sizes = [1, 32], strides = [1, 1]} : vector<1x96xf32> to vector<1x32xf32>
    %177 = vector.extract_strided_slice %175 {offsets = [0, 0], sizes = [1, 32], strides = [1, 1]} : vector<1x96xf32> to vector<1x32xf32>
    %178 = arith.addf %176, %177 : vector<1x32xf32>
    %179 = arith.negf %178 : vector<1x32xf32>
    %180 = math.exp %179 : vector<1x32xf32>
    %cst_89 = arith.constant 1.000000e+00 : f32
    %181 = vector.broadcast %cst_89 : f32 to vector<1x32xf32>
    %182 = arith.addf %181, %180 : vector<1x32xf32>
    %183 = arith.divf %181, %182 : vector<1x32xf32>
    %184 = vector.extract_strided_slice %173 {offsets = [0, 32], sizes = [1, 32], strides = [1, 1]} : vector<1x96xf32> to vector<1x32xf32>
    %185 = vector.extract_strided_slice %175 {offsets = [0, 32], sizes = [1, 32], strides = [1, 1]} : vector<1x96xf32> to vector<1x32xf32>
    %186 = arith.addf %184, %185 : vector<1x32xf32>
    %187 = arith.negf %186 : vector<1x32xf32>
    %188 = math.exp %187 : vector<1x32xf32>
    %cst_90 = arith.constant 1.000000e+00 : f32
    %189 = vector.broadcast %cst_90 : f32 to vector<1x32xf32>
    %190 = arith.addf %189, %188 : vector<1x32xf32>
    %191 = arith.divf %189, %190 : vector<1x32xf32>
    %192 = vector.extract_strided_slice %173 {offsets = [0, 64], sizes = [1, 32], strides = [1, 1]} : vector<1x96xf32> to vector<1x32xf32>
    %193 = vector.extract_strided_slice %175 {offsets = [0, 64], sizes = [1, 32], strides = [1, 1]} : vector<1x96xf32> to vector<1x32xf32>
    %194 = arith.mulf %183, %193 : vector<1x32xf32>
    %195 = arith.addf %192, %194 : vector<1x32xf32>
    %196 = math.tanh %195 : vector<1x32xf32>
    %cst_91 = arith.constant 1.000000e+00 : f32
    %197 = vector.broadcast %cst_91 : f32 to vector<1x32xf32>
    %198 = arith.subf %197, %191 : vector<1x32xf32>
    %199 = arith.mulf %198, %196 : vector<1x32xf32>
    %200 = arith.mulf %191, %150 : vector<1x32xf32>
    %201 = arith.addf %199, %200 : vector<1x32xf32>
    %c2_92 = arith.constant 2 : index
    %c0_93 = arith.constant 0 : index
    %202 = vector.load %arg18[%c2_92, %c0_93] : memref<8x32xf32, #tpu.memory_space<vmem>>, vector<1x32xf32>
    tpu.vector_store %arg18[%c2_92, %c0_93], %201 {strides = array<i32>} : memref<8x32xf32, #tpu.memory_space<vmem>>, vector<1x32xf32>,
    %c2_94 = arith.constant 2 : index
    %c0_95 = arith.constant 0 : index
    %203 = vector.load %arg19[%c2_94, %c0_95] : memref<8x5xf32, #tpu.memory_space<vmem>>, vector<1x5xf32>
    tpu.vector_store %arg19[%c2_94, %c0_95], %165 {strides = array<i32>} : memref<8x5xf32, #tpu.memory_space<vmem>>, vector<1x5xf32>,
    %204 = vector.extract_strided_slice %37 {offsets = [3, 0], sizes = [1, 5], strides = [1, 1]} : vector<8x5xf32> to vector<1x5xf32>
    %cst_96 = arith.constant dense<0.000000e+00> : vector<1x5xf32>
    %205 = tpu.matmul %201, %44, %cst_96 {dimension_numbers = #tpu.dot_dimension_numbers<[1], [0], [0], [1], [0, 0, 1, 1], [], []>} : vector<1x32xf32>, vector<32x5xf32>, vector<1x5xf32> -> vector<1x5xf32>
    %206 = arith.addf %204, %205 : vector<1x5xf32>
    %cst_97 = arith.constant dense<0xFF800000> : vector<1xf32>
    %207 = vector.multi_reduction <maximumf>, %206, %cst_97 [1] : vector<1x5xf32> to vector<1xf32>
    %208 = vector.shape_cast %207 : vector<1xf32> to vector<1x1xf32>
    %209 = vector.broadcast %208 : vector<1x1xf32> to vector<1x5xf32>
    %210 = arith.subf %206, %209 : vector<1x5xf32>
    %211 = math.exp %210 : vector<1x5xf32>
    %cst_98 = arith.constant dense<0.000000e+00> : vector<1xf32>
    %212 = vector.multi_reduction <add>, %211, %cst_98 [1] : vector<1x5xf32> to vector<1xf32>
    %213 = vector.shape_cast %212 : vector<1xf32> to vector<1x1xf32>
    %214 = tpu.reciprocal %213 : vector<1x1xf32> -> vector<1x1xf32>
    %215 = vector.broadcast %214 : vector<1x1xf32> to vector<1x5xf32>
    %216 = arith.mulf %211, %215 : vector<1x5xf32>
    %cst_99 = arith.constant dense<0.000000e+00> : vector<1x32xf32>
    %217 = tpu.matmul %216, %43, %cst_99 {dimension_numbers = #tpu.dot_dimension_numbers<[1], [0], [0], [1], [0, 0, 1, 1], [], []>} : vector<1x5xf32>, vector<5x32xf32>, vector<1x32xf32> -> vector<1x32xf32>
    %218 = vector.extract_strided_slice %42 {offsets = [3, 0], sizes = [1, 32], strides = [1, 1]} : vector<8x32xf32> to vector<1x32xf32>
    %cst_100 = arith.constant dense<0.000000e+00> : vector<1x32xf32>
    %219 = tpu.matmul %217, %45, %cst_100 {dimension_numbers = #tpu.dot_dimension_numbers<[1], [0], [0], [1], [0, 0, 1, 1], [], []>} : vector<1x32xf32>, vector<32x32xf32>, vector<1x32xf32> -> vector<1x32xf32>
    %220 = arith.addf %218, %219 : vector<1x32xf32>
    %cst_101 = arith.constant 0.000000e+00 : f32
    %221 = vector.broadcast %cst_101 : f32 to vector<1x32xf32>
    %222 = arith.maximumf %220, %221 : vector<1x32xf32>
    %cst_102 = arith.constant dense<0.000000e+00> : vector<1x96xf32>
    %223 = tpu.matmul %222, %46, %cst_102 {dimension_numbers = #tpu.dot_dimension_numbers<[1], [0], [0], [1], [0, 0, 1, 1], [], []>} : vector<1x32xf32>, vector<32x96xf32>, vector<1x96xf32> -> vector<1x96xf32>
    %224 = arith.addf %223, %47 : vector<1x96xf32>
    %cst_103 = arith.constant dense<0.000000e+00> : vector<1x96xf32>
    %225 = tpu.matmul %201, %48, %cst_103 {dimension_numbers = #tpu.dot_dimension_numbers<[1], [0], [0], [1], [0, 0, 1, 1], [], []>} : vector<1x32xf32>, vector<32x96xf32>, vector<1x96xf32> -> vector<1x96xf32>
    %226 = arith.addf %225, %49 : vector<1x96xf32>
    %227 = vector.extract_strided_slice %224 {offsets = [0, 0], sizes = [1, 32], strides = [1, 1]} : vector<1x96xf32> to vector<1x32xf32>
    %228 = vector.extract_strided_slice %226 {offsets = [0, 0], sizes = [1, 32], strides = [1, 1]} : vector<1x96xf32> to vector<1x32xf32>
    %229 = arith.addf %227, %228 : vector<1x32xf32>
    %230 = arith.negf %229 : vector<1x32xf32>
    %231 = math.exp %230 : vector<1x32xf32>
    %cst_104 = arith.constant 1.000000e+00 : f32
    %232 = vector.broadcast %cst_104 : f32 to vector<1x32xf32>
    %233 = arith.addf %232, %231 : vector<1x32xf32>
    %234 = arith.divf %232, %233 : vector<1x32xf32>
    %235 = vector.extract_strided_slice %224 {offsets = [0, 32], sizes = [1, 32], strides = [1, 1]} : vector<1x96xf32> to vector<1x32xf32>
    %236 = vector.extract_strided_slice %226 {offsets = [0, 32], sizes = [1, 32], strides = [1, 1]} : vector<1x96xf32> to vector<1x32xf32>
    %237 = arith.addf %235, %236 : vector<1x32xf32>
    %238 = arith.negf %237 : vector<1x32xf32>
    %239 = math.exp %238 : vector<1x32xf32>
    %cst_105 = arith.constant 1.000000e+00 : f32
    %240 = vector.broadcast %cst_105 : f32 to vector<1x32xf32>
    %241 = arith.addf %240, %239 : vector<1x32xf32>
    %242 = arith.divf %240, %241 : vector<1x32xf32>
    %243 = vector.extract_strided_slice %224 {offsets = [0, 64], sizes = [1, 32], strides = [1, 1]} : vector<1x96xf32> to vector<1x32xf32>
    %244 = vector.extract_strided_slice %226 {offsets = [0, 64], sizes = [1, 32], strides = [1, 1]} : vector<1x96xf32> to vector<1x32xf32>
    %245 = arith.mulf %234, %244 : vector<1x32xf32>
    %246 = arith.addf %243, %245 : vector<1x32xf32>
    %247 = math.tanh %246 : vector<1x32xf32>
    %cst_106 = arith.constant 1.000000e+00 : f32
    %248 = vector.broadcast %cst_106 : f32 to vector<1x32xf32>
    %249 = arith.subf %248, %242 : vector<1x32xf32>
    %250 = arith.mulf %249, %247 : vector<1x32xf32>
    %251 = arith.mulf %242, %201 : vector<1x32xf32>
    %252 = arith.addf %250, %251 : vector<1x32xf32>
    %c3_107 = arith.constant 3 : index
    %c0_108 = arith.constant 0 : index
    %253 = vector.load %arg18[%c3_107, %c0_108] : memref<8x32xf32, #tpu.memory_space<vmem>>, vector<1x32xf32>
    tpu.vector_store %arg18[%c3_107, %c0_108], %252 {strides = array<i32>} : memref<8x32xf32, #tpu.memory_space<vmem>>, vector<1x32xf32>,
    %c3_109 = arith.constant 3 : index
    %c0_110 = arith.constant 0 : index
    %254 = vector.load %arg19[%c3_109, %c0_110] : memref<8x5xf32, #tpu.memory_space<vmem>>, vector<1x5xf32>
    tpu.vector_store %arg19[%c3_109, %c0_110], %216 {strides = array<i32>} : memref<8x5xf32, #tpu.memory_space<vmem>>, vector<1x5xf32>,
    %255 = vector.extract_strided_slice %37 {offsets = [4, 0], sizes = [1, 5], strides = [1, 1]} : vector<8x5xf32> to vector<1x5xf32>
    %cst_111 = arith.constant dense<0.000000e+00> : vector<1x5xf32>
    %256 = tpu.matmul %252, %44, %cst_111 {dimension_numbers = #tpu.dot_dimension_numbers<[1], [0], [0], [1], [0, 0, 1, 1], [], []>} : vector<1x32xf32>, vector<32x5xf32>, vector<1x5xf32> -> vector<1x5xf32>
    %257 = arith.addf %255, %256 : vector<1x5xf32>
    %cst_112 = arith.constant dense<0xFF800000> : vector<1xf32>
    %258 = vector.multi_reduction <maximumf>, %257, %cst_112 [1] : vector<1x5xf32> to vector<1xf32>
    %259 = vector.shape_cast %258 : vector<1xf32> to vector<1x1xf32>
    %260 = vector.broadcast %259 : vector<1x1xf32> to vector<1x5xf32>
    %261 = arith.subf %257, %260 : vector<1x5xf32>
    %262 = math.exp %261 : vector<1x5xf32>
    %cst_113 = arith.constant dense<0.000000e+00> : vector<1xf32>
    %263 = vector.multi_reduction <add>, %262, %cst_113 [1] : vector<1x5xf32> to vector<1xf32>
    %264 = vector.shape_cast %263 : vector<1xf32> to vector<1x1xf32>
    %265 = tpu.reciprocal %264 : vector<1x1xf32> -> vector<1x1xf32>
    %266 = vector.broadcast %265 : vector<1x1xf32> to vector<1x5xf32>
    %267 = arith.mulf %262, %266 : vector<1x5xf32>
    %cst_114 = arith.constant dense<0.000000e+00> : vector<1x32xf32>
    %268 = tpu.matmul %267, %43, %cst_114 {dimension_numbers = #tpu.dot_dimension_numbers<[1], [0], [0], [1], [0, 0, 1, 1], [], []>} : vector<1x5xf32>, vector<5x32xf32>, vector<1x32xf32> -> vector<1x32xf32>
    %269 = vector.extract_strided_slice %42 {offsets = [4, 0], sizes = [1, 32], strides = [1, 1]} : vector<8x32xf32> to vector<1x32xf32>
    %cst_115 = arith.constant dense<0.000000e+00> : vector<1x32xf32>
    %270 = tpu.matmul %268, %45, %cst_115 {dimension_numbers = #tpu.dot_dimension_numbers<[1], [0], [0], [1], [0, 0, 1, 1], [], []>} : vector<1x32xf32>, vector<32x32xf32>, vector<1x32xf32> -> vector<1x32xf32>
    %271 = arith.addf %269, %270 : vector<1x32xf32>
    %cst_116 = arith.constant 0.000000e+00 : f32
    %272 = vector.broadcast %cst_116 : f32 to vector<1x32xf32>
    %273 = arith.maximumf %271, %272 : vector<1x32xf32>
    %cst_117 = arith.constant dense<0.000000e+00> : vector<1x96xf32>
    %274 = tpu.matmul %273, %46, %cst_117 {dimension_numbers = #tpu.dot_dimension_numbers<[1], [0], [0], [1], [0, 0, 1, 1], [], []>} : vector<1x32xf32>, vector<32x96xf32>, vector<1x96xf32> -> vector<1x96xf32>
    %275 = arith.addf %274, %47 : vector<1x96xf32>
    %cst_118 = arith.constant dense<0.000000e+00> : vector<1x96xf32>
    %276 = tpu.matmul %252, %48, %cst_118 {dimension_numbers = #tpu.dot_dimension_numbers<[1], [0], [0], [1], [0, 0, 1, 1], [], []>} : vector<1x32xf32>, vector<32x96xf32>, vector<1x96xf32> -> vector<1x96xf32>
    %277 = arith.addf %276, %49 : vector<1x96xf32>
    %278 = vector.extract_strided_slice %275 {offsets = [0, 0], sizes = [1, 32], strides = [1, 1]} : vector<1x96xf32> to vector<1x32xf32>
    %279 = vector.extract_strided_slice %277 {offsets = [0, 0], sizes = [1, 32], strides = [1, 1]} : vector<1x96xf32> to vector<1x32xf32>
    %280 = arith.addf %278, %279 : vector<1x32xf32>
    %281 = arith.negf %280 : vector<1x32xf32>
    %282 = math.exp %281 : vector<1x32xf32>
    %cst_119 = arith.constant 1.000000e+00 : f32
    %283 = vector.broadcast %cst_119 : f32 to vector<1x32xf32>
    %284 = arith.addf %283, %282 : vector<1x32xf32>
    %285 = arith.divf %283, %284 : vector<1x32xf32>
    %286 = vector.extract_strided_slice %275 {offsets = [0, 32], sizes = [1, 32], strides = [1, 1]} : vector<1x96xf32> to vector<1x32xf32>
    %287 = vector.extract_strided_slice %277 {offsets = [0, 32], sizes = [1, 32], strides = [1, 1]} : vector<1x96xf32> to vector<1x32xf32>
    %288 = arith.addf %286, %287 : vector<1x32xf32>
    %289 = arith.negf %288 : vector<1x32xf32>
    %290 = math.exp %289 : vector<1x32xf32>
    %cst_120 = arith.constant 1.000000e+00 : f32
    %291 = vector.broadcast %cst_120 : f32 to vector<1x32xf32>
    %292 = arith.addf %291, %290 : vector<1x32xf32>
    %293 = arith.divf %291, %292 : vector<1x32xf32>
    %294 = vector.extract_strided_slice %275 {offsets = [0, 64], sizes = [1, 32], strides = [1, 1]} : vector<1x96xf32> to vector<1x32xf32>
    %295 = vector.extract_strided_slice %277 {offsets = [0, 64], sizes = [1, 32], strides = [1, 1]} : vector<1x96xf32> to vector<1x32xf32>
    %296 = arith.mulf %285, %295 : vector<1x32xf32>
    %297 = arith.addf %294, %296 : vector<1x32xf32>
    %298 = math.tanh %297 : vector<1x32xf32>
    %cst_121 = arith.constant 1.000000e+00 : f32
    %299 = vector.broadcast %cst_121 : f32 to vector<1x32xf32>
    %300 = arith.subf %299, %293 : vector<1x32xf32>
    %301 = arith.mulf %300, %298 : vector<1x32xf32>
    %302 = arith.mulf %293, %252 : vector<1x32xf32>
    %303 = arith.addf %301, %302 : vector<1x32xf32>
    %c4_122 = arith.constant 4 : index
    %c0_123 = arith.constant 0 : index
    %304 = vector.load %arg18[%c4_122, %c0_123] : memref<8x32xf32, #tpu.memory_space<vmem>>, vector<1x32xf32>
    tpu.vector_store %arg18[%c4_122, %c0_123], %303 {strides = array<i32>} : memref<8x32xf32, #tpu.memory_space<vmem>>, vector<1x32xf32>,
    %c4_124 = arith.constant 4 : index
    %c0_125 = arith.constant 0 : index
    %305 = vector.load %arg19[%c4_124, %c0_125] : memref<8x5xf32, #tpu.memory_space<vmem>>, vector<1x5xf32>
    tpu.vector_store %arg19[%c4_124, %c0_125], %267 {strides = array<i32>} : memref<8x5xf32, #tpu.memory_space<vmem>>, vector<1x5xf32>,
    %306 = vector.extract_strided_slice %37 {offsets = [5, 0], sizes = [1, 5], strides = [1, 1]} : vector<8x5xf32> to vector<1x5xf32>
    %cst_126 = arith.constant dense<0.000000e+00> : vector<1x5xf32>
    %307 = tpu.matmul %303, %44, %cst_126 {dimension_numbers = #tpu.dot_dimension_numbers<[1], [0], [0], [1], [0, 0, 1, 1], [], []>} : vector<1x32xf32>, vector<32x5xf32>, vector<1x5xf32> -> vector<1x5xf32>
    %308 = arith.addf %306, %307 : vector<1x5xf32>
    %cst_127 = arith.constant dense<0xFF800000> : vector<1xf32>
    %309 = vector.multi_reduction <maximumf>, %308, %cst_127 [1] : vector<1x5xf32> to vector<1xf32>
    %310 = vector.shape_cast %309 : vector<1xf32> to vector<1x1xf32>
    %311 = vector.broadcast %310 : vector<1x1xf32> to vector<1x5xf32>
    %312 = arith.subf %308, %311 : vector<1x5xf32>
    %313 = math.exp %312 : vector<1x5xf32>
    %cst_128 = arith.constant dense<0.000000e+00> : vector<1xf32>
    %314 = vector.multi_reduction <add>, %313, %cst_128 [1] : vector<1x5xf32> to vector<1xf32>
    %315 = vector.shape_cast %314 : vector<1xf32> to vector<1x1xf32>
    %316 = tpu.reciprocal %315 : vector<1x1xf32> -> vector<1x1xf32>
    %317 = vector.broadcast %316 : vector<1x1xf32> to vector<1x5xf32>
    %318 = arith.mulf %313, %317 : vector<1x5xf32>
    %cst_129 = arith.constant dense<0.000000e+00> : vector<1x32xf32>
    %319 = tpu.matmul %318, %43, %cst_129 {dimension_numbers = #tpu.dot_dimension_numbers<[1], [0], [0], [1], [0, 0, 1, 1], [], []>} : vector<1x5xf32>, vector<5x32xf32>, vector<1x32xf32> -> vector<1x32xf32>
    %320 = vector.extract_strided_slice %42 {offsets = [5, 0], sizes = [1, 32], strides = [1, 1]} : vector<8x32xf32> to vector<1x32xf32>
    %cst_130 = arith.constant dense<0.000000e+00> : vector<1x32xf32>
    %321 = tpu.matmul %319, %45, %cst_130 {dimension_numbers = #tpu.dot_dimension_numbers<[1], [0], [0], [1], [0, 0, 1, 1], [], []>} : vector<1x32xf32>, vector<32x32xf32>, vector<1x32xf32> -> vector<1x32xf32>
    %322 = arith.addf %320, %321 : vector<1x32xf32>
    %cst_131 = arith.constant 0.000000e+00 : f32
    %323 = vector.broadcast %cst_131 : f32 to vector<1x32xf32>
    %324 = arith.maximumf %322, %323 : vector<1x32xf32>
    %cst_132 = arith.constant dense<0.000000e+00> : vector<1x96xf32>
    %325 = tpu.matmul %324, %46, %cst_132 {dimension_numbers = #tpu.dot_dimension_numbers<[1], [0], [0], [1], [0, 0, 1, 1], [], []>} : vector<1x32xf32>, vector<32x96xf32>, vector<1x96xf32> -> vector<1x96xf32>
    %326 = arith.addf %325, %47 : vector<1x96xf32>
    %cst_133 = arith.constant dense<0.000000e+00> : vector<1x96xf32>
    %327 = tpu.matmul %303, %48, %cst_133 {dimension_numbers = #tpu.dot_dimension_numbers<[1], [0], [0], [1], [0, 0, 1, 1], [], []>} : vector<1x32xf32>, vector<32x96xf32>, vector<1x96xf32> -> vector<1x96xf32>
    %328 = arith.addf %327, %49 : vector<1x96xf32>
    %329 = vector.extract_strided_slice %326 {offsets = [0, 0], sizes = [1, 32], strides = [1, 1]} : vector<1x96xf32> to vector<1x32xf32>
    %330 = vector.extract_strided_slice %328 {offsets = [0, 0], sizes = [1, 32], strides = [1, 1]} : vector<1x96xf32> to vector<1x32xf32>
    %331 = arith.addf %329, %330 : vector<1x32xf32>
    %332 = arith.negf %331 : vector<1x32xf32>
    %333 = math.exp %332 : vector<1x32xf32>
    %cst_134 = arith.constant 1.000000e+00 : f32
    %334 = vector.broadcast %cst_134 : f32 to vector<1x32xf32>
    %335 = arith.addf %334, %333 : vector<1x32xf32>
    %336 = arith.divf %334, %335 : vector<1x32xf32>
    %337 = vector.extract_strided_slice %326 {offsets = [0, 32], sizes = [1, 32], strides = [1, 1]} : vector<1x96xf32> to vector<1x32xf32>
    %338 = vector.extract_strided_slice %328 {offsets = [0, 32], sizes = [1, 32], strides = [1, 1]} : vector<1x96xf32> to vector<1x32xf32>
    %339 = arith.addf %337, %338 : vector<1x32xf32>
    %340 = arith.negf %339 : vector<1x32xf32>
    %341 = math.exp %340 : vector<1x32xf32>
    %cst_135 = arith.constant 1.000000e+00 : f32
    %342 = vector.broadcast %cst_135 : f32 to vector<1x32xf32>
    %343 = arith.addf %342, %341 : vector<1x32xf32>
    %344 = arith.divf %342, %343 : vector<1x32xf32>
    %345 = vector.extract_strided_slice %326 {offsets = [0, 64], sizes = [1, 32], strides = [1, 1]} : vector<1x96xf32> to vector<1x32xf32>
    %346 = vector.extract_strided_slice %328 {offsets = [0, 64], sizes = [1, 32], strides = [1, 1]} : vector<1x96xf32> to vector<1x32xf32>
    %347 = arith.mulf %336, %346 : vector<1x32xf32>
    %348 = arith.addf %345, %347 : vector<1x32xf32>
    %349 = math.tanh %348 : vector<1x32xf32>
    %cst_136 = arith.constant 1.000000e+00 : f32
    %350 = vector.broadcast %cst_136 : f32 to vector<1x32xf32>
    %351 = arith.subf %350, %344 : vector<1x32xf32>
    %352 = arith.mulf %351, %349 : vector<1x32xf32>
    %353 = arith.mulf %344, %303 : vector<1x32xf32>
    %354 = arith.addf %352, %353 : vector<1x32xf32>
    %c5_137 = arith.constant 5 : index
    %c0_138 = arith.constant 0 : index
    %355 = vector.load %arg18[%c5_137, %c0_138] : memref<8x32xf32, #tpu.memory_space<vmem>>, vector<1x32xf32>
    tpu.vector_store %arg18[%c5_137, %c0_138], %354 {strides = array<i32>} : memref<8x32xf32, #tpu.memory_space<vmem>>, vector<1x32xf32>,
    %c5_139 = arith.constant 5 : index
    %c0_140 = arith.constant 0 : index
    %356 = vector.load %arg19[%c5_139, %c0_140] : memref<8x5xf32, #tpu.memory_space<vmem>>, vector<1x5xf32>
    tpu.vector_store %arg19[%c5_139, %c0_140], %318 {strides = array<i32>} : memref<8x5xf32, #tpu.memory_space<vmem>>, vector<1x5xf32>,
    %357 = vector.extract_strided_slice %37 {offsets = [6, 0], sizes = [1, 5], strides = [1, 1]} : vector<8x5xf32> to vector<1x5xf32>
    %cst_141 = arith.constant dense<0.000000e+00> : vector<1x5xf32>
    %358 = tpu.matmul %354, %44, %cst_141 {dimension_numbers = #tpu.dot_dimension_numbers<[1], [0], [0], [1], [0, 0, 1, 1], [], []>} : vector<1x32xf32>, vector<32x5xf32>, vector<1x5xf32> -> vector<1x5xf32>
    %359 = arith.addf %357, %358 : vector<1x5xf32>
    %cst_142 = arith.constant dense<0xFF800000> : vector<1xf32>
    %360 = vector.multi_reduction <maximumf>, %359, %cst_142 [1] : vector<1x5xf32> to vector<1xf32>
    %361 = vector.shape_cast %360 : vector<1xf32> to vector<1x1xf32>
    %362 = vector.broadcast %361 : vector<1x1xf32> to vector<1x5xf32>
    %363 = arith.subf %359, %362 : vector<1x5xf32>
    %364 = math.exp %363 : vector<1x5xf32>
    %cst_143 = arith.constant dense<0.000000e+00> : vector<1xf32>
    %365 = vector.multi_reduction <add>, %364, %cst_143 [1] : vector<1x5xf32> to vector<1xf32>
    %366 = vector.shape_cast %365 : vector<1xf32> to vector<1x1xf32>
    %367 = tpu.reciprocal %366 : vector<1x1xf32> -> vector<1x1xf32>
    %368 = vector.broadcast %367 : vector<1x1xf32> to vector<1x5xf32>
    %369 = arith.mulf %364, %368 : vector<1x5xf32>
    %cst_144 = arith.constant dense<0.000000e+00> : vector<1x32xf32>
    %370 = tpu.matmul %369, %43, %cst_144 {dimension_numbers = #tpu.dot_dimension_numbers<[1], [0], [0], [1], [0, 0, 1, 1], [], []>} : vector<1x5xf32>, vector<5x32xf32>, vector<1x32xf32> -> vector<1x32xf32>
    %371 = vector.extract_strided_slice %42 {offsets = [6, 0], sizes = [1, 32], strides = [1, 1]} : vector<8x32xf32> to vector<1x32xf32>
    %cst_145 = arith.constant dense<0.000000e+00> : vector<1x32xf32>
    %372 = tpu.matmul %370, %45, %cst_145 {dimension_numbers = #tpu.dot_dimension_numbers<[1], [0], [0], [1], [0, 0, 1, 1], [], []>} : vector<1x32xf32>, vector<32x32xf32>, vector<1x32xf32> -> vector<1x32xf32>
    %373 = arith.addf %371, %372 : vector<1x32xf32>
    %cst_146 = arith.constant 0.000000e+00 : f32
    %374 = vector.broadcast %cst_146 : f32 to vector<1x32xf32>
    %375 = arith.maximumf %373, %374 : vector<1x32xf32>
    %cst_147 = arith.constant dense<0.000000e+00> : vector<1x96xf32>
    %376 = tpu.matmul %375, %46, %cst_147 {dimension_numbers = #tpu.dot_dimension_numbers<[1], [0], [0], [1], [0, 0, 1, 1], [], []>} : vector<1x32xf32>, vector<32x96xf32>, vector<1x96xf32> -> vector<1x96xf32>
    %377 = arith.addf %376, %47 : vector<1x96xf32>
    %cst_148 = arith.constant dense<0.000000e+00> : vector<1x96xf32>
    %378 = tpu.matmul %354, %48, %cst_148 {dimension_numbers = #tpu.dot_dimension_numbers<[1], [0], [0], [1], [0, 0, 1, 1], [], []>} : vector<1x32xf32>, vector<32x96xf32>, vector<1x96xf32> -> vector<1x96xf32>
    %379 = arith.addf %378, %49 : vector<1x96xf32>
    %380 = vector.extract_strided_slice %377 {offsets = [0, 0], sizes = [1, 32], strides = [1, 1]} : vector<1x96xf32> to vector<1x32xf32>
    %381 = vector.extract_strided_slice %379 {offsets = [0, 0], sizes = [1, 32], strides = [1, 1]} : vector<1x96xf32> to vector<1x32xf32>
    %382 = arith.addf %380, %381 : vector<1x32xf32>
    %383 = arith.negf %382 : vector<1x32xf32>
    %384 = math.exp %383 : vector<1x32xf32>
    %cst_149 = arith.constant 1.000000e+00 : f32
    %385 = vector.broadcast %cst_149 : f32 to vector<1x32xf32>
    %386 = arith.addf %385, %384 : vector<1x32xf32>
    %387 = arith.divf %385, %386 : vector<1x32xf32>
    %388 = vector.extract_strided_slice %377 {offsets = [0, 32], sizes = [1, 32], strides = [1, 1]} : vector<1x96xf32> to vector<1x32xf32>
    %389 = vector.extract_strided_slice %379 {offsets = [0, 32], sizes = [1, 32], strides = [1, 1]} : vector<1x96xf32> to vector<1x32xf32>
    %390 = arith.addf %388, %389 : vector<1x32xf32>
    %391 = arith.negf %390 : vector<1x32xf32>
    %392 = math.exp %391 : vector<1x32xf32>
    %cst_150 = arith.constant 1.000000e+00 : f32
    %393 = vector.broadcast %cst_150 : f32 to vector<1x32xf32>
    %394 = arith.addf %393, %392 : vector<1x32xf32>
    %395 = arith.divf %393, %394 : vector<1x32xf32>
    %396 = vector.extract_strided_slice %377 {offsets = [0, 64], sizes = [1, 32], strides = [1, 1]} : vector<1x96xf32> to vector<1x32xf32>
    %397 = vector.extract_strided_slice %379 {offsets = [0, 64], sizes = [1, 32], strides = [1, 1]} : vector<1x96xf32> to vector<1x32xf32>
    %398 = arith.mulf %387, %397 : vector<1x32xf32>
    %399 = arith.addf %396, %398 : vector<1x32xf32>
    %400 = math.tanh %399 : vector<1x32xf32>
    %cst_151 = arith.constant 1.000000e+00 : f32
    %401 = vector.broadcast %cst_151 : f32 to vector<1x32xf32>
    %402 = arith.subf %401, %395 : vector<1x32xf32>
    %403 = arith.mulf %402, %400 : vector<1x32xf32>
    %404 = arith.mulf %395, %354 : vector<1x32xf32>
    %405 = arith.addf %403, %404 : vector<1x32xf32>
    %c6_152 = arith.constant 6 : index
    %c0_153 = arith.constant 0 : index
    %406 = vector.load %arg18[%c6_152, %c0_153] : memref<8x32xf32, #tpu.memory_space<vmem>>, vector<1x32xf32>
    tpu.vector_store %arg18[%c6_152, %c0_153], %405 {strides = array<i32>} : memref<8x32xf32, #tpu.memory_space<vmem>>, vector<1x32xf32>,
    %c6_154 = arith.constant 6 : index
    %c0_155 = arith.constant 0 : index
    %407 = vector.load %arg19[%c6_154, %c0_155] : memref<8x5xf32, #tpu.memory_space<vmem>>, vector<1x5xf32>
    tpu.vector_store %arg19[%c6_154, %c0_155], %369 {strides = array<i32>} : memref<8x5xf32, #tpu.memory_space<vmem>>, vector<1x5xf32>,
    %408 = vector.extract_strided_slice %37 {offsets = [7, 0], sizes = [1, 5], strides = [1, 1]} : vector<8x5xf32> to vector<1x5xf32>
    %cst_156 = arith.constant dense<0.000000e+00> : vector<1x5xf32>
    %409 = tpu.matmul %405, %44, %cst_156 {dimension_numbers = #tpu.dot_dimension_numbers<[1], [0], [0], [1], [0, 0, 1, 1], [], []>} : vector<1x32xf32>, vector<32x5xf32>, vector<1x5xf32> -> vector<1x5xf32>
    %410 = arith.addf %408, %409 : vector<1x5xf32>
    %cst_157 = arith.constant dense<0xFF800000> : vector<1xf32>
    %411 = vector.multi_reduction <maximumf>, %410, %cst_157 [1] : vector<1x5xf32> to vector<1xf32>
    %412 = vector.shape_cast %411 : vector<1xf32> to vector<1x1xf32>
    %413 = vector.broadcast %412 : vector<1x1xf32> to vector<1x5xf32>
    %414 = arith.subf %410, %413 : vector<1x5xf32>
    %415 = math.exp %414 : vector<1x5xf32>
    %cst_158 = arith.constant dense<0.000000e+00> : vector<1xf32>
    %416 = vector.multi_reduction <add>, %415, %cst_158 [1] : vector<1x5xf32> to vector<1xf32>
    %417 = vector.shape_cast %416 : vector<1xf32> to vector<1x1xf32>
    %418 = tpu.reciprocal %417 : vector<1x1xf32> -> vector<1x1xf32>
    %419 = vector.broadcast %418 : vector<1x1xf32> to vector<1x5xf32>
    %420 = arith.mulf %415, %419 : vector<1x5xf32>
    %cst_159 = arith.constant dense<0.000000e+00> : vector<1x32xf32>
    %421 = tpu.matmul %420, %43, %cst_159 {dimension_numbers = #tpu.dot_dimension_numbers<[1], [0], [0], [1], [0, 0, 1, 1], [], []>} : vector<1x5xf32>, vector<5x32xf32>, vector<1x32xf32> -> vector<1x32xf32>
    %422 = vector.extract_strided_slice %42 {offsets = [7, 0], sizes = [1, 32], strides = [1, 1]} : vector<8x32xf32> to vector<1x32xf32>
    %cst_160 = arith.constant dense<0.000000e+00> : vector<1x32xf32>
    %423 = tpu.matmul %421, %45, %cst_160 {dimension_numbers = #tpu.dot_dimension_numbers<[1], [0], [0], [1], [0, 0, 1, 1], [], []>} : vector<1x32xf32>, vector<32x32xf32>, vector<1x32xf32> -> vector<1x32xf32>
    %424 = arith.addf %422, %423 : vector<1x32xf32>
    %cst_161 = arith.constant 0.000000e+00 : f32
    %425 = vector.broadcast %cst_161 : f32 to vector<1x32xf32>
    %426 = arith.maximumf %424, %425 : vector<1x32xf32>
    %cst_162 = arith.constant dense<0.000000e+00> : vector<1x96xf32>
    %427 = tpu.matmul %426, %46, %cst_162 {dimension_numbers = #tpu.dot_dimension_numbers<[1], [0], [0], [1], [0, 0, 1, 1], [], []>} : vector<1x32xf32>, vector<32x96xf32>, vector<1x96xf32> -> vector<1x96xf32>
    %428 = arith.addf %427, %47 : vector<1x96xf32>
    %cst_163 = arith.constant dense<0.000000e+00> : vector<1x96xf32>
    %429 = tpu.matmul %405, %48, %cst_163 {dimension_numbers = #tpu.dot_dimension_numbers<[1], [0], [0], [1], [0, 0, 1, 1], [], []>} : vector<1x32xf32>, vector<32x96xf32>, vector<1x96xf32> -> vector<1x96xf32>
    %430 = arith.addf %429, %49 : vector<1x96xf32>
    %431 = vector.extract_strided_slice %428 {offsets = [0, 0], sizes = [1, 32], strides = [1, 1]} : vector<1x96xf32> to vector<1x32xf32>
    %432 = vector.extract_strided_slice %430 {offsets = [0, 0], sizes = [1, 32], strides = [1, 1]} : vector<1x96xf32> to vector<1x32xf32>
    %433 = arith.addf %431, %432 : vector<1x32xf32>
    %434 = arith.negf %433 : vector<1x32xf32>
    %435 = math.exp %434 : vector<1x32xf32>
    %cst_164 = arith.constant 1.000000e+00 : f32
    %436 = vector.broadcast %cst_164 : f32 to vector<1x32xf32>
    %437 = arith.addf %436, %435 : vector<1x32xf32>
    %438 = arith.divf %436, %437 : vector<1x32xf32>
    %439 = vector.extract_strided_slice %428 {offsets = [0, 32], sizes = [1, 32], strides = [1, 1]} : vector<1x96xf32> to vector<1x32xf32>
    %440 = vector.extract_strided_slice %430 {offsets = [0, 32], sizes = [1, 32], strides = [1, 1]} : vector<1x96xf32> to vector<1x32xf32>
    %441 = arith.addf %439, %440 : vector<1x32xf32>
    %442 = arith.negf %441 : vector<1x32xf32>
    %443 = math.exp %442 : vector<1x32xf32>
    %cst_165 = arith.constant 1.000000e+00 : f32
    %444 = vector.broadcast %cst_165 : f32 to vector<1x32xf32>
    %445 = arith.addf %444, %443 : vector<1x32xf32>
    %446 = arith.divf %444, %445 : vector<1x32xf32>
    %447 = vector.extract_strided_slice %428 {offsets = [0, 64], sizes = [1, 32], strides = [1, 1]} : vector<1x96xf32> to vector<1x32xf32>
    %448 = vector.extract_strided_slice %430 {offsets = [0, 64], sizes = [1, 32], strides = [1, 1]} : vector<1x96xf32> to vector<1x32xf32>
    %449 = arith.mulf %438, %448 : vector<1x32xf32>
    %450 = arith.addf %447, %449 : vector<1x32xf32>
    %451 = math.tanh %450 : vector<1x32xf32>
    %cst_166 = arith.constant 1.000000e+00 : f32
    %452 = vector.broadcast %cst_166 : f32 to vector<1x32xf32>
    %453 = arith.subf %452, %446 : vector<1x32xf32>
    %454 = arith.mulf %453, %451 : vector<1x32xf32>
    %455 = arith.mulf %446, %405 : vector<1x32xf32>
    %456 = arith.addf %454, %455 : vector<1x32xf32>
    %c7_167 = arith.constant 7 : index
    %c0_168 = arith.constant 0 : index
    %457 = vector.load %arg18[%c7_167, %c0_168] : memref<8x32xf32, #tpu.memory_space<vmem>>, vector<1x32xf32>
    tpu.vector_store %arg18[%c7_167, %c0_168], %456 {strides = array<i32>} : memref<8x32xf32, #tpu.memory_space<vmem>>, vector<1x32xf32>,
    %c7_169 = arith.constant 7 : index
    %c0_170 = arith.constant 0 : index
    %458 = vector.load %arg19[%c7_169, %c0_170] : memref<8x5xf32, #tpu.memory_space<vmem>>, vector<1x5xf32>
    tpu.vector_store %arg19[%c7_169, %c0_170], %420 {strides = array<i32>} : memref<8x5xf32, #tpu.memory_space<vmem>>, vector<1x5xf32>,
    %c0_171 = arith.constant 0 : index
    %c0_172 = arith.constant 0 : index
    %459 = vector.load %arg18[%c0_171, %c0_172] : memref<8x32xf32, #tpu.memory_space<vmem>>, vector<8x32xf32>
    %c0_173 = arith.constant 0 : index
    %c0_174 = arith.constant 0 : index
    %460 = vector.load %arg15[%c0_173, %c0_174] : memref<32x20xf32, #tpu.memory_space<vmem>>, vector<32x20xf32>
    %cst_175 = arith.constant dense<0.000000e+00> : vector<8x20xf32>
    %461 = tpu.matmul %459, %460, %cst_175 {dimension_numbers = #tpu.dot_dimension_numbers<[1], [0], [0], [1], [0, 0, 1, 1], [], []>} : vector<8x32xf32>, vector<32x20xf32>, vector<8x20xf32> -> vector<8x20xf32>
    %c0_176 = arith.constant 0 : index
    %c0_177 = arith.constant 0 : index
    %462 = vector.load %arg16[%c0_176, %c0_177] : memref<1x20xf32, #tpu.memory_space<vmem>>, vector<1x20xf32>
    %463 = vector.broadcast %462 : vector<1x20xf32> to vector<8x20xf32>
    %464 = arith.addf %461, %463 : vector<8x20xf32>
    %cst_178 = arith.constant dense<0xFF800000> : vector<8xf32>
    %465 = vector.multi_reduction <maximumf>, %464, %cst_178 [1] : vector<8x20xf32> to vector<8xf32>
    %466 = vector.shape_cast %465 : vector<8xf32> to vector<8x1xf32>
    %467 = vector.broadcast %466 : vector<8x1xf32> to vector<8x20xf32>
    %468 = arith.subf %464, %467 : vector<8x20xf32>
    %469 = math.exp %468 : vector<8x20xf32>
    %cst_179 = arith.constant dense<0.000000e+00> : vector<8xf32>
    %470 = vector.multi_reduction <add>, %469, %cst_179 [1] : vector<8x20xf32> to vector<8xf32>
    %471 = vector.shape_cast %470 : vector<8xf32> to vector<8x1xf32>
    %472 = math.log %471 : vector<8x1xf32>
    %473 = arith.addf %472, %466 : vector<8x1xf32>
    %474 = vector.broadcast %473 : vector<8x1xf32> to vector<8x20xf32>
    %475 = arith.subf %464, %474 : vector<8x20xf32>
    %c0_180 = arith.constant 0 : index
    %c0_181 = arith.constant 0 : index
    %476 = vector.load %arg17[%c0_180, %c0_181] : memref<8x20xf32, #tpu.memory_space<vmem>>, vector<8x20xf32>
    tpu.vector_store %arg17[%c0_180, %c0_181], %475 {strides = array<i32>} : memref<8x20xf32, #tpu.memory_space<vmem>>, vector<8x20xf32>,
    return
  }
  func.func @transform_0(%arg0: i32, %arg1: memref<8xi32, #tpu.memory_space<smem>>) -> (i32, i32) {
    %c0_i32 = arith.constant 0 : i32
    %c0_i32_0 = arith.constant 0 : i32
    %c0_i32_1 = arith.constant 0 : i32
    return %c0_i32, %c0_i32_0 : i32, i32
  }
  func.func @transform_1(%arg0: i32, %arg1: memref<8xi32, #tpu.memory_space<smem>>) -> (i32, i32) {
    %c0_i32 = arith.constant 0 : i32
    %c0_i32_0 = arith.constant 0 : i32
    %c0_i32_1 = arith.constant 0 : i32
    return %c0_i32, %c0_i32_0 : i32, i32
  }
  func.func @transform_2(%arg0: i32, %arg1: memref<8xi32, #tpu.memory_space<smem>>) -> (i32, i32) {
    %c0_i32 = arith.constant 0 : i32
    %c0_i32_0 = arith.constant 0 : i32
    %c0_i32_1 = arith.constant 0 : i32
    return %c0_i32, %c0_i32_0 : i32, i32
  }
  func.func @transform_3(%arg0: i32, %arg1: memref<8xi32, #tpu.memory_space<smem>>) -> (i32, i32) {
    %c0_i32 = arith.constant 0 : i32
    %c0_i32_0 = arith.constant 0 : i32
    %c0_i32_1 = arith.constant 0 : i32
    return %c0_i32, %c0_i32_0 : i32, i32
  }
  func.func @transform_4(%arg0: i32, %arg1: memref<8xi32, #tpu.memory_space<smem>>) -> (i32, i32) {
    %c0_i32 = arith.constant 0 : i32
    %c0_i32_0 = arith.constant 0 : i32
    %c0_i32_1 = arith.constant 0 : i32
    return %c0_i32, %c0_i32_0 : i32, i32
  }
  func.func @transform_5(%arg0: i32, %arg1: memref<8xi32, #tpu.memory_space<smem>>) -> (i32, i32) {
    %c0_i32 = arith.constant 0 : i32
    %c0_i32_0 = arith.constant 0 : i32
    %c0_i32_1 = arith.constant 0 : i32
    return %c0_i32, %c0_i32_0 : i32, i32
  }
  func.func @transform_6(%arg0: i32, %arg1: memref<8xi32, #tpu.memory_space<smem>>) -> (i32, i32) {
    %c0_i32 = arith.constant 0 : i32
    %c0_i32_0 = arith.constant 0 : i32
    %c0_i32_1 = arith.constant 0 : i32
    return %c0_i32, %c0_i32_0 : i32, i32
  }
  func.func @transform_7(%arg0: i32, %arg1: memref<8xi32, #tpu.memory_space<smem>>) -> (i32, i32) {
    %c0_i32 = arith.constant 0 : i32
    %c0_i32_0 = arith.constant 0 : i32
    %c0_i32_1 = arith.constant 0 : i32
    return %c0_i32, %c0_i32_0 : i32, i32
  }
  func.func @transform_8(%arg0: i32, %arg1: memref<8xi32, #tpu.memory_space<smem>>) -> (i32, i32) {
    %c0_i32 = arith.constant 0 : i32
    %c0_i32_0 = arith.constant 0 : i32
    %c0_i32_1 = arith.constant 0 : i32
    return %c0_i32, %c0_i32_0 : i32, i32
  }
  func.func @transform_9(%arg0: i32, %arg1: memref<8xi32, #tpu.memory_space<smem>>) -> (i32, i32) {
    %c0_i32 = arith.constant 0 : i32
    %c0_i32_0 = arith.constant 0 : i32
    %c0_i32_1 = arith.constant 0 : i32
    return %c0_i32, %c0_i32_0 : i32, i32
  }
  func.func @transform_10(%arg0: i32, %arg1: memref<8xi32, #tpu.memory_space<smem>>) -> (i32, i32) {
    %c0_i32 = arith.constant 0 : i32
    %c0_i32_0 = arith.constant 0 : i32
    %c0_i32_1 = arith.constant 0 : i32
    return %c0_i32, %c0_i32_0 : i32, i32
  }
  func.func @transform_11(%arg0: i32, %arg1: memref<8xi32, #tpu.memory_space<smem>>) -> (i32, i32) {
    %c0_i32 = arith.constant 0 : i32
    %c0_i32_0 = arith.constant 0 : i32
    %c0_i32_1 = arith.constant 0 : i32
    return %c0_i32, %c0_i32_0 : i32, i32
  }
  func.func @transform_12(%arg0: i32, %arg1: memref<8xi32, #tpu.memory_space<smem>>) -> (i32, i32) {
    %c0_i32 = arith.constant 0 : i32
    %c0_i32_0 = arith.constant 0 : i32
    %c0_i32_1 = arith.constant 0 : i32
    return %c0_i32, %c0_i32_0 : i32, i32
  }
  func.func @transform_13(%arg0: i32, %arg1: memref<8xi32, #tpu.memory_space<smem>>) -> (i32, i32) {
    %c0_i32 = arith.constant 0 : i32
    %c0_i32_0 = arith.constant 0 : i32
    %c0_i32_1 = arith.constant 0 : i32
    return %c0_i32, %c0_i32_0 : i32, i32
  }
  func.func @transform_14(%arg0: i32, %arg1: memref<8xi32, #tpu.memory_space<smem>>) -> (i32, i32) {
    %c0_i32 = arith.constant 0 : i32
    %c0_i32_0 = arith.constant 0 : i32
    %c0_i32_1 = arith.constant 0 : i32
    return %c0_i32, %c0_i32_0 : i32, i32
  }
  func.func @transform_15(%arg0: i32, %arg1: memref<8xi32, #tpu.memory_space<smem>>) -> (i32, i32) {
    %c0_i32 = arith.constant 0 : i32
    %c0_i32_0 = arith.constant 0 : i32
    %c0_i32_1 = arith.constant 0 : i32
    return %c0_i32, %c0_i32_0 : i32, i32
  }
  func.func @transform_16(%arg0: i32, %arg1: memref<8xi32, #tpu.memory_space<smem>>) -> (i32, i32) {
    %c0_i32 = arith.constant 0 : i32
    %c0_i32_0 = arith.constant 0 : i32
    %c0_i32_1 = arith.constant 0 : i32
    return %c0_i32, %c0_i32_0 : i32, i32
  }
  func.func @transform_17(%arg0: i32, %arg1: memref<8xi32, #tpu.memory_space<smem>>) -> (i32, i32) {
    %c0_i32 = arith.constant 0 : i32
    %c0_i32_0 = arith.constant 0 : i32
    %c0_i32_1 = arith.constant 0 : i32
    return %c0_i32, %c0_i32_0 : i32, i32
  }
}

</mosaic_0001>

<llo_original>
// kernel: attention_decoder_decode.1
$region0: #{attention_decoder_decode.1}
  #allocation0 [shape = 'u32[]', space=smem, size = 0x4, offset = 0x4, fixed_abs, tag = 'smem constant byte address 0x4 - core index']
  #allocation1 [shape = 'u32[144,128]{1,0:T(1,128)}', space=vmem, size = 0x12000, scoped, tag = 'internal scratch']
  #allocation2 [shape = 'f32[8,32]{1,0:T(8,128)}', space=vmem, size = 0x1000, scoped, tag = 'scratch operand']
  #allocation3 [shape = 's32[1]{0}', space=sflag, size = 0x4, scoped, tag = 'scoped memory for attention_decoder_decode.1']
  #allocation4 [shape = 'u8[512]{0}', space=smem, size = 0x200, scoped, tag = 'prefetched SMEM operand 0']
  %s0 = inlined_call_operand.vmem [shape: s32[8], index: 0, kind: input, shape index: {}]
  %s1 = inlined_call_operand.vmem [shape: f32[20,32], index: 1, kind: input, shape index: {}]
  %s2 = inlined_call_operand.vmem [shape: f32[1,32], index: 2, kind: input, shape index: {}]
  %s3 = inlined_call_operand.vmem [shape: f32[5,32], index: 3, kind: input, shape index: {}]
  %s4 = inlined_call_operand.vmem [shape: f32[32,5], index: 4, kind: input, shape index: {}]
  %s5 = inlined_call_operand.vmem [shape: f32[32,5], index: 5, kind: input, shape index: {}]
  %s6 = inlined_call_operand.vmem [shape: f32[1,5], index: 6, kind: input, shape index: {}]
  %s7 = inlined_call_operand.vmem [shape: f32[32,32], index: 7, kind: input, shape index: {}]
  %s8 = inlined_call_operand.vmem [shape: f32[32,32], index: 8, kind: input, shape index: {}]
  %s9 = inlined_call_operand.vmem [shape: f32[1,32], index: 9, kind: input, shape index: {}]
  %s10 = inlined_call_operand.vmem [shape: f32[32,96], index: 10, kind: input, shape index: {}]
  %s11 = inlined_call_operand.vmem [shape: f32[1,96], index: 11, kind: input, shape index: {}]
  %s12 = inlined_call_operand.vmem [shape: f32[32,96], index: 12, kind: input, shape index: {}]
  %s13 = inlined_call_operand.vmem [shape: f32[1,96], index: 13, kind: input, shape index: {}]
  %s14 = inlined_call_operand.vmem [shape: f32[32,20], index: 14, kind: input, shape index: {}]
  %s15 = inlined_call_operand.vmem [shape: f32[1,20], index: 15, kind: input, shape index: {}]
  %s16 = inlined_call_operand.hbm [shape: f32[8,20], index: 16, kind: output, shape index: {0}]
  %s17 = inlined_call_operand.hbm [shape: f32[8,32], index: 17, kind: output, shape index: {1}]
  %s18 = inlined_call_operand.hbm [shape: f32[8,5], index: 18, kind: output, shape index: {2}]
  %19 = xla_tuple %s16, %s17, %s18
  %s20 = sld [smem:[#allocation0]]
  $region86: #{attention_decoder_decode.1} parent=0
    _
  %s22 = ssub.s32 1, %s20
  %s23 = scalar_select 0, %s22, %s20
  %s24 = sshll.u32 %s0, 4
  %s25 = int_to_ptr.vmem [resolvable:$true] %s24
  %27 = dma.vmem_to_smem %s25, 16, [#allocation4], [#allocation3]
  %28 = dma.done [#allocation3], 16
  %29 = sfence
  $region1: #{attention_decoder_decode.1} parent=0
    #allocation5 [shape = 'u8[4096]{0}', space=vmem, size = 0x1000, scoped, tag = 'output window, operand 0, single buffered']
    #allocation6 [shape = 's32[1]{0}', space=sflag, size = 0x4, scoped, tag = 'scoped memory for attention_decoder_decode.1']
    #allocation7 [shape = 'u8[4096]{0}', space=vmem, size = 0x1000, scoped, tag = 'output window, operand 1, single buffered']
    #allocation8 [shape = 's32[1]{0}', space=sflag, size = 0x4, scoped, tag = 'scoped memory for attention_decoder_decode.1']
    #allocation9 [shape = 'u8[4096]{0}', space=vmem, size = 0x1000, scoped, tag = 'output window, operand 2, single buffered']
    %30 = vsyncpa [#allocation6], 0
    %31 = vsyncpa [#allocation8], 0
    // Predicated region
    $region2: #{attention_decoder_decode.1} parent=1 // pred_check
      _
    $region3: #{attention_decoder_decode.1} parent=1 // pred_check_branch
      %33 = sbr.rel (0) target = $region5
    $region4: #{attention_decoder_decode.1} parent=1 // pred_region
      _
    $region5: #{attention_decoder_decode.1} parent=1 // pred_fallthru
      _
    // Predicated region
    $region6: #{attention_decoder_decode.1} parent=1 // pred_check
      _
    $region7: #{attention_decoder_decode.1} parent=1 // pred_check_branch
      %35 = sbr.rel (0) target = $region9
    $region8: #{attention_decoder_decode.1} parent=1 // pred_region
      _
    $region9: #{attention_decoder_decode.1} parent=1 // pred_fallthru
      _
    // Predicated region
    $region10: #{attention_decoder_decode.1} parent=1 // pred_check
      _
    $region11: #{attention_decoder_decode.1} parent=1 // pred_check_branch
      %37 = sbr.rel (0) target = $region13
    $region12: #{attention_decoder_decode.1} parent=1 // pred_region
      _
    $region13: #{attention_decoder_decode.1} parent=1 // pred_fallthru
      _
    // Predicated region
    $region14: #{attention_decoder_decode.1} parent=1 // pred_check
      _
    $region15: #{attention_decoder_decode.1} parent=1 // pred_check_branch
      %39 = sbr.rel (0) target = $region17
    $region16: #{attention_decoder_decode.1} parent=1 // pred_region
      _
    $region17: #{attention_decoder_decode.1} parent=1 // pred_fallthru
      _
    // Predicated region
    $region18: #{attention_decoder_decode.1} parent=1 // pred_check
      _
    $region19: #{attention_decoder_decode.1} parent=1 // pred_check_branch
      %41 = sbr.rel (0) target = $region21
    $region20: #{attention_decoder_decode.1} parent=1 // pred_region
      _
    $region21: #{attention_decoder_decode.1} parent=1 // pred_fallthru
      _
    // Predicated region
    $region22: #{attention_decoder_decode.1} parent=1 // pred_check
      _
    $region23: #{attention_decoder_decode.1} parent=1 // pred_check_branch
      %43 = sbr.rel (0) target = $region25
    $region24: #{attention_decoder_decode.1} parent=1 // pred_region
      _
    $region25: #{attention_decoder_decode.1} parent=1 // pred_fallthru
      _
    // Predicated region
    $region26: #{attention_decoder_decode.1} parent=1 // pred_check
      _
    $region27: #{attention_decoder_decode.1} parent=1 // pred_check_branch
      %45 = sbr.rel (0) target = $region29
    $region28: #{attention_decoder_decode.1} parent=1 // pred_region
      _
    $region29: #{attention_decoder_decode.1} parent=1 // pred_fallthru
      _
    // Predicated region
    $region30: #{attention_decoder_decode.1} parent=1 // pred_check
      _
    $region31: #{attention_decoder_decode.1} parent=1 // pred_check_branch
      %47 = sbr.rel (0) target = $region33
    $region32: #{attention_decoder_decode.1} parent=1 // pred_region
      _
    $region33: #{attention_decoder_decode.1} parent=1 // pred_fallthru
      _
    // Predicated region
    $region34: #{attention_decoder_decode.1} parent=1 // pred_check
      _
    $region35: #{attention_decoder_decode.1} parent=1 // pred_check_branch
      %49 = sbr.rel (0) target = $region37
    $region36: #{attention_decoder_decode.1} parent=1 // pred_region
      _
    $region37: #{attention_decoder_decode.1} parent=1 // pred_fallthru
      _
    // Predicated region
    $region38: #{attention_decoder_decode.1} parent=1 // pred_check
      _
    $region39: #{attention_decoder_decode.1} parent=1 // pred_check_branch
      %51 = sbr.rel (0) target = $region41
    $region40: #{attention_decoder_decode.1} parent=1 // pred_region
      _
    $region41: #{attention_decoder_decode.1} parent=1 // pred_fallthru
      _
    // Predicated region
    $region42: #{attention_decoder_decode.1} parent=1 // pred_check
      _
    $region43: #{attention_decoder_decode.1} parent=1 // pred_check_branch
      %53 = sbr.rel (0) target = $region45
    $region44: #{attention_decoder_decode.1} parent=1 // pred_region
      _
    $region45: #{attention_decoder_decode.1} parent=1 // pred_fallthru
      _
    // Predicated region
    $region46: #{attention_decoder_decode.1} parent=1 // pred_check
      _
    $region47: #{attention_decoder_decode.1} parent=1 // pred_check_branch
      %55 = sbr.rel (0) target = $region49
    $region48: #{attention_decoder_decode.1} parent=1 // pred_region
      _
    $region49: #{attention_decoder_decode.1} parent=1 // pred_fallthru
      _
    // Predicated region
    $region50: #{attention_decoder_decode.1} parent=1 // pred_check
      _
    $region51: #{attention_decoder_decode.1} parent=1 // pred_check_branch
      %57 = sbr.rel (0) target = $region53
    $region52: #{attention_decoder_decode.1} parent=1 // pred_region
      _
    $region53: #{attention_decoder_decode.1} parent=1 // pred_fallthru
      _
    // Predicated region
    $region54: #{attention_decoder_decode.1} parent=1 // pred_check
      _
    $region55: #{attention_decoder_decode.1} parent=1 // pred_check_branch
      %59 = sbr.rel (0) target = $region57
    $region56: #{attention_decoder_decode.1} parent=1 // pred_region
      _
    $region57: #{attention_decoder_decode.1} parent=1 // pred_fallthru
      _
    // Predicated region
    $region58: #{attention_decoder_decode.1} parent=1 // pred_check
      _
    $region59: #{attention_decoder_decode.1} parent=1 // pred_check_branch
      %61 = sbr.rel (0) target = $region61
    $region60: #{attention_decoder_decode.1} parent=1 // pred_region
      _
    $region61: #{attention_decoder_decode.1} parent=1 // pred_fallthru
      _
    %s62 = sld [smem:[#allocation4]]
    %s63 = scalar_lea.vmem %s1, %s62
    %v64 = vld [vmem:[%s63] sm:$0x1]
    %vm65 = vcmask 253952
    %66 = vst.msk [vmem:[#allocation2] sm:$0x1] %vm65, %v64
    %s67 = sld [smem:[#allocation4 + $0x1]]
    %s68 = scalar_lea.vmem %s1, %s67
    %v69 = vld [vmem:[%s68] sm:$0x1]
    %70 = vst.msk [vmem:[#allocation2 + $0x1] sm:$0x1] %vm65, %v69
    %s71 = sld [smem:[#allocation4 + $0x2]]
    %s72 = scalar_lea.vmem %s1, %s71
    %v73 = vld [vmem:[%s72] sm:$0x1]
    %74 = vst.msk [vmem:[#allocation2 + $0x2] sm:$0x1] %vm65, %v73
    %s75 = sld [smem:[#allocation4 + $0x3]]
    %s76 = scalar_lea.vmem %s1, %s75
    %v77 = vld [vmem:[%s76] sm:$0x1]
    %78 = vst.msk [vmem:[#allocation2 + $0x3] sm:$0x1] %vm65, %v77
    %s79 = sld [smem:[#allocation4 + $0x4]]
    %s80 = scalar_lea.vmem %s1, %s79
    %v81 = vld [vmem:[%s80] sm:$0x1]
    %82 = vst.msk [vmem:[#allocation2 + $0x4] sm:$0x1] %vm65, %v81
    %s83 = sld [smem:[#allocation4 + $0x5]]
    %s84 = scalar_lea.vmem %s1, %s83
    %v85 = vld [vmem:[%s84] sm:$0x1]
    %86 = vst.msk [vmem:[#allocation2 + $0x5] sm:$0x1] %vm65, %v85
    %s87 = sld [smem:[#allocation4 + $0x6]]
    %s88 = scalar_lea.vmem %s1, %s87
    %v89 = vld [vmem:[%s88] sm:$0x1]
    %90 = vst.msk [vmem:[#allocation2 + $0x6] sm:$0x1] %vm65, %v89
    %s91 = sld [smem:[#allocation4 + $0x7]]
    %s92 = scalar_lea.vmem %s1, %s91
    %v93 = vld [vmem:[%s92] sm:$0x1]
    %94 = vst.msk [vmem:[#allocation2 + $0x7] sm:$0x1] %vm65, %v93
    %v95 = vld [vmem:[#allocation2] sm:$0xff]
    %v96 = vld [vmem:[%s4] sm:$0xff]
    %v97 = vld [vmem:[%s4 + $0x8] sm:$0xff]
    %v98 = vld [vmem:[%s4 + $0x10] sm:$0xff]
    %v99 = vld [vmem:[%s4 + $0x18] sm:$0xff]
    %v100 = vld [vmem:[%s6] sm:$0x1]
    %v102 = vlaneseq
    %v103 = vshrl.u32 %v102, 7
    %v104 = vsub.s32 0, %v103
    %v105 = vrot.slane %v100, %v104
    %vm107 = vcmask 261120
    %v109 = vsel %vm107, %v95, 0
    %111 = vmatprep.subr.mxu0 0.0
    %112 = vmatpush1.msra.mxu0 %v96
    %113 = vmatprep.subr.mxu0 0.0
    %114 = vmatpush1.msra.mxu0 %v97
    %115 = vmatprep.subr.mxu0 0.0
    %116 = vmatpush1.msra.mxu0 %v98
    %117 = vmatprep.subr.mxu0 0.0
    %118 = vmatpush1.msra.mxu0 %v99
    %119 = vmatprep.subr.mxu0 0.0
    %120 = vmatpush1.msra.mxu0 0.0
    %121 = vmatprep.subr.mxu0 0.0
    %122 = vmatpush1.msra.mxu0 0.0
    %123 = vmatprep.subr.mxu0 0.0
    %124 = vmatpush1.msra.mxu0 0.0
    %125 = vmatprep.subr.mxu0 0.0
    %126 = vmatpush1.msra.mxu0 0.0
    %127 = vmatprep.subr.mxu0 0.0
    %128 = vmatpush1.msra.mxu0 0.0
    %129 = vmatprep.subr.mxu0 0.0
    %130 = vmatpush1.msra.mxu0 0.0
    %131 = vmatprep.subr.mxu0 0.0
    %132 = vmatpush1.msra.mxu0 0.0
    %133 = vmatprep.subr.mxu0 0.0
    %134 = vmatpush1.msra.mxu0 0.0
    %135 = vmatprep.subr.mxu0 0.0
    %136 = vmatpush1.msra.mxu0 0.0
    %137 = vmatprep.subr.mxu0 0.0
    %138 = vmatpush1.msra.mxu0 0.0
    %139 = vmatprep.subr.mxu0 0.0
    %140 = vmatpush1.msra.mxu0 0.0
    %141 = vmatprep.subr.mxu0 0.0
    %142 = vmatpush1.msra.mxu0 0.0
    %143 = vmatprep.subr.mxu0 0.0
    %144 = vmatpush1.msra.mxu0 0.0
    %145 = vmatprep.subr.mxu0 0.0
    %146 = vmatpush1.msra.mxu0 0.0
    %147 = vmatprep.subr.mxu0 0.0
    %148 = vmatpush1.msra.mxu0 0.0
    %149 = vmatprep.subr.mxu0 0.0
    %150 = vmatpush1.msra.mxu0 0.0
    %151 = vmatprep.subr.mxu0 0.0
    %152 = vmatpush1.msra.mxu0 0.0
    %153 = vmatprep.subr.mxu0 0.0
    %154 = vmatpush1.msra.mxu0 0.0
    %155 = vmatprep.subr.mxu0 0.0
    %156 = vmatpush1.msra.mxu0 0.0
    %157 = vmatprep.subr.mxu0 0.0
    %158 = vmatpush1.msra.mxu0 0.0
    %159 = vmatprep.subr.mxu0 0.0
    %160 = vmatpush1.msra.mxu0 0.0
    %161 = vmatprep.subr.mxu0 0.0
    %162 = vmatpush1.msra.mxu0 0.0
    %163 = vmatprep.subr.mxu0 0.0
    %164 = vmatpush1.msra.mxu0 0.0
    %165 = vmatprep.subr.mxu0 0.0
    %166 = vmatpush1.msra.mxu0 0.0
    %167 = vmatprep.subr.mxu0 0.0
    %168 = vmatpush1.msra.mxu0 0.0
    %169 = vmatprep.subr.mxu0 0.0
    %170 = vmatpush1.msra.mxu0 0.0
    %171 = vmatprep.subr.mxu0 0.0
    %172 = vmatpush1.msra.mxu0 0.0
    %173 = vmatprep.subr.mxu0 0.0
    %174 = vmatpush1.msra.mxu0 0.0
    %175 = vmatprep.mubr.f32.mxu0 0.0
    %176 = vmatmul.mubr.f32.gmra.mrb[0].mxu0 %v109
    %v177 = vpop.f32.mrb[0].mxu0
    %v178 = vadd.f32 %v105, %v177
    %v179 = vpop.f32.mrb[0].mxu0
    %180 = vdwg.mxu0
    %v181 = vld [vmem:[%s7] sm:$0xff]
    %v182 = vld [vmem:[%s7 + $0x8] sm:$0xff]
    %v183 = vld [vmem:[%s7 + $0x10] sm:$0xff]
    %v184 = vld [vmem:[%s7 + $0x18] sm:$0xff]
    %v185 = vld [vmem:[%s9] sm:$0x1]
    %v187 = vlaneseq
    %v188 = vshrl.u32 %v187, 7
    %v189 = vsub.s32 0, %v188
    %v190 = vrot.slane %v185, %v189
    %192 = vmatprep.subr.mxu0 0.0
    %193 = vmatpush1.msra.mxu0 %v181
    %194 = vmatprep.subr.mxu0 0.0
    %195 = vmatpush1.msra.mxu0 %v182
    %196 = vmatprep.subr.mxu0 0.0
    %197 = vmatpush1.msra.mxu0 %v183
    %198 = vmatprep.subr.mxu0 0.0
    %199 = vmatpush1.msra.mxu0 %v184
    %200 = vmatprep.subr.mxu0 0.0
    %201 = vmatpush1.msra.mxu0 0.0
    %202 = vmatprep.subr.mxu0 0.0
    %203 = vmatpush1.msra.mxu0 0.0
    %204 = vmatprep.subr.mxu0 0.0
    %205 = vmatpush1.msra.mxu0 0.0
    %206 = vmatprep.subr.mxu0 0.0
    %207 = vmatpush1.msra.mxu0 0.0
    %208 = vmatprep.subr.mxu0 0.0
    %209 = vmatpush1.msra.mxu0 0.0
    %210 = vmatprep.subr.mxu0 0.0
    %211 = vmatpush1.msra.mxu0 0.0
    %212 = vmatprep.subr.mxu0 0.0
    %213 = vmatpush1.msra.mxu0 0.0
    %214 = vmatprep.subr.mxu0 0.0
    %215 = vmatpush1.msra.mxu0 0.0
    %216 = vmatprep.subr.mxu0 0.0
    %217 = vmatpush1.msra.mxu0 0.0
    %218 = vmatprep.subr.mxu0 0.0
    %219 = vmatpush1.msra.mxu0 0.0
    %220 = vmatprep.subr.mxu0 0.0
    %221 = vmatpush1.msra.mxu0 0.0
    %222 = vmatprep.subr.mxu0 0.0
    %223 = vmatpush1.msra.mxu0 0.0
    %224 = vmatprep.subr.mxu0 0.0
    %225 = vmatpush1.msra.mxu0 0.0
    %226 = vmatprep.subr.mxu0 0.0
    %227 = vmatpush1.msra.mxu0 0.0
    %228 = vmatprep.subr.mxu0 0.0
    %229 = vmatpush1.msra.mxu0 0.0
    %230 = vmatprep.subr.mxu0 0.0
    %231 = vmatpush1.msra.mxu0 0.0
    %232 = vmatprep.subr.mxu0 0.0
    %233 = vmatpush1.msra.mxu0 0.0
    %234 = vmatprep.subr.mxu0 0.0
    %235 = vmatpush1.msra.mxu0 0.0
    %236 = vmatprep.subr.mxu0 0.0
    %237 = vmatpush1.msra.mxu0 0.0
    %238 = vmatprep.subr.mxu0 0.0
    %239 = vmatpush1.msra.mxu0 0.0
    %240 = vmatprep.subr.mxu0 0.0
    %241 = vmatpush1.msra.mxu0 0.0
    %242 = vmatprep.subr.mxu0 0.0
    %243 = vmatpush1.msra.mxu0 0.0
    %244 = vmatprep.subr.mxu0 0.0
    %245 = vmatpush1.msra.mxu0 0.0
    %246 = vmatprep.subr.mxu0 0.0
    %247 = vmatpush1.msra.mxu0 0.0
    %248 = vmatprep.subr.mxu0 0.0
    %249 = vmatpush1.msra.mxu0 0.0
    %250 = vmatprep.subr.mxu0 0.0
    %251 = vmatpush1.msra.mxu0 0.0
    %252 = vmatprep.subr.mxu0 0.0
    %253 = vmatpush1.msra.mxu0 0.0
    %254 = vmatprep.subr.mxu0 0.0
    %255 = vmatpush1.msra.mxu0 0.0
    %256 = vmatprep.mubr.f32.mxu0 0.0
    %257 = vmatmul.mubr.f32.gmra.mrb[0].mxu0 %v109
    %v258 = vpop.f32.mrb[0].mxu0
    %v259 = vadd.f32 %v190, %v258
    %v260 = vpop.f32.mrb[0].mxu0
    %261 = vdwg.mxu0
    %v262 = vld [vmem:[%s3] sm:$0x1f]
    %v263 = vld [vmem:[%s5] sm:$0xff]
    %v264 = vld [vmem:[%s5 + $0x8] sm:$0xff]
    %v265 = vld [vmem:[%s5 + $0x10] sm:$0xff]
    %v266 = vld [vmem:[%s5 + $0x18] sm:$0xff]
    %v267 = vld [vmem:[%s8] sm:$0xff]
    %v268 = vld [vmem:[%s8 + $0x8] sm:$0xff]
    %v269 = vld [vmem:[%s8 + $0x10] sm:$0xff]
    %v270 = vld [vmem:[%s8 + $0x18] sm:$0xff]
    %v271 = vld [vmem:[%s10] sm:$0xff]
    %v272 = vld [vmem:[%s10 + $0x8] sm:$0xff]
    %v273 = vld [vmem:[%s10 + $0x10] sm:$0xff]
    %v274 = vld [vmem:[%s10 + $0x18] sm:$0xff]
    %v275 = vld [vmem:[%s11] sm:$0x1]
    %v276 = vld [vmem:[%s12] sm:$0xff]
    %v277 = vld [vmem:[%s12 + $0x8] sm:$0xff]
    %v278 = vld [vmem:[%s12 + $0x10] sm:$0xff]
    %v279 = vld [vmem:[%s12 + $0x18] sm:$0xff]
    %v280 = vld [vmem:[%s13] sm:$0x1]
    %v281 = vld [vmem:[%s2] sm:$0x1]
    %v283 = vsel %vm107, %v281, 0
    %285 = vmatprep.subr.mxu0 0.0
    %286 = vmatpush1.msra.mxu0 %v263
    %287 = vmatprep.subr.mxu0 0.0
    %288 = vmatpush1.msra.mxu0 %v264
    %289 = vmatprep.subr.mxu0 0.0
    %290 = vmatpush1.msra.mxu0 %v265
    %291 = vmatprep.subr.mxu0 0.0
    %292 = vmatpush1.msra.mxu0 %v266
    %293 = vmatprep.subr.mxu0 0.0
    %294 = vmatpush1.msra.mxu0 0.0
    %295 = vmatprep.subr.mxu0 0.0
    %296 = vmatpush1.msra.mxu0 0.0
    %297 = vmatprep.subr.mxu0 0.0
    %298 = vmatpush1.msra.mxu0 0.0
    %299 = vmatprep.subr.mxu0 0.0
    %300 = vmatpush1.msra.mxu0 0.0
    %301 = vmatprep.subr.mxu0 0.0
    %302 = vmatpush1.msra.mxu0 0.0
    %303 = vmatprep.subr.mxu0 0.0
    %304 = vmatpush1.msra.mxu0 0.0
    %305 = vmatprep.subr.mxu0 0.0
    %306 = vmatpush1.msra.mxu0 0.0
    %307 = vmatprep.subr.mxu0 0.0
    %308 = vmatpush1.msra.mxu0 0.0
    %309 = vmatprep.subr.mxu0 0.0
    %310 = vmatpush1.msra.mxu0 0.0
    %311 = vmatprep.subr.mxu0 0.0
    %312 = vmatpush1.msra.mxu0 0.0
    %313 = vmatprep.subr.mxu0 0.0
    %314 = vmatpush1.msra.mxu0 0.0
    %315 = vmatprep.subr.mxu0 0.0
    %316 = vmatpush1.msra.mxu0 0.0
    %317 = vmatprep.subr.mxu0 0.0
    %318 = vmatpush1.msra.mxu0 0.0
    %319 = vmatprep.subr.mxu0 0.0
    %320 = vmatpush1.msra.mxu0 0.0
    %321 = vmatprep.subr.mxu0 0.0
    %322 = vmatpush1.msra.mxu0 0.0
    %323 = vmatprep.subr.mxu0 0.0
    %324 = vmatpush1.msra.mxu0 0.0
    %325 = vmatprep.subr.mxu0 0.0
    %326 = vmatpush1.msra.mxu0 0.0
    %327 = vmatprep.subr.mxu0 0.0
    %328 = vmatpush1.msra.mxu0 0.0
    %329 = vmatprep.subr.mxu0 0.0
    %330 = vmatpush1.msra.mxu0 0.0
    %331 = vmatprep.subr.mxu0 0.0
    %332 = vmatpush1.msra.mxu0 0.0
    %333 = vmatprep.subr.mxu0 0.0
    %334 = vmatpush1.msra.mxu0 0.0
    %335 = vmatprep.subr.mxu0 0.0
    %336 = vmatpush1.msra.mxu0 0.0
    %337 = vmatprep.subr.mxu0 0.0
    %338 = vmatpush1.msra.mxu0 0.0
    %339 = vmatprep.subr.mxu0 0.0
    %340 = vmatpush1.msra.mxu0 0.0
    %341 = vmatprep.subr.mxu0 0.0
    %342 = vmatpush1.msra.mxu0 0.0
    %343 = vmatprep.subr.mxu0 0.0
    %344 = vmatpush1.msra.mxu0 0.0
    %345 = vmatprep.subr.mxu0 0.0
    %346 = vmatpush1.msra.mxu0 0.0
    %347 = vmatprep.subr.mxu0 0.0
    %348 = vmatpush1.msra.mxu0 0.0
    %349 = vmatprep.mubr.f32.mxu0 0.0
    %350 = vmatmul.mubr.f32.gmra.mrb[0].mxu0 %v283
    %v351 = vpop.f32.mrb[0].mxu0
    %v352 = vadd.f32 0.0, %v351
    %v353 = vpop.f32.mrb[0].mxu0
    %354 = vdwg.mxu0
    %v355 = vadd.f32 %v178, %v352
    %vm356 = vcmask 32768
    %v357 = vsel %vm356, %v355, -inf
    %358 = vmax.xlane.f32.xlu0 %v357
    %v359 = vpop.xlane.xlu0 %358
    %v360 = vsub.f32 %v355, %v359
    %v361 = vmul.f32 %v360, 1.442695
    %v362 = vpow.pop %v361
    %v363 = vsel %vm356, %v362, 0.0
    %364 = vadd.xlane.f32.xlu0 %v363
    %v365 = vpop.xlane.xlu0 %364
    %v366 = vrcp.pop %v365
    %v367 = vmul.f32 %v362, %v366
    %vm368 = vcmask 39936
    %v370 = vsel %vm368, %v367, 0
    %vm372 = vcmask 1044480
    %v374 = vsel %vm372, %v262, 0
    %376 = vmatprep.subr.mxu0 0.0
    %377 = vmatpush1.msra.mxu0 %v374
    %378 = vmatprep.subr.mxu0 0.0
    %379 = vmatpush1.msra.mxu0 0.0
    %380 = vmatprep.subr.mxu0 0.0
    %381 = vmatpush1.msra.mxu0 0.0
    %382 = vmatprep.subr.mxu0 0.0
    %383 = vmatpush1.msra.mxu0 0.0
    %384 = vmatprep.subr.mxu0 0.0
    %385 = vmatpush1.msra.mxu0 0.0
    %386 = vmatprep.subr.mxu0 0.0
    %387 = vmatpush1.msra.mxu0 0.0
    %388 = vmatprep.subr.mxu0 0.0
    %389 = vmatpush1.msra.mxu0 0.0
    %390 = vmatprep.subr.mxu0 0.0
    %391 = vmatpush1.msra.mxu0 0.0
    %392 = vmatprep.subr.mxu0 0.0
    %393 = vmatpush1.msra.mxu0 0.0
    %394 = vmatprep.subr.mxu0 0.0
    %395 = vmatpush1.msra.mxu0 0.0
    %396 = vmatprep.subr.mxu0 0.0
    %397 = vmatpush1.msra.mxu0 0.0
    %398 = vmatprep.subr.mxu0 0.0
    %399 = vmatpush1.msra.mxu0 0.0
    %400 = vmatprep.subr.mxu0 0.0
    %401 = vmatpush1.msra.mxu0 0.0
    %402 = vmatprep.subr.mxu0 0.0
    %403 = vmatpush1.msra.mxu0 0.0
    %404 = vmatprep.subr.mxu0 0.0
    %405 = vmatpush1.msra.mxu0 0.0
    %406 = vmatprep.subr.mxu0 0.0
    %407 = vmatpush1.msra.mxu0 0.0
    %408 = vmatprep.subr.mxu0 0.0
    %409 = vmatpush1.msra.mxu0 0.0
    %410 = vmatprep.subr.mxu0 0.0
    %411 = vmatpush1.msra.mxu0 0.0
    %412 = vmatprep.subr.mxu0 0.0
    %413 = vmatpush1.msra.mxu0 0.0
    %414 = vmatprep.subr.mxu0 0.0
    %415 = vmatpush1.msra.mxu0 0.0
    %416 = vmatprep.subr.mxu0 0.0
    %417 = vmatpush1.msra.mxu0 0.0
    %418 = vmatprep.subr.mxu0 0.0
    %419 = vmatpush1.msra.mxu0 0.0
    %420 = vmatprep.subr.mxu0 0.0
    %421 = vmatpush1.msra.mxu0 0.0
    %422 = vmatprep.subr.mxu0 0.0
    %423 = vmatpush1.msra.mxu0 0.0
    %424 = vmatprep.subr.mxu0 0.0
    %425 = vmatpush1.msra.mxu0 0.0
    %426 = vmatprep.subr.mxu0 0.0
    %427 = vmatpush1.msra.mxu0 0.0
    %428 = vmatprep.subr.mxu0 0.0
    %429 = vmatpush1.msra.mxu0 0.0
    %430 = vmatprep.subr.mxu0 0.0
    %431 = vmatpush1.msra.mxu0 0.0
    %432 = vmatprep.subr.mxu0 0.0
    %433 = vmatpush1.msra.mxu0 0.0
    %434 = vmatprep.subr.mxu0 0.0
    %435 = vmatpush1.msra.mxu0 0.0
    %436 = vmatprep.subr.mxu0 0.0
    %437 = vmatpush1.msra.mxu0 0.0
    %438 = vmatprep.subr.mxu0 0.0
    %439 = vmatpush1.msra.mxu0 0.0
    %440 = vmatprep.mubr.f32.mxu0 0.0
    %441 = vmatmul.mubr.f32.gmra.mrb[0].mxu0 %v370
    %v442 = vpop.f32.mrb[0].mxu0
    %v443 = vadd.f32 0.0, %v442
    %v444 = vpop.f32.mrb[0].mxu0
    %445 = vdwg.mxu0
    %v447 = vsel %vm107, %v443, 0
    %449 = vmatprep.subr.mxu0 0.0
    %450 = vmatpush1.msra.mxu0 %v267
    %451 = vmatprep.subr.mxu0 0.0
    %452 = vmatpush1.msra.mxu0 %v268
    %453 = vmatprep.subr.mxu0 0.0
    %454 = vmatpush1.msra.mxu0 %v269
    %455 = vmatprep.subr.mxu0 0.0
    %456 = vmatpush1.msra.mxu0 %v270
    %457 = vmatprep.subr.mxu0 0.0
    %458 = vmatpush1.msra.mxu0 0.0
    %459 = vmatprep.subr.mxu0 0.0
    %460 = vmatpush1.msra.mxu0 0.0
    %461 = vmatprep.subr.mxu0 0.0
    %462 = vmatpush1.msra.mxu0 0.0
    %463 = vmatprep.subr.mxu0 0.0
    %464 = vmatpush1.msra.mxu0 0.0
    %465 = vmatprep.subr.mxu0 0.0
    %466 = vmatpush1.msra.mxu0 0.0
    %467 = vmatprep.subr.mxu0 0.0
    %468 = vmatpush1.msra.mxu0 0.0
    %469 = vmatprep.subr.mxu0 0.0
    %470 = vmatpush1.msra.mxu0 0.0
    %471 = vmatprep.subr.mxu0 0.0
    %472 = vmatpush1.msra.mxu0 0.0
    %473 = vmatprep.subr.mxu0 0.0
    %474 = vmatpush1.msra.mxu0 0.0
    %475 = vmatprep.subr.mxu0 0.0
    %476 = vmatpush1.msra.mxu0 0.0
    %477 = vmatprep.subr.mxu0 0.0
    %478 = vmatpush1.msra.mxu0 0.0
    %479 = vmatprep.subr.mxu0 0.0
    %480 = vmatpush1.msra.mxu0 0.0
    %481 = vmatprep.subr.mxu0 0.0
    %482 = vmatpush1.msra.mxu0 0.0
    %483 = vmatprep.subr.mxu0 0.0
    %484 = vmatpush1.msra.mxu0 0.0
    %485 = vmatprep.subr.mxu0 0.0
    %486 = vmatpush1.msra.mxu0 0.0
    %487 = vmatprep.subr.mxu0 0.0
    %488 = vmatpush1.msra.mxu0 0.0
    %489 = vmatprep.subr.mxu0 0.0
    %490 = vmatpush1.msra.mxu0 0.0
    %491 = vmatprep.subr.mxu0 0.0
    %492 = vmatpush1.msra.mxu0 0.0
    %493 = vmatprep.subr.mxu0 0.0
    %494 = vmatpush1.msra.mxu0 0.0
    %495 = vmatprep.subr.mxu0 0.0
    %496 = vmatpush1.msra.mxu0 0.0
    %497 = vmatprep.subr.mxu0 0.0
    %498 = vmatpush1.msra.mxu0 0.0
    %499 = vmatprep.subr.mxu0 0.0
    %500 = vmatpush1.msra.mxu0 0.0
    %501 = vmatprep.subr.mxu0 0.0
    %502 = vmatpush1.msra.mxu0 0.0
    %503 = vmatprep.subr.mxu0 0.0
    %504 = vmatpush1.msra.mxu0 0.0
    %505 = vmatprep.subr.mxu0 0.0
    %506 = vmatpush1.msra.mxu0 0.0
    %507 = vmatprep.subr.mxu0 0.0
    %508 = vmatpush1.msra.mxu0 0.0
    %509 = vmatprep.subr.mxu0 0.0
    %510 = vmatpush1.msra.mxu0 0.0
    %511 = vmatprep.subr.mxu0 0.0
    %512 = vmatpush1.msra.mxu0 0.0
    %513 = vmatprep.mubr.f32.mxu0 0.0
    %514 = vmatmul.mubr.f32.gmra.mrb[0].mxu0 %v447
    %v515 = vpop.f32.mrb[0].mxu0
    %v516 = vadd.f32 0.0, %v515
    %v517 = vpop.f32.mrb[0].mxu0
    %518 = vdwg.mxu0
    %v519 = vadd.f32 %v259, %v516
    %v520 = vmax.f32 %v519, 0.0
    %v522 = vsel %vm107, %v520, 0
    %524 = vmatprep.subr.mxu0 0.0
    %525 = vmatpush1.msra.mxu0 %v271
    %526 = vmatprep.subr.mxu0 0.0
    %527 = vmatpush1.msra.mxu0 %v272
    %528 = vmatprep.subr.mxu0 0.0
    %529 = vmatpush1.msra.mxu0 %v273
    %530 = vmatprep.subr.mxu0 0.0
    %531 = vmatpush1.msra.mxu0 %v274
    %532 = vmatprep.subr.mxu0 0.0
    %533 = vmatpush1.msra.mxu0 0.0
    %534 = vmatprep.subr.mxu0 0.0
    %535 = vmatpush1.msra.mxu0 0.0
    %536 = vmatprep.subr.mxu0 0.0
    %537 = vmatpush1.msra.mxu0 0.0
    %538 = vmatprep.subr.mxu0 0.0
    %539 = vmatpush1.msra.mxu0 0.0
    %540 = vmatprep.subr.mxu0 0.0
    %541 = vmatpush1.msra.mxu0 0.0
    %542 = vmatprep.subr.mxu0 0.0
    %543 = vmatpush1.msra.mxu0 0.0
    %544 = vmatprep.subr.mxu0 0.0
    %545 = vmatpush1.msra.mxu0 0.0
    %546 = vmatprep.subr.mxu0 0.0
    %547 = vmatpush1.msra.mxu0 0.0
    %548 = vmatprep.subr.mxu0 0.0
    %549 = vmatpush1.msra.mxu0 0.0
    %550 = vmatprep.subr.mxu0 0.0
    %551 = vmatpush1.msra.mxu0 0.0
    %552 = vmatprep.subr.mxu0 0.0
    %553 = vmatpush1.msra.mxu0 0.0
    %554 = vmatprep.subr.mxu0 0.0
    %555 = vmatpush1.msra.mxu0 0.0
    %556 = vmatprep.subr.mxu0 0.0
    %557 = vmatpush1.msra.mxu0 0.0
    %558 = vmatprep.subr.mxu0 0.0
    %559 = vmatpush1.msra.mxu0 0.0
    %560 = vmatprep.subr.mxu0 0.0
    %561 = vmatpush1.msra.mxu0 0.0
    %562 = vmatprep.subr.mxu0 0.0
    %563 = vmatpush1.msra.mxu0 0.0
    %564 = vmatprep.subr.mxu0 0.0
    %565 = vmatpush1.msra.mxu0 0.0
    %566 = vmatprep.subr.mxu0 0.0
    %567 = vmatpush1.msra.mxu0 0.0
    %568 = vmatprep.subr.mxu0 0.0
    %569 = vmatpush1.msra.mxu0 0.0
    %570 = vmatprep.subr.mxu0 0.0
    %571 = vmatpush1.msra.mxu0 0.0
    %572 = vmatprep.subr.mxu0 0.0
    %573 = vmatpush1.msra.mxu0 0.0
    %574 = vmatprep.subr.mxu0 0.0
    %575 = vmatpush1.msra.mxu0 0.0
    %576 = vmatprep.subr.mxu0 0.0
    %577 = vmatpush1.msra.mxu0 0.0
    %578 = vmatprep.subr.mxu0 0.0
    %579 = vmatpush1.msra.mxu0 0.0
    %580 = vmatprep.subr.mxu0 0.0
    %581 = vmatpush1.msra.mxu0 0.0
    %582 = vmatprep.subr.mxu0 0.0
    %583 = vmatpush1.msra.mxu0 0.0
    %584 = vmatprep.subr.mxu0 0.0
    %585 = vmatpush1.msra.mxu0 0.0
    %586 = vmatprep.subr.mxu0 0.0
    %587 = vmatpush1.msra.mxu0 0.0
    %588 = vmatprep.mubr.f32.mxu0 0.0
    %589 = vmatmul.mubr.f32.gmra.mrb[0].mxu0 %v522
    %v590 = vpop.f32.mrb[0].mxu0
    %v591 = vadd.f32 %v275, %v590
    %v592 = vpop.f32.mrb[0].mxu0
    %593 = vdwg.mxu0
    %594 = vmatprep.subr.mxu0 0.0
    %595 = vmatpush1.msra.mxu0 %v276
    %596 = vmatprep.subr.mxu0 0.0
    %597 = vmatpush1.msra.mxu0 %v277
    %598 = vmatprep.subr.mxu0 0.0
    %599 = vmatpush1.msra.mxu0 %v278
    %600 = vmatprep.subr.mxu0 0.0
    %601 = vmatpush1.msra.mxu0 %v279
    %602 = vmatprep.subr.mxu0 0.0
    %603 = vmatpush1.msra.mxu0 0.0
    %604 = vmatprep.subr.mxu0 0.0
    %605 = vmatpush1.msra.mxu0 0.0
    %606 = vmatprep.subr.mxu0 0.0
    %607 = vmatpush1.msra.mxu0 0.0
    %608 = vmatprep.subr.mxu0 0.0
    %609 = vmatpush1.msra.mxu0 0.0
    %610 = vmatprep.subr.mxu0 0.0
    %611 = vmatpush1.msra.mxu0 0.0
    %612 = vmatprep.subr.mxu0 0.0
    %613 = vmatpush1.msra.mxu0 0.0
    %614 = vmatprep.subr.mxu0 0.0
    %615 = vmatpush1.msra.mxu0 0.0
    %616 = vmatprep.subr.mxu0 0.0
    %617 = vmatpush1.msra.mxu0 0.0
    %618 = vmatprep.subr.mxu0 0.0
    %619 = vmatpush1.msra.mxu0 0.0
    %620 = vmatprep.subr.mxu0 0.0
    %621 = vmatpush1.msra.mxu0 0.0
    %622 = vmatprep.subr.mxu0 0.0
    %623 = vmatpush1.msra.mxu0 0.0
    %624 = vmatprep.subr.mxu0 0.0
    %625 = vmatpush1.msra.mxu0 0.0
    %626 = vmatprep.subr.mxu0 0.0
    %627 = vmatpush1.msra.mxu0 0.0
    %628 = vmatprep.subr.mxu0 0.0
    %629 = vmatpush1.msra.mxu0 0.0
    %630 = vmatprep.subr.mxu0 0.0
    %631 = vmatpush1.msra.mxu0 0.0
    %632 = vmatprep.subr.mxu0 0.0
    %633 = vmatpush1.msra.mxu0 0.0
    %634 = vmatprep.subr.mxu0 0.0
    %635 = vmatpush1.msra.mxu0 0.0
    %636 = vmatprep.subr.mxu0 0.0
    %637 = vmatpush1.msra.mxu0 0.0
    %638 = vmatprep.subr.mxu0 0.0
    %639 = vmatpush1.msra.mxu0 0.0
    %640 = vmatprep.subr.mxu0 0.0
    %641 = vmatpush1.msra.mxu0 0.0
    %642 = vmatprep.subr.mxu0 0.0
    %643 = vmatpush1.msra.mxu0 0.0
    %644 = vmatprep.subr.mxu0 0.0
    %645 = vmatpush1.msra.mxu0 0.0
    %646 = vmatprep.subr.mxu0 0.0
    %647 = vmatpush1.msra.mxu0 0.0
    %648 = vmatprep.subr.mxu0 0.0
    %649 = vmatpush1.msra.mxu0 0.0
    %650 = vmatprep.subr.mxu0 0.0
    %651 = vmatpush1.msra.mxu0 0.0
    %652 = vmatprep.subr.mxu0 0.0
    %653 = vmatpush1.msra.mxu0 0.0
    %654 = vmatprep.subr.mxu0 0.0
    %655 = vmatpush1.msra.mxu0 0.0
    %656 = vmatprep.subr.mxu0 0.0
    %657 = vmatpush1.msra.mxu0 0.0
    %658 = vmatprep.mubr.f32.mxu0 0.0
    %659 = vmatmul.mubr.f32.gmra.mrb[0].mxu0 %v283
    %v660 = vpop.f32.mrb[0].mxu0
    %v661 = vadd.f32 %v280, %v660
    %v662 = vpop.f32.mrb[0].mxu0
    %663 = vdwg.mxu0
    %v664 = vadd.f32 %v591, %v661
    %v665 = vxor.u32 %v664, 2147483648
    %v666 = vmul.f32 %v665, 1.442695
    %v667 = vpow.pop %v666
    %v668 = vadd.f32 %v667, 1.0
    %v669 = vrcp.pop %v668
    %v670 = vmul.f32 1.0, %v669
    %672 = vrot.lane.b32.xlu0 %v661, 64
    %v673 = vpop.permute.xlu0 %672
    %v675 = vmul.f32 %v670, %v673
    %677 = vrot.lane.b32.xlu0 %v675, 64
    %v678 = vpop.permute.xlu0 %677
    %v680 = vadd.f32 %v591, %v678
    %v681 = vtanh.pop %v680
    %v682 = vsub.f32 1.0, %v670
    %684 = vrot.lane.b32.xlu0 %v681, 96
    %v685 = vpop.permute.xlu0 %684
    %v687 = vmul.f32 %v682, %v685
    %v688 = vlaneseq
    %v689 = vshrl.u32 %v688, 7
    %v690 = vsub.s32 0, %v689
    %v691 = vrot.slane %v281, %v690
    %692 = vrot.lane.b32.xlu0 %v691, 32
    %v693 = vpop.permute.xlu0 %692
    %v695 = vmul.f32 %v670, %v693
    %v696 = vadd.f32 %v687, %v695
    %698 = vrot.lane.b32.xlu0 %v696, 96
    %v699 = vpop.permute.xlu0 %698
    %701 = vst.msk [vmem:[#allocation7] sm:$0x1] %vm65, %v699
    %702 = vst.msk [vmem:[#allocation9] sm:$0x1] %vm356, %v367
    %v703 = vsel %vm107, %v699, 0
    %705 = vmatprep.subr.mxu0 0.0
    %706 = vmatpush1.msra.mxu0 %v263
    %707 = vmatprep.subr.mxu0 0.0
    %708 = vmatpush1.msra.mxu0 %v264
    %709 = vmatprep.subr.mxu0 0.0
    %710 = vmatpush1.msra.mxu0 %v265
    %711 = vmatprep.subr.mxu0 0.0
    %712 = vmatpush1.msra.mxu0 %v266
    %713 = vmatprep.subr.mxu0 0.0
    %714 = vmatpush1.msra.mxu0 0.0
    %715 = vmatprep.subr.mxu0 0.0
    %716 = vmatpush1.msra.mxu0 0.0
    %717 = vmatprep.subr.mxu0 0.0
    %718 = vmatpush1.msra.mxu0 0.0
    %719 = vmatprep.subr.mxu0 0.0
    %720 = vmatpush1.msra.mxu0 0.0
    %721 = vmatprep.subr.mxu0 0.0
    %722 = vmatpush1.msra.mxu0 0.0
    %723 = vmatprep.subr.mxu0 0.0
    %724 = vmatpush1.msra.mxu0 0.0
    %725 = vmatprep.subr.mxu0 0.0
    %726 = vmatpush1.msra.mxu0 0.0
    %727 = vmatprep.subr.mxu0 0.0
    %728 = vmatpush1.msra.mxu0 0.0
    %729 = vmatprep.subr.mxu0 0.0
    %730 = vmatpush1.msra.mxu0 0.0
    %731 = vmatprep.subr.mxu0 0.0
    %732 = vmatpush1.msra.mxu0 0.0
    %733 = vmatprep.subr.mxu0 0.0
    %734 = vmatpush1.msra.mxu0 0.0
    %735 = vmatprep.subr.mxu0 0.0
    %736 = vmatpush1.msra.mxu0 0.0
    %737 = vmatprep.subr.mxu0 0.0
    %738 = vmatpush1.msra.mxu0 0.0
    %739 = vmatprep.subr.mxu0 0.0
    %740 = vmatpush1.msra.mxu0 0.0
    %741 = vmatprep.subr.mxu0 0.0
    %742 = vmatpush1.msra.mxu0 0.0
    %743 = vmatprep.subr.mxu0 0.0
    %744 = vmatpush1.msra.mxu0 0.0
    %745 = vmatprep.subr.mxu0 0.0
    %746 = vmatpush1.msra.mxu0 0.0
    %747 = vmatprep.subr.mxu0 0.0
    %748 = vmatpush1.msra.mxu0 0.0
    %749 = vmatprep.subr.mxu0 0.0
    %750 = vmatpush1.msra.mxu0 0.0
    %751 = vmatprep.subr.mxu0 0.0
    %752 = vmatpush1.msra.mxu0 0.0
    %753 = vmatprep.subr.mxu0 0.0
    %754 = vmatpush1.msra.mxu0 0.0
    %755 = vmatprep.subr.mxu0 0.0
    %756 = vmatpush1.msra.mxu0 0.0
    %757 = vmatprep.subr.mxu0 0.0
    %758 = vmatpush1.msra.mxu0 0.0
    %759 = vmatprep.subr.mxu0 0.0
    %760 = vmatpush1.msra.mxu0 0.0
    %761 = vmatprep.subr.mxu0 0.0
    %762 = vmatpush1.msra.mxu0 0.0
    %763 = vmatprep.subr.mxu0 0.0
    %764 = vmatpush1.msra.mxu0 0.0
    %765 = vmatprep.subr.mxu0 0.0
    %766 = vmatpush1.msra.mxu0 0.0
    %767 = vmatprep.subr.mxu0 0.0
    %768 = vmatpush1.msra.mxu0 0.0
    %769 = vmatprep.mubr.f32.mxu0 0.0
    %770 = vmatmul.mubr.f32.gmra.mrb[0].mxu0 %v703
    %v771 = vpop.f32.mrb[0].mxu0
    %v772 = vadd.f32 0.0, %v771
    %v773 = vpop.f32.mrb[0].mxu0
    %774 = vdwg.mxu0
    %v776 = vrot.slane %v772, 7
    %v778 = vadd.f32 %v178, %v776
    %vm779 = vcmask 33793
    %v780 = vsel %vm779, %v778, -inf
    %781 = vmax.xlane.f32.xlu0 %v780
    %v782 = vpop.xlane.xlu0 %781
    %v783 = vsub.f32 %v778, %v782
    %v784 = vmul.f32 %v783, 1.442695
    %v785 = vpow.pop %v784
    %v786 = vsel %vm779, %v785, 0.0
    %787 = vadd.xlane.f32.xlu0 %v786
    %v788 = vpop.xlane.xlu0 %787
    %v789 = vrcp.pop %v788
    %v790 = vmul.f32 %v785, %v789
    %v792 = vrot.slane %v790, 1
    %v793 = vsel %vm368, %v792, 0
    %795 = vmatprep.subr.mxu0 0.0
    %796 = vmatpush1.msra.mxu0 %v374
    %797 = vmatprep.subr.mxu0 0.0
    %798 = vmatpush1.msra.mxu0 0.0
    %799 = vmatprep.subr.mxu0 0.0
    %800 = vmatpush1.msra.mxu0 0.0
    %801 = vmatprep.subr.mxu0 0.0
    %802 = vmatpush1.msra.mxu0 0.0
    %803 = vmatprep.subr.mxu0 0.0
    %804 = vmatpush1.msra.mxu0 0.0
    %805 = vmatprep.subr.mxu0 0.0
    %806 = vmatpush1.msra.mxu0 0.0
    %807 = vmatprep.subr.mxu0 0.0
    %808 = vmatpush1.msra.mxu0 0.0
    %809 = vmatprep.subr.mxu0 0.0
    %810 = vmatpush1.msra.mxu0 0.0
    %811 = vmatprep.subr.mxu0 0.0
    %812 = vmatpush1.msra.mxu0 0.0
    %813 = vmatprep.subr.mxu0 0.0
    %814 = vmatpush1.msra.mxu0 0.0
    %815 = vmatprep.subr.mxu0 0.0
    %816 = vmatpush1.msra.mxu0 0.0
    %817 = vmatprep.subr.mxu0 0.0
    %818 = vmatpush1.msra.mxu0 0.0
    %819 = vmatprep.subr.mxu0 0.0
    %820 = vmatpush1.msra.mxu0 0.0
    %821 = vmatprep.subr.mxu0 0.0
    %822 = vmatpush1.msra.mxu0 0.0
    %823 = vmatprep.subr.mxu0 0.0
    %824 = vmatpush1.msra.mxu0 0.0
    %825 = vmatprep.subr.mxu0 0.0
    %826 = vmatpush1.msra.mxu0 0.0
    %827 = vmatprep.subr.mxu0 0.0
    %828 = vmatpush1.msra.mxu0 0.0
    %829 = vmatprep.subr.mxu0 0.0
    %830 = vmatpush1.msra.mxu0 0.0
    %831 = vmatprep.subr.mxu0 0.0
    %832 = vmatpush1.msra.mxu0 0.0
    %833 = vmatprep.subr.mxu0 0.0
    %834 = vmatpush1.msra.mxu0 0.0
    %835 = vmatprep.subr.mxu0 0.0
    %836 = vmatpush1.msra.mxu0 0.0
    %837 = vmatprep.subr.mxu0 0.0
    %838 = vmatpush1.msra.mxu0 0.0
    %839 = vmatprep.subr.mxu0 0.0
    %840 = vmatpush1.msra.mxu0 0.0
    %841 = vmatprep.subr.mxu0 0.0
    %842 = vmatpush1.msra.mxu0 0.0
    %843 = vmatprep.subr.mxu0 0.0
    %844 = vmatpush1.msra.mxu0 0.0
    %845 = vmatprep.subr.mxu0 0.0
    %846 = vmatpush1.msra.mxu0 0.0
    %847 = vmatprep.subr.mxu0 0.0
    %848 = vmatpush1.msra.mxu0 0.0
    %849 = vmatprep.subr.mxu0 0.0
    %850 = vmatpush1.msra.mxu0 0.0
    %851 = vmatprep.subr.mxu0 0.0
    %852 = vmatpush1.msra.mxu0 0.0
    %853 = vmatprep.subr.mxu0 0.0
    %854 = vmatpush1.msra.mxu0 0.0
    %855 = vmatprep.subr.mxu0 0.0
    %856 = vmatpush1.msra.mxu0 0.0
    %857 = vmatprep.subr.mxu0 0.0
    %858 = vmatpush1.msra.mxu0 0.0
    %859 = vmatprep.mubr.f32.mxu0 0.0
    %860 = vmatmul.mubr.f32.gmra.mrb[0].mxu0 %v793
    %v861 = vpop.f32.mrb[0].mxu0
    %v862 = vadd.f32 0.0, %v861
    %v863 = vpop.f32.mrb[0].mxu0
    %864 = vdwg.mxu0
    %v866 = vsel %vm107, %v862, 0
    %868 = vmatprep.subr.mxu0 0.0
    %869 = vmatpush1.msra.mxu0 %v267
    %870 = vmatprep.subr.mxu0 0.0
    %871 = vmatpush1.msra.mxu0 %v268
    %872 = vmatprep.subr.mxu0 0.0
    %873 = vmatpush1.msra.mxu0 %v269
    %874 = vmatprep.subr.mxu0 0.0
    %875 = vmatpush1.msra.mxu0 %v270
    %876 = vmatprep.subr.mxu0 0.0
    %877 = vmatpush1.msra.mxu0 0.0
    %878 = vmatprep.subr.mxu0 0.0
    %879 = vmatpush1.msra.mxu0 0.0
    %880 = vmatprep.subr.mxu0 0.0
    %881 = vmatpush1.msra.mxu0 0.0
    %882 = vmatprep.subr.mxu0 0.0
    %883 = vmatpush1.msra.mxu0 0.0
    %884 = vmatprep.subr.mxu0 0.0
    %885 = vmatpush1.msra.mxu0 0.0
    %886 = vmatprep.subr.mxu0 0.0
    %887 = vmatpush1.msra.mxu0 0.0
    %888 = vmatprep.subr.mxu0 0.0
    %889 = vmatpush1.msra.mxu0 0.0
    %890 = vmatprep.subr.mxu0 0.0
    %891 = vmatpush1.msra.mxu0 0.0
    %892 = vmatprep.subr.mxu0 0.0
    %893 = vmatpush1.msra.mxu0 0.0
    %894 = vmatprep.subr.mxu0 0.0
    %895 = vmatpush1.msra.mxu0 0.0
    %896 = vmatprep.subr.mxu0 0.0
    %897 = vmatpush1.msra.mxu0 0.0
    %898 = vmatprep.subr.mxu0 0.0
    %899 = vmatpush1.msra.mxu0 0.0
    %900 = vmatprep.subr.mxu0 0.0
    %901 = vmatpush1.msra.mxu0 0.0
    %902 = vmatprep.subr.mxu0 0.0
    %903 = vmatpush1.msra.mxu0 0.0
    %904 = vmatprep.subr.mxu0 0.0
    %905 = vmatpush1.msra.mxu0 0.0
    %906 = vmatprep.subr.mxu0 0.0
    %907 = vmatpush1.msra.mxu0 0.0
    %908 = vmatprep.subr.mxu0 0.0
    %909 = vmatpush1.msra.mxu0 0.0
    %910 = vmatprep.subr.mxu0 0.0
    %911 = vmatpush1.msra.mxu0 0.0
    %912 = vmatprep.subr.mxu0 0.0
    %913 = vmatpush1.msra.mxu0 0.0
    %914 = vmatprep.subr.mxu0 0.0
    %915 = vmatpush1.msra.mxu0 0.0
    %916 = vmatprep.subr.mxu0 0.0
    %917 = vmatpush1.msra.mxu0 0.0
    %918 = vmatprep.subr.mxu0 0.0
    %919 = vmatpush1.msra.mxu0 0.0
    %920 = vmatprep.subr.mxu0 0.0
    %921 = vmatpush1.msra.mxu0 0.0
    %922 = vmatprep.subr.mxu0 0.0
    %923 = vmatpush1.msra.mxu0 0.0
    %924 = vmatprep.subr.mxu0 0.0
    %925 = vmatpush1.msra.mxu0 0.0
    %926 = vmatprep.subr.mxu0 0.0
    %927 = vmatpush1.msra.mxu0 0.0
    %928 = vmatprep.subr.mxu0 0.0
    %929 = vmatpush1.msra.mxu0 0.0
    %930 = vmatprep.subr.mxu0 0.0
    %931 = vmatpush1.msra.mxu0 0.0
    %932 = vmatprep.mubr.f32.mxu0 0.0
    %933 = vmatmul.mubr.f32.gmra.mrb[0].mxu0 %v866
    %v934 = vpop.f32.mrb[0].mxu0
    %v935 = vadd.f32 0.0, %v934
    %v936 = vpop.f32.mrb[0].mxu0
    %937 = vdwg.mxu0
    %v939 = vrot.slane %v935, 7
    %v941 = vadd.f32 %v259, %v939
    %v942 = vmax.f32 %v941, 0.0
    %v944 = vrot.slane %v942, 1
    %v945 = vsel %vm107, %v944, 0
    %947 = vmatprep.subr.mxu0 0.0
    %948 = vmatpush1.msra.mxu0 %v271
    %949 = vmatprep.subr.mxu0 0.0
    %950 = vmatpush1.msra.mxu0 %v272
    %951 = vmatprep.subr.mxu0 0.0
    %952 = vmatpush1.msra.mxu0 %v273
    %953 = vmatprep.subr.mxu0 0.0
    %954 = vmatpush1.msra.mxu0 %v274
    %955 = vmatprep.subr.mxu0 0.0
    %956 = vmatpush1.msra.mxu0 0.0
    %957 = vmatprep.subr.mxu0 0.0
    %958 = vmatpush1.msra.mxu0 0.0
    %959 = vmatprep.subr.mxu0 0.0
    %960 = vmatpush1.msra.mxu0 0.0
    %961 = vmatprep.subr.mxu0 0.0
    %962 = vmatpush1.msra.mxu0 0.0
    %963 = vmatprep.subr.mxu0 0.0
    %964 = vmatpush1.msra.mxu0 0.0
    %965 = vmatprep.subr.mxu0 0.0
    %966 = vmatpush1.msra.mxu0 0.0
    %967 = vmatprep.subr.mxu0 0.0
    %968 = vmatpush1.msra.mxu0 0.0
    %969 = vmatprep.subr.mxu0 0.0
    %970 = vmatpush1.msra.mxu0 0.0
    %971 = vmatprep.subr.mxu0 0.0
    %972 = vmatpush1.msra.mxu0 0.0
    %973 = vmatprep.subr.mxu0 0.0
    %974 = vmatpush1.msra.mxu0 0.0
    %975 = vmatprep.subr.mxu0 0.0
    %976 = vmatpush1.msra.mxu0 0.0
    %977 = vmatprep.subr.mxu0 0.0
    %978 = vmatpush1.msra.mxu0 0.0
    %979 = vmatprep.subr.mxu0 0.0
    %980 = vmatpush1.msra.mxu0 0.0
    %981 = vmatprep.subr.mxu0 0.0
    %982 = vmatpush1.msra.mxu0 0.0
    %983 = vmatprep.subr.mxu0 0.0
    %984 = vmatpush1.msra.mxu0 0.0
    %985 = vmatprep.subr.mxu0 0.0
    %986 = vmatpush1.msra.mxu0 0.0
    %987 = vmatprep.subr.mxu0 0.0
    %988 = vmatpush1.msra.mxu0 0.0
    %989 = vmatprep.subr.mxu0 0.0
    %990 = vmatpush1.msra.mxu0 0.0
    %991 = vmatprep.subr.mxu0 0.0
    %992 = vmatpush1.msra.mxu0 0.0
    %993 = vmatprep.subr.mxu0 0.0
    %994 = vmatpush1.msra.mxu0 0.0
    %995 = vmatprep.subr.mxu0 0.0
    %996 = vmatpush1.msra.mxu0 0.0
    %997 = vmatprep.subr.mxu0 0.0
    %998 = vmatpush1.msra.mxu0 0.0
    %999 = vmatprep.subr.mxu0 0.0
    %1000 = vmatpush1.msra.mxu0 0.0
    %1001 = vmatprep.subr.mxu0 0.0
    %1002 = vmatpush1.msra.mxu0 0.0
    %1003 = vmatprep.subr.mxu0 0.0
    %1004 = vmatpush1.msra.mxu0 0.0
    %1005 = vmatprep.subr.mxu0 0.0
    %1006 = vmatpush1.msra.mxu0 0.0
    %1007 = vmatprep.subr.mxu0 0.0
    %1008 = vmatpush1.msra.mxu0 0.0
    %1009 = vmatprep.subr.mxu0 0.0
    %1010 = vmatpush1.msra.mxu0 0.0
    %1011 = vmatprep.mubr.f32.mxu0 0.0
    %1012 = vmatmul.mubr.f32.gmra.mrb[0].mxu0 %v945
    %v1013 = vpop.f32.mrb[0].mxu0
    %v1014 = vadd.f32 %v275, %v1013
    %v1015 = vpop.f32.mrb[0].mxu0
    %1016 = vdwg.mxu0
    %1017 = vmatprep.subr.mxu0 0.0
    %1018 = vmatpush1.msra.mxu0 %v276
    %1019 = vmatprep.subr.mxu0 0.0
    %1020 = vmatpush1.msra.mxu0 %v277
    %1021 = vmatprep.subr.mxu0 0.0
    %1022 = vmatpush1.msra.mxu0 %v278
    %1023 = vmatprep.subr.mxu0 0.0
    %1024 = vmatpush1.msra.mxu0 %v279
    %1025 = vmatprep.subr.mxu0 0.0
    %1026 = vmatpush1.msra.mxu0 0.0
    %1027 = vmatprep.subr.mxu0 0.0
    %1028 = vmatpush1.msra.mxu0 0.0
    %1029 = vmatprep.subr.mxu0 0.0
    %1030 = vmatpush1.msra.mxu0 0.0
    %1031 = vmatprep.subr.mxu0 0.0
    %1032 = vmatpush1.msra.mxu0 0.0
    %1033 = vmatprep.subr.mxu0 0.0
    %1034 = vmatpush1.msra.mxu0 0.0
    %1035 = vmatprep.subr.mxu0 0.0
    %1036 = vmatpush1.msra.mxu0 0.0
    %1037 = vmatprep.subr.mxu0 0.0
    %1038 = vmatpush1.msra.mxu0 0.0
    %1039 = vmatprep.subr.mxu0 0.0
    %1040 = vmatpush1.msra.mxu0 0.0
    %1041 = vmatprep.subr.mxu0 0.0
    %1042 = vmatpush1.msra.mxu0 0.0
    %1043 = vmatprep.subr.mxu0 0.0
    %1044 = vmatpush1.msra.mxu0 0.0
    %1045 = vmatprep.subr.mxu0 0.0
    %1046 = vmatpush1.msra.mxu0 0.0
    %1047 = vmatprep.subr.mxu0 0.0
    %1048 = vmatpush1.msra.mxu0 0.0
    %1049 = vmatprep.subr.mxu0 0.0
    %1050 = vmatpush1.msra.mxu0 0.0
    %1051 = vmatprep.subr.mxu0 0.0
    %1052 = vmatpush1.msra.mxu0 0.0
    %1053 = vmatprep.subr.mxu0 0.0
    %1054 = vmatpush1.msra.mxu0 0.0
    %1055 = vmatprep.subr.mxu0 0.0
    %1056 = vmatpush1.msra.mxu0 0.0
    %1057 = vmatprep.subr.mxu0 0.0
    %1058 = vmatpush1.msra.mxu0 0.0
    %1059 = vmatprep.subr.mxu0 0.0
    %1060 = vmatpush1.msra.mxu0 0.0
    %1061 = vmatprep.subr.mxu0 0.0
    %1062 = vmatpush1.msra.mxu0 0.0
    %1063 = vmatprep.subr.mxu0 0.0
    %1064 = vmatpush1.msra.mxu0 0.0
    %1065 = vmatprep.subr.mxu0 0.0
    %1066 = vmatpush1.msra.mxu0 0.0
    %1067 = vmatprep.subr.mxu0 0.0
    %1068 = vmatpush1.msra.mxu0 0.0
    %1069 = vmatprep.subr.mxu0 0.0
    %1070 = vmatpush1.msra.mxu0 0.0
    %1071 = vmatprep.subr.mxu0 0.0
    %1072 = vmatpush1.msra.mxu0 0.0
    %1073 = vmatprep.subr.mxu0 0.0
    %1074 = vmatpush1.msra.mxu0 0.0
    %1075 = vmatprep.subr.mxu0 0.0
    %1076 = vmatpush1.msra.mxu0 0.0
    %1077 = vmatprep.subr.mxu0 0.0
    %1078 = vmatpush1.msra.mxu0 0.0
    %1079 = vmatprep.subr.mxu0 0.0
    %1080 = vmatpush1.msra.mxu0 0.0
    %1081 = vmatprep.mubr.f32.mxu0 0.0
    %1082 = vmatmul.mubr.f32.gmra.mrb[0].mxu0 %v703
    %v1083 = vpop.f32.mrb[0].mxu0
    %v1084 = vadd.f32 %v280, %v1083
    %v1085 = vpop.f32.mrb[0].mxu0
    %1086 = vdwg.mxu0
    %v1087 = vadd.f32 %v1014, %v1084
    %v1088 = vxor.u32 %v1087, 2147483648
    %v1089 = vmul.f32 %v1088, 1.442695
    %v1090 = vpow.pop %v1089
    %v1091 = vadd.f32 %v1090, 1.0
    %v1092 = vrcp.pop %v1091
    %v1093 = vmul.f32 1.0, %v1092
    %1095 = vrot.lane.b32.xlu0 %v1084, 64
    %v1096 = vpop.permute.xlu0 %1095
    %v1098 = vmul.f32 %v1093, %v1096
    %1100 = vrot.lane.b32.xlu0 %v1098, 64
    %v1101 = vpop.permute.xlu0 %1100
    %v1103 = vadd.f32 %v1014, %v1101
    %v1104 = vtanh.pop %v1103
    %v1105 = vsub.f32 1.0, %v1093
    %1107 = vrot.lane.b32.xlu0 %v1104, 96
    %v1108 = vpop.permute.xlu0 %1107
    %v1110 = vmul.f32 %v1105, %v1108
    %v1111 = vmul.f32 %v1093, %v696
    %v1112 = vadd.f32 %v1110, %v1111
    %1114 = vrot.lane.b32.xlu0 %v1112, 96
    %v1115 = vpop.permute.xlu0 %1114
    %1117 = vst.msk [vmem:[#allocation7 + $0x1] sm:$0x1] %vm65, %v1115
    %1118 = vst.msk [vmem:[#allocation9] sm:$0x2] %vm779, %v790
    %v1119 = vsel %vm107, %v1115, 0
    %1121 = vmatprep.subr.mxu0 0.0
    %1122 = vmatpush1.msra.mxu0 %v263
    %1123 = vmatprep.subr.mxu0 0.0
    %1124 = vmatpush1.msra.mxu0 %v264
    %1125 = vmatprep.subr.mxu0 0.0
    %1126 = vmatpush1.msra.mxu0 %v265
    %1127 = vmatprep.subr.mxu0 0.0
    %1128 = vmatpush1.msra.mxu0 %v266
    %1129 = vmatprep.subr.mxu0 0.0
    %1130 = vmatpush1.msra.mxu0 0.0
    %1131 = vmatprep.subr.mxu0 0.0
    %1132 = vmatpush1.msra.mxu0 0.0
    %1133 = vmatprep.subr.mxu0 0.0
    %1134 = vmatpush1.msra.mxu0 0.0
    %1135 = vmatprep.subr.mxu0 0.0
    %1136 = vmatpush1.msra.mxu0 0.0
    %1137 = vmatprep.subr.mxu0 0.0
    %1138 = vmatpush1.msra.mxu0 0.0
    %1139 = vmatprep.subr.mxu0 0.0
    %1140 = vmatpush1.msra.mxu0 0.0
    %1141 = vmatprep.subr.mxu0 0.0
    %1142 = vmatpush1.msra.mxu0 0.0
    %1143 = vmatprep.subr.mxu0 0.0
    %1144 = vmatpush1.msra.mxu0 0.0
    %1145 = vmatprep.subr.mxu0 0.0
    %1146 = vmatpush1.msra.mxu0 0.0
    %1147 = vmatprep.subr.mxu0 0.0
    %1148 = vmatpush1.msra.mxu0 0.0
    %1149 = vmatprep.subr.mxu0 0.0
    %1150 = vmatpush1.msra.mxu0 0.0
    %1151 = vmatprep.subr.mxu0 0.0
    %1152 = vmatpush1.msra.mxu0 0.0
    %1153 = vmatprep.subr.mxu0 0.0
    %1154 = vmatpush1.msra.mxu0 0.0
    %1155 = vmatprep.subr.mxu0 0.0
    %1156 = vmatpush1.msra.mxu0 0.0
    %1157 = vmatprep.subr.mxu0 0.0
    %1158 = vmatpush1.msra.mxu0 0.0
    %1159 = vmatprep.subr.mxu0 0.0
    %1160 = vmatpush1.msra.mxu0 0.0
    %1161 = vmatprep.subr.mxu0 0.0
    %1162 = vmatpush1.msra.mxu0 0.0
    %1163 = vmatprep.subr.mxu0 0.0
    %1164 = vmatpush1.msra.mxu0 0.0
    %1165 = vmatprep.subr.mxu0 0.0
    %1166 = vmatpush1.msra.mxu0 0.0
    %1167 = vmatprep.subr.mxu0 0.0
    %1168 = vmatpush1.msra.mxu0 0.0
    %1169 = vmatprep.subr.mxu0 0.0
    %1170 = vmatpush1.msra.mxu0 0.0
    %1171 = vmatprep.subr.mxu0 0.0
    %1172 = vmatpush1.msra.mxu0 0.0
    %1173 = vmatprep.subr.mxu0 0.0
    %1174 = vmatpush1.msra.mxu0 0.0
    %1175 = vmatprep.subr.mxu0 0.0
    %1176 = vmatpush1.msra.mxu0 0.0
    %1177 = vmatprep.subr.mxu0 0.0
    %1178 = vmatpush1.msra.mxu0 0.0
    %1179 = vmatprep.subr.mxu0 0.0
    %1180 = vmatpush1.msra.mxu0 0.0
    %1181 = vmatprep.subr.mxu0 0.0
    %1182 = vmatpush1.msra.mxu0 0.0
    %1183 = vmatprep.subr.mxu0 0.0
    %1184 = vmatpush1.msra.mxu0 0.0
    %1185 = vmatprep.mubr.f32.mxu0 0.0
    %1186 = vmatmul.mubr.f32.gmra.mrb[0].mxu0 %v1119
    %v1187 = vpop.f32.mrb[0].mxu0
    %v1188 = vadd.f32 0.0, %v1187
    %v1189 = vpop.f32.mrb[0].mxu0
    %1190 = vdwg.mxu0
    %v1192 = vrot.slane %v1188, 6
    %v1194 = vadd.f32 %v178, %v1192
    %vm1195 = vcmask 34818
    %v1196 = vsel %vm1195, %v1194, -inf
    %1197 = vmax.xlane.f32.xlu0 %v1196
    %v1198 = vpop.xlane.xlu0 %1197
    %v1199 = vsub.f32 %v1194, %v1198
    %v1200 = vmul.f32 %v1199, 1.442695
    %v1201 = vpow.pop %v1200
    %v1202 = vsel %vm1195, %v1201, 0.0
    %1203 = vadd.xlane.f32.xlu0 %v1202
    %v1204 = vpop.xlane.xlu0 %1203
    %v1205 = vrcp.pop %v1204
    %v1206 = vmul.f32 %v1201, %v1205
    %v1208 = vrot.slane %v1206, 2
    %v1209 = vsel %vm368, %v1208, 0
    %1211 = vmatprep.subr.mxu0 0.0
    %1212 = vmatpush1.msra.mxu0 %v374
    %1213 = vmatprep.subr.mxu0 0.0
    %1214 = vmatpush1.msra.mxu0 0.0
    %1215 = vmatprep.subr.mxu0 0.0
    %1216 = vmatpush1.msra.mxu0 0.0
    %1217 = vmatprep.subr.mxu0 0.0
    %1218 = vmatpush1.msra.mxu0 0.0
    %1219 = vmatprep.subr.mxu0 0.0
    %1220 = vmatpush1.msra.mxu0 0.0
    %1221 = vmatprep.subr.mxu0 0.0
    %1222 = vmatpush1.msra.mxu0 0.0
    %1223 = vmatprep.subr.mxu0 0.0
    %1224 = vmatpush1.msra.mxu0 0.0
    %1225 = vmatprep.subr.mxu0 0.0
    %1226 = vmatpush1.msra.mxu0 0.0
    %1227 = vmatprep.subr.mxu0 0.0
    %1228 = vmatpush1.msra.mxu0 0.0
    %1229 = vmatprep.subr.mxu0 0.0
    %1230 = vmatpush1.msra.mxu0 0.0
    %1231 = vmatprep.subr.mxu0 0.0
    %1232 = vmatpush1.msra.mxu0 0.0
    %1233 = vmatprep.subr.mxu0 0.0
    %1234 = vmatpush1.msra.mxu0 0.0
    %1235 = vmatprep.subr.mxu0 0.0
    %1236 = vmatpush1.msra.mxu0 0.0
    %1237 = vmatprep.subr.mxu0 0.0
    %1238 = vmatpush1.msra.mxu0 0.0
    %1239 = vmatprep.subr.mxu0 0.0
    %1240 = vmatpush1.msra.mxu0 0.0
    %1241 = vmatprep.subr.mxu0 0.0
    %1242 = vmatpush1.msra.mxu0 0.0
    %1243 = vmatprep.subr.mxu0 0.0
    %1244 = vmatpush1.msra.mxu0 0.0
    %1245 = vmatprep.subr.mxu0 0.0
    %1246 = vmatpush1.msra.mxu0 0.0
    %1247 = vmatprep.subr.mxu0 0.0
    %1248 = vmatpush1.msra.mxu0 0.0
    %1249 = vmatprep.subr.mxu0 0.0
    %1250 = vmatpush1.msra.mxu0 0.0
    %1251 = vmatprep.subr.mxu0 0.0
    %1252 = vmatpush1.msra.mxu0 0.0
    %1253 = vmatprep.subr.mxu0 0.0
    %1254 = vmatpush1.msra.mxu0 0.0
    %1255 = vmatprep.subr.mxu0 0.0
    %1256 = vmatpush1.msra.mxu0 0.0
    %1257 = vmatprep.subr.mxu0 0.0
    %1258 = vmatpush1.msra.mxu0 0.0
    %1259 = vmatprep.subr.mxu0 0.0
    %1260 = vmatpush1.msra.mxu0 0.0
    %1261 = vmatprep.subr.mxu0 0.0
    %1262 = vmatpush1.msra.mxu0 0.0
    %1263 = vmatprep.subr.mxu0 0.0
    %1264 = vmatpush1.msra.mxu0 0.0
    %1265 = vmatprep.subr.mxu0 0.0
    %1266 = vmatpush1.msra.mxu0 0.0
    %1267 = vmatprep.subr.mxu0 0.0
    %1268 = vmatpush1.msra.mxu0 0.0
    %1269 = vmatprep.subr.mxu0 0.0
    %1270 = vmatpush1.msra.mxu0 0.0
    %1271 = vmatprep.subr.mxu0 0.0
    %1272 = vmatpush1.msra.mxu0 0.0
    %1273 = vmatprep.subr.mxu0 0.0
    %1274 = vmatpush1.msra.mxu0 0.0
    %1275 = vmatprep.mubr.f32.mxu0 0.0
    %1276 = vmatmul.mubr.f32.gmra.mrb[0].mxu0 %v1209
    %v1277 = vpop.f32.mrb[0].mxu0
    %v1278 = vadd.f32 0.0, %v1277
    %v1279 = vpop.f32.mrb[0].mxu0
    %1280 = vdwg.mxu0
    %v1282 = vsel %vm107, %v1278, 0
    %1284 = vmatprep.subr.mxu0 0.0
    %1285 = vmatpush1.msra.mxu0 %v267
    %1286 = vmatprep.subr.mxu0 0.0
    %1287 = vmatpush1.msra.mxu0 %v268
    %1288 = vmatprep.subr.mxu0 0.0
    %1289 = vmatpush1.msra.mxu0 %v269
    %1290 = vmatprep.subr.mxu0 0.0
    %1291 = vmatpush1.msra.mxu0 %v270
    %1292 = vmatprep.subr.mxu0 0.0
    %1293 = vmatpush1.msra.mxu0 0.0
    %1294 = vmatprep.subr.mxu0 0.0
    %1295 = vmatpush1.msra.mxu0 0.0
    %1296 = vmatprep.subr.mxu0 0.0
    %1297 = vmatpush1.msra.mxu0 0.0
    %1298 = vmatprep.subr.mxu0 0.0
    %1299 = vmatpush1.msra.mxu0 0.0
    %1300 = vmatprep.subr.mxu0 0.0
    %1301 = vmatpush1.msra.mxu0 0.0
    %1302 = vmatprep.subr.mxu0 0.0
    %1303 = vmatpush1.msra.mxu0 0.0
    %1304 = vmatprep.subr.mxu0 0.0
    %1305 = vmatpush1.msra.mxu0 0.0
    %1306 = vmatprep.subr.mxu0 0.0
    %1307 = vmatpush1.msra.mxu0 0.0
    %1308 = vmatprep.subr.mxu0 0.0
    %1309 = vmatpush1.msra.mxu0 0.0
    %1310 = vmatprep.subr.mxu0 0.0
    %1311 = vmatpush1.msra.mxu0 0.0
    %1312 = vmatprep.subr.mxu0 0.0
    %1313 = vmatpush1.msra.mxu0 0.0
    %1314 = vmatprep.subr.mxu0 0.0
    %1315 = vmatpush1.msra.mxu0 0.0
    %1316 = vmatprep.subr.mxu0 0.0
    %1317 = vmatpush1.msra.mxu0 0.0
    %1318 = vmatprep.subr.mxu0 0.0
    %1319 = vmatpush1.msra.mxu0 0.0
    %1320 = vmatprep.subr.mxu0 0.0
    %1321 = vmatpush1.msra.mxu0 0.0
    %1322 = vmatprep.subr.mxu0 0.0
    %1323 = vmatpush1.msra.mxu0 0.0
    %1324 = vmatprep.subr.mxu0 0.0
    %1325 = vmatpush1.msra.mxu0 0.0
    %1326 = vmatprep.subr.mxu0 0.0
    %1327 = vmatpush1.msra.mxu0 0.0
    %1328 = vmatprep.subr.mxu0 0.0
    %1329 = vmatpush1.msra.mxu0 0.0
    %1330 = vmatprep.subr.mxu0 0.0
    %1331 = vmatpush1.msra.mxu0 0.0
    %1332 = vmatprep.subr.mxu0 0.0
    %1333 = vmatpush1.msra.mxu0 0.0
    %1334 = vmatprep.subr.mxu0 0.0
    %1335 = vmatpush1.msra.mxu0 0.0
    %1336 = vmatprep.subr.mxu0 0.0
    %1337 = vmatpush1.msra.mxu0 0.0
    %1338 = vmatprep.subr.mxu0 0.0
    %1339 = vmatpush1.msra.mxu0 0.0
    %1340 = vmatprep.subr.mxu0 0.0
    %1341 = vmatpush1.msra.mxu0 0.0
    %1342 = vmatprep.subr.mxu0 0.0
    %1343 = vmatpush1.msra.mxu0 0.0
    %1344 = vmatprep.subr.mxu0 0.0
    %1345 = vmatpush1.msra.mxu0 0.0
    %1346 = vmatprep.subr.mxu0 0.0
    %1347 = vmatpush1.msra.mxu0 0.0
    %1348 = vmatprep.mubr.f32.mxu0 0.0
    %1349 = vmatmul.mubr.f32.gmra.mrb[0].mxu0 %v1282
    %v1350 = vpop.f32.mrb[0].mxu0
    %v1351 = vadd.f32 0.0, %v1350
    %v1352 = vpop.f32.mrb[0].mxu0
    %1353 = vdwg.mxu0
    %v1355 = vrot.slane %v1351, 6
    %v1357 = vadd.f32 %v259, %v1355
    %v1358 = vmax.f32 %v1357, 0.0
    %v1360 = vrot.slane %v1358, 2
    %v1361 = vsel %vm107, %v1360, 0
    %1363 = vmatprep.subr.mxu0 0.0
    %1364 = vmatpush1.msra.mxu0 %v271
    %1365 = vmatprep.subr.mxu0 0.0
    %1366 = vmatpush1.msra.mxu0 %v272
    %1367 = vmatprep.subr.mxu0 0.0
    %1368 = vmatpush1.msra.mxu0 %v273
    %1369 = vmatprep.subr.mxu0 0.0
    %1370 = vmatpush1.msra.mxu0 %v274
    %1371 = vmatprep.subr.mxu0 0.0
    %1372 = vmatpush1.msra.mxu0 0.0
    %1373 = vmatprep.subr.mxu0 0.0
    %1374 = vmatpush1.msra.mxu0 0.0
    %1375 = vmatprep.subr.mxu0 0.0
    %1376 = vmatpush1.msra.mxu0 0.0
    %1377 = vmatprep.subr.mxu0 0.0
    %1378 = vmatpush1.msra.mxu0 0.0
    %1379 = vmatprep.subr.mxu0 0.0
    %1380 = vmatpush1.msra.mxu0 0.0
    %1381 = vmatprep.subr.mxu0 0.0
    %1382 = vmatpush1.msra.mxu0 0.0
    %1383 = vmatprep.subr.mxu0 0.0
    %1384 = vmatpush1.msra.mxu0 0.0
    %1385 = vmatprep.subr.mxu0 0.0
    %1386 = vmatpush1.msra.mxu0 0.0
    %1387 = vmatprep.subr.mxu0 0.0
    %1388 = vmatpush1.msra.mxu0 0.0
    %1389 = vmatprep.subr.mxu0 0.0
    %1390 = vmatpush1.msra.mxu0 0.0
    %1391 = vmatprep.subr.mxu0 0.0
    %1392 = vmatpush1.msra.mxu0 0.0
    %1393 = vmatprep.subr.mxu0 0.0
    %1394 = vmatpush1.msra.mxu0 0.0
    %1395 = vmatprep.subr.mxu0 0.0
    %1396 = vmatpush1.msra.mxu0 0.0
    %1397 = vmatprep.subr.mxu0 0.0
    %1398 = vmatpush1.msra.mxu0 0.0
    %1399 = vmatprep.subr.mxu0 0.0
    %1400 = vmatpush1.msra.mxu0 0.0
    %1401 = vmatprep.subr.mxu0 0.0
    %1402 = vmatpush1.msra.mxu0 0.0
    %1403 = vmatprep.subr.mxu0 0.0
    %1404 = vmatpush1.msra.mxu0 0.0
    %1405 = vmatprep.subr.mxu0 0.0
    %1406 = vmatpush1.msra.mxu0 0.0
    %1407 = vmatprep.subr.mxu0 0.0
    %1408 = vmatpush1.msra.mxu0 0.0
    %1409 = vmatprep.subr.mxu0 0.0
    %1410 = vmatpush1.msra.mxu0 0.0
    %1411 = vmatprep.subr.mxu0 0.0
    %1412 = vmatpush1.msra.mxu0 0.0
    %1413 = vmatprep.subr.mxu0 0.0
    %1414 = vmatpush1.msra.mxu0 0.0
    %1415 = vmatprep.subr.mxu0 0.0
    %1416 = vmatpush1.msra.mxu0 0.0
    %1417 = vmatprep.subr.mxu0 0.0
    %1418 = vmatpush1.msra.mxu0 0.0
    %1419 = vmatprep.subr.mxu0 0.0
    %1420 = vmatpush1.msra.mxu0 0.0
    %1421 = vmatprep.subr.mxu0 0.0
    %1422 = vmatpush1.msra.mxu0 0.0
    %1423 = vmatprep.subr.mxu0 0.0
    %1424 = vmatpush1.msra.mxu0 0.0
    %1425 = vmatprep.subr.mxu0 0.0
    %1426 = vmatpush1.msra.mxu0 0.0
    %1427 = vmatprep.mubr.f32.mxu0 0.0
    %1428 = vmatmul.mubr.f32.gmra.mrb[0].mxu0 %v1361
    %v1429 = vpop.f32.mrb[0].mxu0
    %v1430 = vadd.f32 %v275, %v1429
    %v1431 = vpop.f32.mrb[0].mxu0
    %1432 = vdwg.mxu0
    %1433 = vmatprep.subr.mxu0 0.0
    %1434 = vmatpush1.msra.mxu0 %v276
    %1435 = vmatprep.subr.mxu0 0.0
    %1436 = vmatpush1.msra.mxu0 %v277
    %1437 = vmatprep.subr.mxu0 0.0
    %1438 = vmatpush1.msra.mxu0 %v278
    %1439 = vmatprep.subr.mxu0 0.0
    %1440 = vmatpush1.msra.mxu0 %v279
    %1441 = vmatprep.subr.mxu0 0.0
    %1442 = vmatpush1.msra.mxu0 0.0
    %1443 = vmatprep.subr.mxu0 0.0
    %1444 = vmatpush1.msra.mxu0 0.0
    %1445 = vmatprep.subr.mxu0 0.0
    %1446 = vmatpush1.msra.mxu0 0.0
    %1447 = vmatprep.subr.mxu0 0.0
    %1448 = vmatpush1.msra.mxu0 0.0
    %1449 = vmatprep.subr.mxu0 0.0
    %1450 = vmatpush1.msra.mxu0 0.0
    %1451 = vmatprep.subr.mxu0 0.0
    %1452 = vmatpush1.msra.mxu0 0.0
    %1453 = vmatprep.subr.mxu0 0.0
    %1454 = vmatpush1.msra.mxu0 0.0
    %1455 = vmatprep.subr.mxu0 0.0
    %1456 = vmatpush1.msra.mxu0 0.0
    %1457 = vmatprep.subr.mxu0 0.0
    %1458 = vmatpush1.msra.mxu0 0.0
    %1459 = vmatprep.subr.mxu0 0.0
    %1460 = vmatpush1.msra.mxu0 0.0
    %1461 = vmatprep.subr.mxu0 0.0
    %1462 = vmatpush1.msra.mxu0 0.0
    %1463 = vmatprep.subr.mxu0 0.0
    %1464 = vmatpush1.msra.mxu0 0.0
    %1465 = vmatprep.subr.mxu0 0.0
    %1466 = vmatpush1.msra.mxu0 0.0
    %1467 = vmatprep.subr.mxu0 0.0
    %1468 = vmatpush1.msra.mxu0 0.0
    %1469 = vmatprep.subr.mxu0 0.0
    %1470 = vmatpush1.msra.mxu0 0.0
    %1471 = vmatprep.subr.mxu0 0.0
    %1472 = vmatpush1.msra.mxu0 0.0
    %1473 = vmatprep.subr.mxu0 0.0
    %1474 = vmatpush1.msra.mxu0 0.0
    %1475 = vmatprep.subr.mxu0 0.0
    %1476 = vmatpush1.msra.mxu0 0.0
    %1477 = vmatprep.subr.mxu0 0.0
    %1478 = vmatpush1.msra.mxu0 0.0
    %1479 = vmatprep.subr.mxu0 0.0
    %1480 = vmatpush1.msra.mxu0 0.0
    %1481 = vmatprep.subr.mxu0 0.0
    %1482 = vmatpush1.msra.mxu0 0.0
    %1483 = vmatprep.subr.mxu0 0.0
    %1484 = vmatpush1.msra.mxu0 0.0
    %1485 = vmatprep.subr.mxu0 0.0
    %1486 = vmatpush1.msra.mxu0 0.0
    %1487 = vmatprep.subr.mxu0 0.0
    %1488 = vmatpush1.msra.mxu0 0.0
    %1489 = vmatprep.subr.mxu0 0.0
    %1490 = vmatpush1.msra.mxu0 0.0
    %1491 = vmatprep.subr.mxu0 0.0
    %1492 = vmatpush1.msra.mxu0 0.0
    %1493 = vmatprep.subr.mxu0 0.0
    %1494 = vmatpush1.msra.mxu0 0.0
    %1495 = vmatprep.subr.mxu0 0.0
    %1496 = vmatpush1.msra.mxu0 0.0
    %1497 = vmatprep.mubr.f32.mxu0 0.0
    %1498 = vmatmul.mubr.f32.gmra.mrb[0].mxu0 %v1119
    %v1499 = vpop.f32.mrb[0].mxu0
    %v1500 = vadd.f32 %v280, %v1499
    %v1501 = vpop.f32.mrb[0].mxu0
    %1502 = vdwg.mxu0
    %v1503 = vadd.f32 %v1430, %v1500
    %v1504 = vxor.u32 %v1503, 2147483648
    %v1505 = vmul.f32 %v1504, 1.442695
    %v1506 = vpow.pop %v1505
    %v1507 = vadd.f32 %v1506, 1.0
    %v1508 = vrcp.pop %v1507
    %v1509 = vmul.f32 1.0, %v1508
    %1511 = vrot.lane.b32.xlu0 %v1500, 64
    %v1512 = vpop.permute.xlu0 %1511
    %v1514 = vmul.f32 %v1509, %v1512
    %1516 = vrot.lane.b32.xlu0 %v1514, 64
    %v1517 = vpop.permute.xlu0 %1516
    %v1519 = vadd.f32 %v1430, %v1517
    %v1520 = vtanh.pop %v1519
    %v1521 = vsub.f32 1.0, %v1509
    %1523 = vrot.lane.b32.xlu0 %v1520, 96
    %v1524 = vpop.permute.xlu0 %1523
    %v1526 = vmul.f32 %v1521, %v1524
    %v1527 = vmul.f32 %v1509, %v1112
    %v1528 = vadd.f32 %v1526, %v1527
    %1530 = vrot.lane.b32.xlu0 %v1528, 96
    %v1531 = vpop.permute.xlu0 %1530
    %1533 = vst.msk [vmem:[#allocation7 + $0x2] sm:$0x1] %vm65, %v1531
    %1534 = vst.msk [vmem:[#allocation9] sm:$0x4] %vm1195, %v1206
    %v1535 = vsel %vm107, %v1531, 0
    %1537 = vmatprep.subr.mxu0 0.0
    %1538 = vmatpush1.msra.mxu0 %v263
    %1539 = vmatprep.subr.mxu0 0.0
    %1540 = vmatpush1.msra.mxu0 %v264
    %1541 = vmatprep.subr.mxu0 0.0
    %1542 = vmatpush1.msra.mxu0 %v265
    %1543 = vmatprep.subr.mxu0 0.0
    %1544 = vmatpush1.msra.mxu0 %v266
    %1545 = vmatprep.subr.mxu0 0.0
    %1546 = vmatpush1.msra.mxu0 0.0
    %1547 = vmatprep.subr.mxu0 0.0
    %1548 = vmatpush1.msra.mxu0 0.0
    %1549 = vmatprep.subr.mxu0 0.0
    %1550 = vmatpush1.msra.mxu0 0.0
    %1551 = vmatprep.subr.mxu0 0.0
    %1552 = vmatpush1.msra.mxu0 0.0
    %1553 = vmatprep.subr.mxu0 0.0
    %1554 = vmatpush1.msra.mxu0 0.0
    %1555 = vmatprep.subr.mxu0 0.0
    %1556 = vmatpush1.msra.mxu0 0.0
    %1557 = vmatprep.subr.mxu0 0.0
    %1558 = vmatpush1.msra.mxu0 0.0
    %1559 = vmatprep.subr.mxu0 0.0
    %1560 = vmatpush1.msra.mxu0 0.0
    %1561 = vmatprep.subr.mxu0 0.0
    %1562 = vmatpush1.msra.mxu0 0.0
    %1563 = vmatprep.subr.mxu0 0.0
    %1564 = vmatpush1.msra.mxu0 0.0
    %1565 = vmatprep.subr.mxu0 0.0
    %1566 = vmatpush1.msra.mxu0 0.0
    %1567 = vmatprep.subr.mxu0 0.0
    %1568 = vmatpush1.msra.mxu0 0.0
    %1569 = vmatprep.subr.mxu0 0.0
    %1570 = vmatpush1.msra.mxu0 0.0
    %1571 = vmatprep.subr.mxu0 0.0
    %1572 = vmatpush1.msra.mxu0 0.0
    %1573 = vmatprep.subr.mxu0 0.0
    %1574 = vmatpush1.msra.mxu0 0.0
    %1575 = vmatprep.subr.mxu0 0.0
    %1576 = vmatpush1.msra.mxu0 0.0
    %1577 = vmatprep.subr.mxu0 0.0
    %1578 = vmatpush1.msra.mxu0 0.0
    %1579 = vmatprep.subr.mxu0 0.0
    %1580 = vmatpush1.msra.mxu0 0.0
    %1581 = vmatprep.subr.mxu0 0.0
    %1582 = vmatpush1.msra.mxu0 0.0
    %1583 = vmatprep.subr.mxu0 0.0
    %1584 = vmatpush1.msra.mxu0 0.0
    %1585 = vmatprep.subr.mxu0 0.0
    %1586 = vmatpush1.msra.mxu0 0.0
    %1587 = vmatprep.subr.mxu0 0.0
    %1588 = vmatpush1.msra.mxu0 0.0
    %1589 = vmatprep.subr.mxu0 0.0
    %1590 = vmatpush1.msra.mxu0 0.0
    %1591 = vmatprep.subr.mxu0 0.0
    %1592 = vmatpush1.msra.mxu0 0.0
    %1593 = vmatprep.subr.mxu0 0.0
    %1594 = vmatpush1.msra.mxu0 0.0
    %1595 = vmatprep.subr.mxu0 0.0
    %1596 = vmatpush1.msra.mxu0 0.0
    %1597 = vmatprep.subr.mxu0 0.0
    %1598 = vmatpush1.msra.mxu0 0.0
    %1599 = vmatprep.subr.mxu0 0.0
    %1600 = vmatpush1.msra.mxu0 0.0
    %1601 = vmatprep.mubr.f32.mxu0 0.0
    %1602 = vmatmul.mubr.f32.gmra.mrb[0].mxu0 %v1535
    %v1603 = vpop.f32.mrb[0].mxu0
    %v1604 = vadd.f32 0.0, %v1603
    %v1605 = vpop.f32.mrb[0].mxu0
    %1606 = vdwg.mxu0
    %v1608 = vrot.slane %v1604, 5
    %v1610 = vadd.f32 %v178, %v1608
    %vm1611 = vcmask 35843
    %v1612 = vsel %vm1611, %v1610, -inf
    %1613 = vmax.xlane.f32.xlu0 %v1612
    %v1614 = vpop.xlane.xlu0 %1613
    %v1615 = vsub.f32 %v1610, %v1614
    %v1616 = vmul.f32 %v1615, 1.442695
    %v1617 = vpow.pop %v1616
    %v1618 = vsel %vm1611, %v1617, 0.0
    %1619 = vadd.xlane.f32.xlu0 %v1618
    %v1620 = vpop.xlane.xlu0 %1619
    %v1621 = vrcp.pop %v1620
    %v1622 = vmul.f32 %v1617, %v1621
    %v1624 = vrot.slane %v1622, 3
    %v1625 = vsel %vm368, %v1624, 0
    %1627 = vmatprep.subr.mxu0 0.0
    %1628 = vmatpush1.msra.mxu0 %v374
    %1629 = vmatprep.subr.mxu0 0.0
    %1630 = vmatpush1.msra.mxu0 0.0
    %1631 = vmatprep.subr.mxu0 0.0
    %1632 = vmatpush1.msra.mxu0 0.0
    %1633 = vmatprep.subr.mxu0 0.0
    %1634 = vmatpush1.msra.mxu0 0.0
    %1635 = vmatprep.subr.mxu0 0.0
    %1636 = vmatpush1.msra.mxu0 0.0
    %1637 = vmatprep.subr.mxu0 0.0
    %1638 = vmatpush1.msra.mxu0 0.0
    %1639 = vmatprep.subr.mxu0 0.0
    %1640 = vmatpush1.msra.mxu0 0.0
    %1641 = vmatprep.subr.mxu0 0.0
    %1642 = vmatpush1.msra.mxu0 0.0
    %1643 = vmatprep.subr.mxu0 0.0
    %1644 = vmatpush1.msra.mxu0 0.0
    %1645 = vmatprep.subr.mxu0 0.0
    %1646 = vmatpush1.msra.mxu0 0.0
    %1647 = vmatprep.subr.mxu0 0.0
    %1648 = vmatpush1.msra.mxu0 0.0
    %1649 = vmatprep.subr.mxu0 0.0
    %1650 = vmatpush1.msra.mxu0 0.0
    %1651 = vmatprep.subr.mxu0 0.0
    %1652 = vmatpush1.msra.mxu0 0.0
    %1653 = vmatprep.subr.mxu0 0.0
    %1654 = vmatpush1.msra.mxu0 0.0
    %1655 = vmatprep.subr.mxu0 0.0
    %1656 = vmatpush1.msra.mxu0 0.0
    %1657 = vmatprep.subr.mxu0 0.0
    %1658 = vmatpush1.msra.mxu0 0.0
    %1659 = vmatprep.subr.mxu0 0.0
    %1660 = vmatpush1.msra.mxu0 0.0
    %1661 = vmatprep.subr.mxu0 0.0
    %1662 = vmatpush1.msra.mxu0 0.0
    %1663 = vmatprep.subr.mxu0 0.0
    %1664 = vmatpush1.msra.mxu0 0.0
    %1665 = vmatprep.subr.mxu0 0.0
    %1666 = vmatpush1.msra.mxu0 0.0
    %1667 = vmatprep.subr.mxu0 0.0
    %1668 = vmatpush1.msra.mxu0 0.0
    %1669 = vmatprep.subr.mxu0 0.0
    %1670 = vmatpush1.msra.mxu0 0.0
    %1671 = vmatprep.subr.mxu0 0.0
    %1672 = vmatpush1.msra.mxu0 0.0
    %1673 = vmatprep.subr.mxu0 0.0
    %1674 = vmatpush1.msra.mxu0 0.0
    %1675 = vmatprep.subr.mxu0 0.0
    %1676 = vmatpush1.msra.mxu0 0.0
    %1677 = vmatprep.subr.mxu0 0.0
    %1678 = vmatpush1.msra.mxu0 0.0
    %1679 = vmatprep.subr.mxu0 0.0
    %1680 = vmatpush1.msra.mxu0 0.0
    %1681 = vmatprep.subr.mxu0 0.0
    %1682 = vmatpush1.msra.mxu0 0.0
    %1683 = vmatprep.subr.mxu0 0.0
    %1684 = vmatpush1.msra.mxu0 0.0
    %1685 = vmatprep.subr.mxu0 0.0
    %1686 = vmatpush1.msra.mxu0 0.0
    %1687 = vmatprep.subr.mxu0 0.0
    %1688 = vmatpush1.msra.mxu0 0.0
    %1689 = vmatprep.subr.mxu0 0.0
    %1690 = vmatpush1.msra.mxu0 0.0
    %1691 = vmatprep.mubr.f32.mxu0 0.0
    %1692 = vmatmul.mubr.f32.gmra.mrb[0].mxu0 %v1625
    %v1693 = vpop.f32.mrb[0].mxu0
    %v1694 = vadd.f32 0.0, %v1693
    %v1695 = vpop.f32.mrb[0].mxu0
    %1696 = vdwg.mxu0
    %v1698 = vsel %vm107, %v1694, 0
    %1700 = vmatprep.subr.mxu0 0.0
    %1701 = vmatpush1.msra.mxu0 %v267
    %1702 = vmatprep.subr.mxu0 0.0
    %1703 = vmatpush1.msra.mxu0 %v268
    %1704 = vmatprep.subr.mxu0 0.0
    %1705 = vmatpush1.msra.mxu0 %v269
    %1706 = vmatprep.subr.mxu0 0.0
    %1707 = vmatpush1.msra.mxu0 %v270
    %1708 = vmatprep.subr.mxu0 0.0
    %1709 = vmatpush1.msra.mxu0 0.0
    %1710 = vmatprep.subr.mxu0 0.0
    %1711 = vmatpush1.msra.mxu0 0.0
    %1712 = vmatprep.subr.mxu0 0.0
    %1713 = vmatpush1.msra.mxu0 0.0
    %1714 = vmatprep.subr.mxu0 0.0
    %1715 = vmatpush1.msra.mxu0 0.0
    %1716 = vmatprep.subr.mxu0 0.0
    %1717 = vmatpush1.msra.mxu0 0.0
    %1718 = vmatprep.subr.mxu0 0.0
    %1719 = vmatpush1.msra.mxu0 0.0
    %1720 = vmatprep.subr.mxu0 0.0
    %1721 = vmatpush1.msra.mxu0 0.0
    %1722 = vmatprep.subr.mxu0 0.0
    %1723 = vmatpush1.msra.mxu0 0.0
    %1724 = vmatprep.subr.mxu0 0.0
    %1725 = vmatpush1.msra.mxu0 0.0
    %1726 = vmatprep.subr.mxu0 0.0
    %1727 = vmatpush1.msra.mxu0 0.0
    %1728 = vmatprep.subr.mxu0 0.0
    %1729 = vmatpush1.msra.mxu0 0.0
    %1730 = vmatprep.subr.mxu0 0.0
    %1731 = vmatpush1.msra.mxu0 0.0
    %1732 = vmatprep.subr.mxu0 0.0
    %1733 = vmatpush1.msra.mxu0 0.0
    %1734 = vmatprep.subr.mxu0 0.0
    %1735 = vmatpush1.msra.mxu0 0.0
    %1736 = vmatprep.subr.mxu0 0.0
    %1737 = vmatpush1.msra.mxu0 0.0
    %1738 = vmatprep.subr.mxu0 0.0
    %1739 = vmatpush1.msra.mxu0 0.0
    %1740 = vmatprep.subr.mxu0 0.0
    %1741 = vmatpush1.msra.mxu0 0.0
    %1742 = vmatprep.subr.mxu0 0.0
    %1743 = vmatpush1.msra.mxu0 0.0
    %1744 = vmatprep.subr.mxu0 0.0
    %1745 = vmatpush1.msra.mxu0 0.0
    %1746 = vmatprep.subr.mxu0 0.0
    %1747 = vmatpush1.msra.mxu0 0.0
    %1748 = vmatprep.subr.mxu0 0.0
    %1749 = vmatpush1.msra.mxu0 0.0
    %1750 = vmatprep.subr.mxu0 0.0
    %1751 = vmatpush1.msra.mxu0 0.0
    %1752 = vmatprep.subr.mxu0 0.0
    %1753 = vmatpush1.msra.mxu0 0.0
    %1754 = vmatprep.subr.mxu0 0.0
    %1755 = vmatpush1.msra.mxu0 0.0
    %1756 = vmatprep.subr.mxu0 0.0
    %1757 = vmatpush1.msra.mxu0 0.0
    %1758 = vmatprep.subr.mxu0 0.0
    %1759 = vmatpush1.msra.mxu0 0.0
    %1760 = vmatprep.subr.mxu0 0.0
    %1761 = vmatpush1.msra.mxu0 0.0
    %1762 = vmatprep.subr.mxu0 0.0
    %1763 = vmatpush1.msra.mxu0 0.0
    %1764 = vmatprep.mubr.f32.mxu0 0.0
    %1765 = vmatmul.mubr.f32.gmra.mrb[0].mxu0 %v1698
    %v1766 = vpop.f32.mrb[0].mxu0
    %v1767 = vadd.f32 0.0, %v1766
    %v1768 = vpop.f32.mrb[0].mxu0
    %1769 = vdwg.mxu0
    %v1771 = vrot.slane %v1767, 5
    %v1773 = vadd.f32 %v259, %v1771
    %v1774 = vmax.f32 %v1773, 0.0
    %v1776 = vrot.slane %v1774, 3
    %v1777 = vsel %vm107, %v1776, 0
    %1779 = vmatprep.subr.mxu0 0.0
    %1780 = vmatpush1.msra.mxu0 %v271
    %1781 = vmatprep.subr.mxu0 0.0
    %1782 = vmatpush1.msra.mxu0 %v272
    %1783 = vmatprep.subr.mxu0 0.0
    %1784 = vmatpush1.msra.mxu0 %v273
    %1785 = vmatprep.subr.mxu0 0.0
    %1786 = vmatpush1.msra.mxu0 %v274
    %1787 = vmatprep.subr.mxu0 0.0
    %1788 = vmatpush1.msra.mxu0 0.0
    %1789 = vmatprep.subr.mxu0 0.0
    %1790 = vmatpush1.msra.mxu0 0.0
    %1791 = vmatprep.subr.mxu0 0.0
    %1792 = vmatpush1.msra.mxu0 0.0
    %1793 = vmatprep.subr.mxu0 0.0
    %1794 = vmatpush1.msra.mxu0 0.0
    %1795 = vmatprep.subr.mxu0 0.0
    %1796 = vmatpush1.msra.mxu0 0.0
    %1797 = vmatprep.subr.mxu0 0.0
    %1798 = vmatpush1.msra.mxu0 0.0
    %1799 = vmatprep.subr.mxu0 0.0
    %1800 = vmatpush1.msra.mxu0 0.0
    %1801 = vmatprep.subr.mxu0 0.0
    %1802 = vmatpush1.msra.mxu0 0.0
    %1803 = vmatprep.subr.mxu0 0.0
    %1804 = vmatpush1.msra.mxu0 0.0
    %1805 = vmatprep.subr.mxu0 0.0
    %1806 = vmatpush1.msra.mxu0 0.0
    %1807 = vmatprep.subr.mxu0 0.0
    %1808 = vmatpush1.msra.mxu0 0.0
    %1809 = vmatprep.subr.mxu0 0.0
    %1810 = vmatpush1.msra.mxu0 0.0
    %1811 = vmatprep.subr.mxu0 0.0
    %1812 = vmatpush1.msra.mxu0 0.0
    %1813 = vmatprep.subr.mxu0 0.0
    %1814 = vmatpush1.msra.mxu0 0.0
    %1815 = vmatprep.subr.mxu0 0.0
    %1816 = vmatpush1.msra.mxu0 0.0
    %1817 = vmatprep.subr.mxu0 0.0
    %1818 = vmatpush1.msra.mxu0 0.0
    %1819 = vmatprep.subr.mxu0 0.0
    %1820 = vmatpush1.msra.mxu0 0.0
    %1821 = vmatprep.subr.mxu0 0.0
    %1822 = vmatpush1.msra.mxu0 0.0
    %1823 = vmatprep.subr.mxu0 0.0
    %1824 = vmatpush1.msra.mxu0 0.0
    %1825 = vmatprep.subr.mxu0 0.0
    %1826 = vmatpush1.msra.mxu0 0.0
    %1827 = vmatprep.subr.mxu0 0.0
    %1828 = vmatpush1.msra.mxu0 0.0
    %1829 = vmatprep.subr.mxu0 0.0
    %1830 = vmatpush1.msra.mxu0 0.0
    %1831 = vmatprep.subr.mxu0 0.0
    %1832 = vmatpush1.msra.mxu0 0.0
    %1833 = vmatprep.subr.mxu0 0.0
    %1834 = vmatpush1.msra.mxu0 0.0
    %1835 = vmatprep.subr.mxu0 0.0
    %1836 = vmatpush1.msra.mxu0 0.0
    %1837 = vmatprep.subr.mxu0 0.0
    %1838 = vmatpush1.msra.mxu0 0.0
    %1839 = vmatprep.subr.mxu0 0.0
    %1840 = vmatpush1.msra.mxu0 0.0
    %1841 = vmatprep.subr.mxu0 0.0
    %1842 = vmatpush1.msra.mxu0 0.0
    %1843 = vmatprep.mubr.f32.mxu0 0.0
    %1844 = vmatmul.mubr.f32.gmra.mrb[0].mxu0 %v1777
    %v1845 = vpop.f32.mrb[0].mxu0
    %v1846 = vadd.f32 %v275, %v1845
    %v1847 = vpop.f32.mrb[0].mxu0
    %1848 = vdwg.mxu0
    %1849 = vmatprep.subr.mxu0 0.0
    %1850 = vmatpush1.msra.mxu0 %v276
    %1851 = vmatprep.subr.mxu0 0.0
    %1852 = vmatpush1.msra.mxu0 %v277
    %1853 = vmatprep.subr.mxu0 0.0
    %1854 = vmatpush1.msra.mxu0 %v278
    %1855 = vmatprep.subr.mxu0 0.0
    %1856 = vmatpush1.msra.mxu0 %v279
    %1857 = vmatprep.subr.mxu0 0.0
    %1858 = vmatpush1.msra.mxu0 0.0
    %1859 = vmatprep.subr.mxu0 0.0
    %1860 = vmatpush1.msra.mxu0 0.0
    %1861 = vmatprep.subr.mxu0 0.0
    %1862 = vmatpush1.msra.mxu0 0.0
    %1863 = vmatprep.subr.mxu0 0.0
    %1864 = vmatpush1.msra.mxu0 0.0
    %1865 = vmatprep.subr.mxu0 0.0
    %1866 = vmatpush1.msra.mxu0 0.0
    %1867 = vmatprep.subr.mxu0 0.0
    %1868 = vmatpush1.msra.mxu0 0.0
    %1869 = vmatprep.subr.mxu0 0.0
    %1870 = vmatpush1.msra.mxu0 0.0
    %1871 = vmatprep.subr.mxu0 0.0
    %1872 = vmatpush1.msra.mxu0 0.0
    %1873 = vmatprep.subr.mxu0 0.0
    %1874 = vmatpush1.msra.mxu0 0.0
    %1875 = vmatprep.subr.mxu0 0.0
    %1876 = vmatpush1.msra.mxu0 0.0
    %1877 = vmatprep.subr.mxu0 0.0
    %1878 = vmatpush1.msra.mxu0 0.0
    %1879 = vmatprep.subr.mxu0 0.0
    %1880 = vmatpush1.msra.mxu0 0.0
    %1881 = vmatprep.subr.mxu0 0.0
    %1882 = vmatpush1.msra.mxu0 0.0
    %1883 = vmatprep.subr.mxu0 0.0
    %1884 = vmatpush1.msra.mxu0 0.0
    %1885 = vmatprep.subr.mxu0 0.0
    %1886 = vmatpush1.msra.mxu0 0.0
    %1887 = vmatprep.subr.mxu0 0.0
    %1888 = vmatpush1.msra.mxu0 0.0
    %1889 = vmatprep.subr.mxu0 0.0
    %1890 = vmatpush1.msra.mxu0 0.0
    %1891 = vmatprep.subr.mxu0 0.0
    %1892 = vmatpush1.msra.mxu0 0.0
    %1893 = vmatprep.subr.mxu0 0.0
    %1894 = vmatpush1.msra.mxu0 0.0
    %1895 = vmatprep.subr.mxu0 0.0
    %1896 = vmatpush1.msra.mxu0 0.0
    %1897 = vmatprep.subr.mxu0 0.0
    %1898 = vmatpush1.msra.mxu0 0.0
    %1899 = vmatprep.subr.mxu0 0.0
    %1900 = vmatpush1.msra.mxu0 0.0
    %1901 = vmatprep.subr.mxu0 0.0
    %1902 = vmatpush1.msra.mxu0 0.0
    %1903 = vmatprep.subr.mxu0 0.0
    %1904 = vmatpush1.msra.mxu0 0.0
    %1905 = vmatprep.subr.mxu0 0.0
    %1906 = vmatpush1.msra.mxu0 0.0
    %1907 = vmatprep.subr.mxu0 0.0
    %1908 = vmatpush1.msra.mxu0 0.0
    %1909 = vmatprep.subr.mxu0 0.0
    %1910 = vmatpush1.msra.mxu0 0.0
    %1911 = vmatprep.subr.mxu0 0.0
    %1912 = vmatpush1.msra.mxu0 0.0
    %1913 = vmatprep.mubr.f32.mxu0 0.0
    %1914 = vmatmul.mubr.f32.gmra.mrb[0].mxu0 %v1535
    %v1915 = vpop.f32.mrb[0].mxu0
    %v1916 = vadd.f32 %v280, %v1915
    %v1917 = vpop.f32.mrb[0].mxu0
    %1918 = vdwg.mxu0
    %v1919 = vadd.f32 %v1846, %v1916
    %v1920 = vxor.u32 %v1919, 2147483648
    %v1921 = vmul.f32 %v1920, 1.442695
    %v1922 = vpow.pop %v1921
    %v1923 = vadd.f32 %v1922, 1.0
    %v1924 = vrcp.pop %v1923
    %v1925 = vmul.f32 1.0, %v1924
    %1927 = vrot.lane.b32.xlu0 %v1916, 64
    %v1928 = vpop.permute.xlu0 %1927
    %v1930 = vmul.f32 %v1925, %v1928
    %1932 = vrot.lane.b32.xlu0 %v1930, 64
    %v1933 = vpop.permute.xlu0 %1932
    %v1935 = vadd.f32 %v1846, %v1933
    %v1936 = vtanh.pop %v1935
    %v1937 = vsub.f32 1.0, %v1925
    %1939 = vrot.lane.b32.xlu0 %v1936, 96
    %v1940 = vpop.permute.xlu0 %1939
    %v1942 = vmul.f32 %v1937, %v1940
    %v1943 = vmul.f32 %v1925, %v1528
    %v1944 = vadd.f32 %v1942, %v1943
    %1946 = vrot.lane.b32.xlu0 %v1944, 96
    %v1947 = vpop.permute.xlu0 %1946
    %1949 = vst.msk [vmem:[#allocation7 + $0x3] sm:$0x1] %vm65, %v1947
    %1950 = vst.msk [vmem:[#allocation9] sm:$0x8] %vm1611, %v1622
    %v1951 = vsel %vm107, %v1947, 0
    %1953 = vmatprep.subr.mxu0 0.0
    %1954 = vmatpush1.msra.mxu0 %v263
    %1955 = vmatprep.subr.mxu0 0.0
    %1956 = vmatpush1.msra.mxu0 %v264
    %1957 = vmatprep.subr.mxu0 0.0
    %1958 = vmatpush1.msra.mxu0 %v265
    %1959 = vmatprep.subr.mxu0 0.0
    %1960 = vmatpush1.msra.mxu0 %v266
    %1961 = vmatprep.subr.mxu0 0.0
    %1962 = vmatpush1.msra.mxu0 0.0
    %1963 = vmatprep.subr.mxu0 0.0
    %1964 = vmatpush1.msra.mxu0 0.0
    %1965 = vmatprep.subr.mxu0 0.0
    %1966 = vmatpush1.msra.mxu0 0.0
    %1967 = vmatprep.subr.mxu0 0.0
    %1968 = vmatpush1.msra.mxu0 0.0
    %1969 = vmatprep.subr.mxu0 0.0
    %1970 = vmatpush1.msra.mxu0 0.0
    %1971 = vmatprep.subr.mxu0 0.0
    %1972 = vmatpush1.msra.mxu0 0.0
    %1973 = vmatprep.subr.mxu0 0.0
    %1974 = vmatpush1.msra.mxu0 0.0
    %1975 = vmatprep.subr.mxu0 0.0
    %1976 = vmatpush1.msra.mxu0 0.0
    %1977 = vmatprep.subr.mxu0 0.0
    %1978 = vmatpush1.msra.mxu0 0.0
    %1979 = vmatprep.subr.mxu0 0.0
    %1980 = vmatpush1.msra.mxu0 0.0
    %1981 = vmatprep.subr.mxu0 0.0
    %1982 = vmatpush1.msra.mxu0 0.0
    %1983 = vmatprep.subr.mxu0 0.0
    %1984 = vmatpush1.msra.mxu0 0.0
    %1985 = vmatprep.subr.mxu0 0.0
    %1986 = vmatpush1.msra.mxu0 0.0
    %1987 = vmatprep.subr.mxu0 0.0
    %1988 = vmatpush1.msra.mxu0 0.0
    %1989 = vmatprep.subr.mxu0 0.0
    %1990 = vmatpush1.msra.mxu0 0.0
    %1991 = vmatprep.subr.mxu0 0.0
    %1992 = vmatpush1.msra.mxu0 0.0
    %1993 = vmatprep.subr.mxu0 0.0
    %1994 = vmatpush1.msra.mxu0 0.0
    %1995 = vmatprep.subr.mxu0 0.0
    %1996 = vmatpush1.msra.mxu0 0.0
    %1997 = vmatprep.subr.mxu0 0.0
    %1998 = vmatpush1.msra.mxu0 0.0
    %1999 = vmatprep.subr.mxu0 0.0
    %2000 = vmatpush1.msra.mxu0 0.0
    %2001 = vmatprep.subr.mxu0 0.0
    %2002 = vmatpush1.msra.mxu0 0.0
    %2003 = vmatprep.subr.mxu0 0.0
    %2004 = vmatpush1.msra.mxu0 0.0
    %2005 = vmatprep.subr.mxu0 0.0
    %2006 = vmatpush1.msra.mxu0 0.0
    %2007 = vmatprep.subr.mxu0 0.0
    %2008 = vmatpush1.msra.mxu0 0.0
    %2009 = vmatprep.subr.mxu0 0.0
    %2010 = vmatpush1.msra.mxu0 0.0
    %2011 = vmatprep.subr.mxu0 0.0
    %2012 = vmatpush1.msra.mxu0 0.0
    %2013 = vmatprep.subr.mxu0 0.0
    %2014 = vmatpush1.msra.mxu0 0.0
    %2015 = vmatprep.subr.mxu0 0.0
    %2016 = vmatpush1.msra.mxu0 0.0
    %2017 = vmatprep.mubr.f32.mxu0 0.0
    %2018 = vmatmul.mubr.f32.gmra.mrb[0].mxu0 %v1951
    %v2019 = vpop.f32.mrb[0].mxu0
    %v2020 = vadd.f32 0.0, %v2019
    %v2021 = vpop.f32.mrb[0].mxu0
    %2022 = vdwg.mxu0
    %v2024 = vrot.slane %v2020, 4
    %v2026 = vadd.f32 %v178, %v2024
    %vm2027 = vcmask 36868
    %v2028 = vsel %vm2027, %v2026, -inf
    %2029 = vmax.xlane.f32.xlu0 %v2028
    %v2030 = vpop.xlane.xlu0 %2029
    %v2031 = vsub.f32 %v2026, %v2030
    %v2032 = vmul.f32 %v2031, 1.442695
    %v2033 = vpow.pop %v2032
    %v2034 = vsel %vm2027, %v2033, 0.0
    %2035 = vadd.xlane.f32.xlu0 %v2034
    %v2036 = vpop.xlane.xlu0 %2035
    %v2037 = vrcp.pop %v2036
    %v2038 = vmul.f32 %v2033, %v2037
    %v2040 = vrot.slane %v2038, 4
    %v2041 = vsel %vm368, %v2040, 0
    %2043 = vmatprep.subr.mxu0 0.0
    %2044 = vmatpush1.msra.mxu0 %v374
    %2045 = vmatprep.subr.mxu0 0.0
    %2046 = vmatpush1.msra.mxu0 0.0
    %2047 = vmatprep.subr.mxu0 0.0
    %2048 = vmatpush1.msra.mxu0 0.0
    %2049 = vmatprep.subr.mxu0 0.0
    %2050 = vmatpush1.msra.mxu0 0.0
    %2051 = vmatprep.subr.mxu0 0.0
    %2052 = vmatpush1.msra.mxu0 0.0
    %2053 = vmatprep.subr.mxu0 0.0
    %2054 = vmatpush1.msra.mxu0 0.0
    %2055 = vmatprep.subr.mxu0 0.0
    %2056 = vmatpush1.msra.mxu0 0.0
    %2057 = vmatprep.subr.mxu0 0.0
    %2058 = vmatpush1.msra.mxu0 0.0
    %2059 = vmatprep.subr.mxu0 0.0
    %2060 = vmatpush1.msra.mxu0 0.0
    %2061 = vmatprep.subr.mxu0 0.0
    %2062 = vmatpush1.msra.mxu0 0.0
    %2063 = vmatprep.subr.mxu0 0.0
    %2064 = vmatpush1.msra.mxu0 0.0
    %2065 = vmatprep.subr.mxu0 0.0
    %2066 = vmatpush1.msra.mxu0 0.0
    %2067 = vmatprep.subr.mxu0 0.0
    %2068 = vmatpush1.msra.mxu0 0.0
    %2069 = vmatprep.subr.mxu0 0.0
    %2070 = vmatpush1.msra.mxu0 0.0
    %2071 = vmatprep.subr.mxu0 0.0
    %2072 = vmatpush1.msra.mxu0 0.0
    %2073 = vmatprep.subr.mxu0 0.0
    %2074 = vmatpush1.msra.mxu0 0.0
    %2075 = vmatprep.subr.mxu0 0.0
    %2076 = vmatpush1.msra.mxu0 0.0
    %2077 = vmatprep.subr.mxu0 0.0
    %2078 = vmatpush1.msra.mxu0 0.0
    %2079 = vmatprep.subr.mxu0 0.0
    %2080 = vmatpush1.msra.mxu0 0.0
    %2081 = vmatprep.subr.mxu0 0.0
    %2082 = vmatpush1.msra.mxu0 0.0
    %2083 = vmatprep.subr.mxu0 0.0
    %2084 = vmatpush1.msra.mxu0 0.0
    %2085 = vmatprep.subr.mxu0 0.0
    %2086 = vmatpush1.msra.mxu0 0.0
    %2087 = vmatprep.subr.mxu0 0.0
    %2088 = vmatpush1.msra.mxu0 0.0
    %2089 = vmatprep.subr.mxu0 0.0
    %2090 = vmatpush1.msra.mxu0 0.0
    %2091 = vmatprep.subr.mxu0 0.0
    %2092 = vmatpush1.msra.mxu0 0.0
    %2093 = vmatprep.subr.mxu0 0.0
    %2094 = vmatpush1.msra.mxu0 0.0
    %2095 = vmatprep.subr.mxu0 0.0
    %2096 = vmatpush1.msra.mxu0 0.0
    %2097 = vmatprep.subr.mxu0 0.0
    %2098 = vmatpush1.msra.mxu0 0.0
    %2099 = vmatprep.subr.mxu0 0.0
    %2100 = vmatpush1.msra.mxu0 0.0
    %2101 = vmatprep.subr.mxu0 0.0
    %2102 = vmatpush1.msra.mxu0 0.0
    %2103 = vmatprep.subr.mxu0 0.0
    %2104 = vmatpush1.msra.mxu0 0.0
    %2105 = vmatprep.subr.mxu0 0.0
    %2106 = vmatpush1.msra.mxu0 0.0
    %2107 = vmatprep.mubr.f32.mxu0 0.0
    %2108 = vmatmul.mubr.f32.gmra.mrb[0].mxu0 %v2041
    %v2109 = vpop.f32.mrb[0].mxu0
    %v2110 = vadd.f32 0.0, %v2109
    %v2111 = vpop.f32.mrb[0].mxu0
    %2112 = vdwg.mxu0
    %v2114 = vsel %vm107, %v2110, 0
    %2116 = vmatprep.subr.mxu0 0.0
    %2117 = vmatpush1.msra.mxu0 %v267
    %2118 = vmatprep.subr.mxu0 0.0
    %2119 = vmatpush1.msra.mxu0 %v268
    %2120 = vmatprep.subr.mxu0 0.0
    %2121 = vmatpush1.msra.mxu0 %v269
    %2122 = vmatprep.subr.mxu0 0.0
    %2123 = vmatpush1.msra.mxu0 %v270
    %2124 = vmatprep.subr.mxu0 0.0
    %2125 = vmatpush1.msra.mxu0 0.0
    %2126 = vmatprep.subr.mxu0 0.0
    %2127 = vmatpush1.msra.mxu0 0.0
    %2128 = vmatprep.subr.mxu0 0.0
    %2129 = vmatpush1.msra.mxu0 0.0
    %2130 = vmatprep.subr.mxu0 0.0
    %2131 = vmatpush1.msra.mxu0 0.0
    %2132 = vmatprep.subr.mxu0 0.0
    %2133 = vmatpush1.msra.mxu0 0.0
    %2134 = vmatprep.subr.mxu0 0.0
    %2135 = vmatpush1.msra.mxu0 0.0
    %2136 = vmatprep.subr.mxu0 0.0
    %2137 = vmatpush1.msra.mxu0 0.0
    %2138 = vmatprep.subr.mxu0 0.0
    %2139 = vmatpush1.msra.mxu0 0.0
    %2140 = vmatprep.subr.mxu0 0.0
    %2141 = vmatpush1.msra.mxu0 0.0
    %2142 = vmatprep.subr.mxu0 0.0
    %2143 = vmatpush1.msra.mxu0 0.0
    %2144 = vmatprep.subr.mxu0 0.0
    %2145 = vmatpush1.msra.mxu0 0.0
    %2146 = vmatprep.subr.mxu0 0.0
    %2147 = vmatpush1.msra.mxu0 0.0
    %2148 = vmatprep.subr.mxu0 0.0
    %2149 = vmatpush1.msra.mxu0 0.0
    %2150 = vmatprep.subr.mxu0 0.0
    %2151 = vmatpush1.msra.mxu0 0.0
    %2152 = vmatprep.subr.mxu0 0.0
    %2153 = vmatpush1.msra.mxu0 0.0
    %2154 = vmatprep.subr.mxu0 0.0
    %2155 = vmatpush1.msra.mxu0 0.0
    %2156 = vmatprep.subr.mxu0 0.0
    %2157 = vmatpush1.msra.mxu0 0.0
    %2158 = vmatprep.subr.mxu0 0.0
    %2159 = vmatpush1.msra.mxu0 0.0
    %2160 = vmatprep.subr.mxu0 0.0
    %2161 = vmatpush1.msra.mxu0 0.0
    %2162 = vmatprep.subr.mxu0 0.0
    %2163 = vmatpush1.msra.mxu0 0.0
    %2164 = vmatprep.subr.mxu0 0.0
    %2165 = vmatpush1.msra.mxu0 0.0
    %2166 = vmatprep.subr.mxu0 0.0
    %2167 = vmatpush1.msra.mxu0 0.0
    %2168 = vmatprep.subr.mxu0 0.0
    %2169 = vmatpush1.msra.mxu0 0.0
    %2170 = vmatprep.subr.mxu0 0.0
    %2171 = vmatpush1.msra.mxu0 0.0
    %2172 = vmatprep.subr.mxu0 0.0
    %2173 = vmatpush1.msra.mxu0 0.0
    %2174 = vmatprep.subr.mxu0 0.0
    %2175 = vmatpush1.msra.mxu0 0.0
    %2176 = vmatprep.subr.mxu0 0.0
    %2177 = vmatpush1.msra.mxu0 0.0
    %2178 = vmatprep.subr.mxu0 0.0
    %2179 = vmatpush1.msra.mxu0 0.0
    %2180 = vmatprep.mubr.f32.mxu0 0.0
    %2181 = vmatmul.mubr.f32.gmra.mrb[0].mxu0 %v2114
    %v2182 = vpop.f32.mrb[0].mxu0
    %v2183 = vadd.f32 0.0, %v2182
    %v2184 = vpop.f32.mrb[0].mxu0
    %2185 = vdwg.mxu0
    %v2187 = vrot.slane %v2183, 4
    %v2189 = vadd.f32 %v259, %v2187
    %v2190 = vmax.f32 %v2189, 0.0
    %v2192 = vrot.slane %v2190, 4
    %v2193 = vsel %vm107, %v2192, 0
    %2195 = vmatprep.subr.mxu0 0.0
    %2196 = vmatpush1.msra.mxu0 %v271
    %2197 = vmatprep.subr.mxu0 0.0
    %2198 = vmatpush1.msra.mxu0 %v272
    %2199 = vmatprep.subr.mxu0 0.0
    %2200 = vmatpush1.msra.mxu0 %v273
    %2201 = vmatprep.subr.mxu0 0.0
    %2202 = vmatpush1.msra.mxu0 %v274
    %2203 = vmatprep.subr.mxu0 0.0
    %2204 = vmatpush1.msra.mxu0 0.0
    %2205 = vmatprep.subr.mxu0 0.0
    %2206 = vmatpush1.msra.mxu0 0.0
    %2207 = vmatprep.subr.mxu0 0.0
    %2208 = vmatpush1.msra.mxu0 0.0
    %2209 = vmatprep.subr.mxu0 0.0
    %2210 = vmatpush1.msra.mxu0 0.0
    %2211 = vmatprep.subr.mxu0 0.0
    %2212 = vmatpush1.msra.mxu0 0.0
    %2213 = vmatprep.subr.mxu0 0.0
    %2214 = vmatpush1.msra.mxu0 0.0
    %2215 = vmatprep.subr.mxu0 0.0
    %2216 = vmatpush1.msra.mxu0 0.0
    %2217 = vmatprep.subr.mxu0 0.0
    %2218 = vmatpush1.msra.mxu0 0.0
    %2219 = vmatprep.subr.mxu0 0.0
    %2220 = vmatpush1.msra.mxu0 0.0
    %2221 = vmatprep.subr.mxu0 0.0
    %2222 = vmatpush1.msra.mxu0 0.0
    %2223 = vmatprep.subr.mxu0 0.0
    %2224 = vmatpush1.msra.mxu0 0.0
    %2225 = vmatprep.subr.mxu0 0.0
    %2226 = vmatpush1.msra.mxu0 0.0
    %2227 = vmatprep.subr.mxu0 0.0
    %2228 = vmatpush1.msra.mxu0 0.0
    %2229 = vmatprep.subr.mxu0 0.0
    %2230 = vmatpush1.msra.mxu0 0.0
    %2231 = vmatprep.subr.mxu0 0.0
    %2232 = vmatpush1.msra.mxu0 0.0
    %2233 = vmatprep.subr.mxu0 0.0
    %2234 = vmatpush1.msra.mxu0 0.0
    %2235 = vmatprep.subr.mxu0 0.0
    %2236 = vmatpush1.msra.mxu0 0.0
    %2237 = vmatprep.subr.mxu0 0.0
    %2238 = vmatpush1.msra.mxu0 0.0
    %2239 = vmatprep.subr.mxu0 0.0
    %2240 = vmatpush1.msra.mxu0 0.0
    %2241 = vmatprep.subr.mxu0 0.0
    %2242 = vmatpush1.msra.mxu0 0.0
    %2243 = vmatprep.subr.mxu0 0.0
    %2244 = vmatpush1.msra.mxu0 0.0
    %2245 = vmatprep.subr.mxu0 0.0
    %2246 = vmatpush1.msra.mxu0 0.0
    %2247 = vmatprep.subr.mxu0 0.0
    %2248 = vmatpush1.msra.mxu0 0.0
    %2249 = vmatprep.subr.mxu0 0.0
    %2250 = vmatpush1.msra.mxu0 0.0
    %2251 = vmatprep.subr.mxu0 0.0
    %2252 = vmatpush1.msra.mxu0 0.0
    %2253 = vmatprep.subr.mxu0 0.0
    %2254 = vmatpush1.msra.mxu0 0.0
    %2255 = vmatprep.subr.mxu0 0.0
    %2256 = vmatpush1.msra.mxu0 0.0
    %2257 = vmatprep.subr.mxu0 0.0
    %2258 = vmatpush1.msra.mxu0 0.0
    %2259 = vmatprep.mubr.f32.mxu0 0.0
    %2260 = vmatmul.mubr.f32.gmra.mrb[0].mxu0 %v2193
    %v2261 = vpop.f32.mrb[0].mxu0
    %v2262 = vadd.f32 %v275, %v2261
    %v2263 = vpop.f32.mrb[0].mxu0
    %2264 = vdwg.mxu0
    %2265 = vmatprep.subr.mxu0 0.0
    %2266 = vmatpush1.msra.mxu0 %v276
    %2267 = vmatprep.subr.mxu0 0.0
    %2268 = vmatpush1.msra.mxu0 %v277
    %2269 = vmatprep.subr.mxu0 0.0
    %2270 = vmatpush1.msra.mxu0 %v278
    %2271 = vmatprep.subr.mxu0 0.0
    %2272 = vmatpush1.msra.mxu0 %v279
    %2273 = vmatprep.subr.mxu0 0.0
    %2274 = vmatpush1.msra.mxu0 0.0
    %2275 = vmatprep.subr.mxu0 0.0
    %2276 = vmatpush1.msra.mxu0 0.0
    %2277 = vmatprep.subr.mxu0 0.0
    %2278 = vmatpush1.msra.mxu0 0.0
    %2279 = vmatprep.subr.mxu0 0.0
    %2280 = vmatpush1.msra.mxu0 0.0
    %2281 = vmatprep.subr.mxu0 0.0
    %2282 = vmatpush1.msra.mxu0 0.0
    %2283 = vmatprep.subr.mxu0 0.0
    %2284 = vmatpush1.msra.mxu0 0.0
    %2285 = vmatprep.subr.mxu0 0.0
    %2286 = vmatpush1.msra.mxu0 0.0
    %2287 = vmatprep.subr.mxu0 0.0
    %2288 = vmatpush1.msra.mxu0 0.0
    %2289 = vmatprep.subr.mxu0 0.0
    %2290 = vmatpush1.msra.mxu0 0.0
    %2291 = vmatprep.subr.mxu0 0.0
    %2292 = vmatpush1.msra.mxu0 0.0
    %2293 = vmatprep.subr.mxu0 0.0
    %2294 = vmatpush1.msra.mxu0 0.0
    %2295 = vmatprep.subr.mxu0 0.0
    %2296 = vmatpush1.msra.mxu0 0.0
    %2297 = vmatprep.subr.mxu0 0.0
    %2298 = vmatpush1.msra.mxu0 0.0
    %2299 = vmatprep.subr.mxu0 0.0
    %2300 = vmatpush1.msra.mxu0 0.0
    %2301 = vmatprep.subr.mxu0 0.0
    %2302 = vmatpush1.msra.mxu0 0.0
    %2303 = vmatprep.subr.mxu0 0.0
    %2304 = vmatpush1.msra.mxu0 0.0
    %2305 = vmatprep.subr.mxu0 0.0
    %2306 = vmatpush1.msra.mxu0 0.0
    %2307 = vmatprep.subr.mxu0 0.0
    %2308 = vmatpush1.msra.mxu0 0.0
    %2309 = vmatprep.subr.mxu0 0.0
    %2310 = vmatpush1.msra.mxu0 0.0
    %2311 = vmatprep.subr.mxu0 0.0
    %2312 = vmatpush1.msra.mxu0 0.0
    %2313 = vmatprep.subr.mxu0 0.0
    %2314 = vmatpush1.msra.mxu0 0.0
    %2315 = vmatprep.subr.mxu0 0.0
    %2316 = vmatpush1.msra.mxu0 0.0
    %2317 = vmatprep.subr.mxu0 0.0
    %2318 = vmatpush1.msra.mxu0 0.0
    %2319 = vmatprep.subr.mxu0 0.0
    %2320 = vmatpush1.msra.mxu0 0.0
    %2321 = vmatprep.subr.mxu0 0.0
    %2322 = vmatpush1.msra.mxu0 0.0
    %2323 = vmatprep.subr.mxu0 0.0
    %2324 = vmatpush1.msra.mxu0 0.0
    %2325 = vmatprep.subr.mxu0 0.0
    %2326 = vmatpush1.msra.mxu0 0.0
    %2327 = vmatprep.subr.mxu0 0.0
    %2328 = vmatpush1.msra.mxu0 0.0
    %2329 = vmatprep.mubr.f32.mxu0 0.0
    %2330 = vmatmul.mubr.f32.gmra.mrb[0].mxu0 %v1951
    %v2331 = vpop.f32.mrb[0].mxu0
    %v2332 = vadd.f32 %v280, %v2331
    %v2333 = vpop.f32.mrb[0].mxu0
    %2334 = vdwg.mxu0
    %v2335 = vadd.f32 %v2262, %v2332
    %v2336 = vxor.u32 %v2335, 2147483648
    %v2337 = vmul.f32 %v2336, 1.442695
    %v2338 = vpow.pop %v2337
    %v2339 = vadd.f32 %v2338, 1.0
    %v2340 = vrcp.pop %v2339
    %v2341 = vmul.f32 1.0, %v2340
    %2343 = vrot.lane.b32.xlu0 %v2332, 64
    %v2344 = vpop.permute.xlu0 %2343
    %v2346 = vmul.f32 %v2341, %v2344
    %2348 = vrot.lane.b32.xlu0 %v2346, 64
    %v2349 = vpop.permute.xlu0 %2348
    %v2351 = vadd.f32 %v2262, %v2349
    %v2352 = vtanh.pop %v2351
    %v2353 = vsub.f32 1.0, %v2341
    %2355 = vrot.lane.b32.xlu0 %v2352, 96
    %v2356 = vpop.permute.xlu0 %2355
    %v2358 = vmul.f32 %v2353, %v2356
    %v2359 = vmul.f32 %v2341, %v1944
    %v2360 = vadd.f32 %v2358, %v2359
    %2362 = vrot.lane.b32.xlu0 %v2360, 96
    %v2363 = vpop.permute.xlu0 %2362
    %2365 = vst.msk [vmem:[#allocation7 + $0x4] sm:$0x1] %vm65, %v2363
    %2366 = vst.msk [vmem:[#allocation9] sm:$0x10] %vm2027, %v2038
    %v2367 = vsel %vm107, %v2363, 0
    %2369 = vmatprep.subr.mxu0 0.0
    %2370 = vmatpush1.msra.mxu0 %v263
    %2371 = vmatprep.subr.mxu0 0.0
    %2372 = vmatpush1.msra.mxu0 %v264
    %2373 = vmatprep.subr.mxu0 0.0
    %2374 = vmatpush1.msra.mxu0 %v265
    %2375 = vmatprep.subr.mxu0 0.0
    %2376 = vmatpush1.msra.mxu0 %v266
    %2377 = vmatprep.subr.mxu0 0.0
    %2378 = vmatpush1.msra.mxu0 0.0
    %2379 = vmatprep.subr.mxu0 0.0
    %2380 = vmatpush1.msra.mxu0 0.0
    %2381 = vmatprep.subr.mxu0 0.0
    %2382 = vmatpush1.msra.mxu0 0.0
    %2383 = vmatprep.subr.mxu0 0.0
    %2384 = vmatpush1.msra.mxu0 0.0
    %2385 = vmatprep.subr.mxu0 0.0
    %2386 = vmatpush1.msra.mxu0 0.0
    %2387 = vmatprep.subr.mxu0 0.0
    %2388 = vmatpush1.msra.mxu0 0.0
    %2389 = vmatprep.subr.mxu0 0.0
    %2390 = vmatpush1.msra.mxu0 0.0
    %2391 = vmatprep.subr.mxu0 0.0
    %2392 = vmatpush1.msra.mxu0 0.0
    %2393 = vmatprep.subr.mxu0 0.0
    %2394 = vmatpush1.msra.mxu0 0.0
    %2395 = vmatprep.subr.mxu0 0.0
    %2396 = vmatpush1.msra.mxu0 0.0
    %2397 = vmatprep.subr.mxu0 0.0
    %2398 = vmatpush1.msra.mxu0 0.0
    %2399 = vmatprep.subr.mxu0 0.0
    %2400 = vmatpush1.msra.mxu0 0.0
    %2401 = vmatprep.subr.mxu0 0.0
    %2402 = vmatpush1.msra.mxu0 0.0
    %2403 = vmatprep.subr.mxu0 0.0
    %2404 = vmatpush1.msra.mxu0 0.0
    %2405 = vmatprep.subr.mxu0 0.0
    %2406 = vmatpush1.msra.mxu0 0.0
    %2407 = vmatprep.subr.mxu0 0.0
    %2408 = vmatpush1.msra.mxu0 0.0
    %2409 = vmatprep.subr.mxu0 0.0
    %2410 = vmatpush1.msra.mxu0 0.0
    %2411 = vmatprep.subr.mxu0 0.0
    %2412 = vmatpush1.msra.mxu0 0.0
    %2413 = vmatprep.subr.mxu0 0.0
    %2414 = vmatpush1.msra.mxu0 0.0
    %2415 = vmatprep.subr.mxu0 0.0
    %2416 = vmatpush1.msra.mxu0 0.0
    %2417 = vmatprep.subr.mxu0 0.0
    %2418 = vmatpush1.msra.mxu0 0.0
    %2419 = vmatprep.subr.mxu0 0.0
    %2420 = vmatpush1.msra.mxu0 0.0
    %2421 = vmatprep.subr.mxu0 0.0
    %2422 = vmatpush1.msra.mxu0 0.0
    %2423 = vmatprep.subr.mxu0 0.0
    %2424 = vmatpush1.msra.mxu0 0.0
    %2425 = vmatprep.subr.mxu0 0.0
    %2426 = vmatpush1.msra.mxu0 0.0
    %2427 = vmatprep.subr.mxu0 0.0
    %2428 = vmatpush1.msra.mxu0 0.0
    %2429 = vmatprep.subr.mxu0 0.0
    %2430 = vmatpush1.msra.mxu0 0.0
    %2431 = vmatprep.subr.mxu0 0.0
    %2432 = vmatpush1.msra.mxu0 0.0
    %2433 = vmatprep.mubr.f32.mxu0 0.0
    %2434 = vmatmul.mubr.f32.gmra.mrb[0].mxu0 %v2367
    %v2435 = vpop.f32.mrb[0].mxu0
    %v2436 = vadd.f32 0.0, %v2435
    %v2437 = vpop.f32.mrb[0].mxu0
    %2438 = vdwg.mxu0
    %v2440 = vrot.slane %v2436, 3
    %v2442 = vadd.f32 %v178, %v2440
    %vm2443 = vcmask 37893
    %v2444 = vsel %vm2443, %v2442, -inf
    %2445 = vmax.xlane.f32.xlu0 %v2444
    %v2446 = vpop.xlane.xlu0 %2445
    %v2447 = vsub.f32 %v2442, %v2446
    %v2448 = vmul.f32 %v2447, 1.442695
    %v2449 = vpow.pop %v2448
    %v2450 = vsel %vm2443, %v2449, 0.0
    %2451 = vadd.xlane.f32.xlu0 %v2450
    %v2452 = vpop.xlane.xlu0 %2451
    %v2453 = vrcp.pop %v2452
    %v2454 = vmul.f32 %v2449, %v2453
    %v2456 = vrot.slane %v2454, 5
    %v2457 = vsel %vm368, %v2456, 0
    %2459 = vmatprep.subr.mxu0 0.0
    %2460 = vmatpush1.msra.mxu0 %v374
    %2461 = vmatprep.subr.mxu0 0.0
    %2462 = vmatpush1.msra.mxu0 0.0
    %2463 = vmatprep.subr.mxu0 0.0
    %2464 = vmatpush1.msra.mxu0 0.0
    %2465 = vmatprep.subr.mxu0 0.0
    %2466 = vmatpush1.msra.mxu0 0.0
    %2467 = vmatprep.subr.mxu0 0.0
    %2468 = vmatpush1.msra.mxu0 0.0
    %2469 = vmatprep.subr.mxu0 0.0
    %2470 = vmatpush1.msra.mxu0 0.0
    %2471 = vmatprep.subr.mxu0 0.0
    %2472 = vmatpush1.msra.mxu0 0.0
    %2473 = vmatprep.subr.mxu0 0.0
    %2474 = vmatpush1.msra.mxu0 0.0
    %2475 = vmatprep.subr.mxu0 0.0
    %2476 = vmatpush1.msra.mxu0 0.0
    %2477 = vmatprep.subr.mxu0 0.0
    %2478 = vmatpush1.msra.mxu0 0.0
    %2479 = vmatprep.subr.mxu0 0.0
    %2480 = vmatpush1.msra.mxu0 0.0
    %2481 = vmatprep.subr.mxu0 0.0
    %2482 = vmatpush1.msra.mxu0 0.0
    %2483 = vmatprep.subr.mxu0 0.0
    %2484 = vmatpush1.msra.mxu0 0.0
    %2485 = vmatprep.subr.mxu0 0.0
    %2486 = vmatpush1.msra.mxu0 0.0
    %2487 = vmatprep.subr.mxu0 0.0
    %2488 = vmatpush1.msra.mxu0 0.0
    %2489 = vmatprep.subr.mxu0 0.0
    %2490 = vmatpush1.msra.mxu0 0.0
    %2491 = vmatprep.subr.mxu0 0.0
    %2492 = vmatpush1.msra.mxu0 0.0
    %2493 = vmatprep.subr.mxu0 0.0
    %2494 = vmatpush1.msra.mxu0 0.0
    %2495 = vmatprep.subr.mxu0 0.0
    %2496 = vmatpush1.msra.mxu0 0.0
    %2497 = vmatprep.subr.mxu0 0.0
    %2498 = vmatpush1.msra.mxu0 0.0
    %2499 = vmatprep.subr.mxu0 0.0
    %2500 = vmatpush1.msra.mxu0 0.0
    %2501 = vmatprep.subr.mxu0 0.0
    %2502 = vmatpush1.msra.mxu0 0.0
    %2503 = vmatprep.subr.mxu0 0.0
    %2504 = vmatpush1.msra.mxu0 0.0
    %2505 = vmatprep.subr.mxu0 0.0
    %2506 = vmatpush1.msra.mxu0 0.0
    %2507 = vmatprep.subr.mxu0 0.0
    %2508 = vmatpush1.msra.mxu0 0.0
    %2509 = vmatprep.subr.mxu0 0.0
    %2510 = vmatpush1.msra.mxu0 0.0
    %2511 = vmatprep.subr.mxu0 0.0
    %2512 = vmatpush1.msra.mxu0 0.0
    %2513 = vmatprep.subr.mxu0 0.0
    %2514 = vmatpush1.msra.mxu0 0.0
    %2515 = vmatprep.subr.mxu0 0.0
    %2516 = vmatpush1.msra.mxu0 0.0
    %2517 = vmatprep.subr.mxu0 0.0
    %2518 = vmatpush1.msra.mxu0 0.0
    %2519 = vmatprep.subr.mxu0 0.0
    %2520 = vmatpush1.msra.mxu0 0.0
    %2521 = vmatprep.subr.mxu0 0.0
    %2522 = vmatpush1.msra.mxu0 0.0
    %2523 = vmatprep.mubr.f32.mxu0 0.0
    %2524 = vmatmul.mubr.f32.gmra.mrb[0].mxu0 %v2457
    %v2525 = vpop.f32.mrb[0].mxu0
    %v2526 = vadd.f32 0.0, %v2525
    %v2527 = vpop.f32.mrb[0].mxu0
    %2528 = vdwg.mxu0
    %v2530 = vsel %vm107, %v2526, 0
    %2532 = vmatprep.subr.mxu0 0.0
    %2533 = vmatpush1.msra.mxu0 %v267
    %2534 = vmatprep.subr.mxu0 0.0
    %2535 = vmatpush1.msra.mxu0 %v268
    %2536 = vmatprep.subr.mxu0 0.0
    %2537 = vmatpush1.msra.mxu0 %v269
    %2538 = vmatprep.subr.mxu0 0.0
    %2539 = vmatpush1.msra.mxu0 %v270
    %2540 = vmatprep.subr.mxu0 0.0
    %2541 = vmatpush1.msra.mxu0 0.0
    %2542 = vmatprep.subr.mxu0 0.0
    %2543 = vmatpush1.msra.mxu0 0.0
    %2544 = vmatprep.subr.mxu0 0.0
    %2545 = vmatpush1.msra.mxu0 0.0
    %2546 = vmatprep.subr.mxu0 0.0
    %2547 = vmatpush1.msra.mxu0 0.0
    %2548 = vmatprep.subr.mxu0 0.0
    %2549 = vmatpush1.msra.mxu0 0.0
    %2550 = vmatprep.subr.mxu0 0.0
    %2551 = vmatpush1.msra.mxu0 0.0
    %2552 = vmatprep.subr.mxu0 0.0
    %2553 = vmatpush1.msra.mxu0 0.0
    %2554 = vmatprep.subr.mxu0 0.0
    %2555 = vmatpush1.msra.mxu0 0.0
    %2556 = vmatprep.subr.mxu0 0.0
    %2557 = vmatpush1.msra.mxu0 0.0
    %2558 = vmatprep.subr.mxu0 0.0
    %2559 = vmatpush1.msra.mxu0 0.0
    %2560 = vmatprep.subr.mxu0 0.0
    %2561 = vmatpush1.msra.mxu0 0.0
    %2562 = vmatprep.subr.mxu0 0.0
    %2563 = vmatpush1.msra.mxu0 0.0
    %2564 = vmatprep.subr.mxu0 0.0
    %2565 = vmatpush1.msra.mxu0 0.0
    %2566 = vmatprep.subr.mxu0 0.0
    %2567 = vmatpush1.msra.mxu0 0.0
    %2568 = vmatprep.subr.mxu0 0.0
    %2569 = vmatpush1.msra.mxu0 0.0
    %2570 = vmatprep.subr.mxu0 0.0
    %2571 = vmatpush1.msra.mxu0 0.0
    %2572 = vmatprep.subr.mxu0 0.0
    %2573 = vmatpush1.msra.mxu0 0.0
    %2574 = vmatprep.subr.mxu0 0.0
    %2575 = vmatpush1.msra.mxu0 0.0
    %2576 = vmatprep.subr.mxu0 0.0
    %2577 = vmatpush1.msra.mxu0 0.0
    %2578 = vmatprep.subr.mxu0 0.0
    %2579 = vmatpush1.msra.mxu0 0.0
    %2580 = vmatprep.subr.mxu0 0.0
    %2581 = vmatpush1.msra.mxu0 0.0
    %2582 = vmatprep.subr.mxu0 0.0
    %2583 = vmatpush1.msra.mxu0 0.0
    %2584 = vmatprep.subr.mxu0 0.0
    %2585 = vmatpush1.msra.mxu0 0.0
    %2586 = vmatprep.subr.mxu0 0.0
    %2587 = vmatpush1.msra.mxu0 0.0
    %2588 = vmatprep.subr.mxu0 0.0
    %2589 = vmatpush1.msra.mxu0 0.0
    %2590 = vmatprep.subr.mxu0 0.0
    %2591 = vmatpush1.msra.mxu0 0.0
    %2592 = vmatprep.subr.mxu0 0.0
    %2593 = vmatpush1.msra.mxu0 0.0
    %2594 = vmatprep.subr.mxu0 0.0
    %2595 = vmatpush1.msra.mxu0 0.0
    %2596 = vmatprep.mubr.f32.mxu0 0.0
    %2597 = vmatmul.mubr.f32.gmra.mrb[0].mxu0 %v2530
    %v2598 = vpop.f32.mrb[0].mxu0
    %v2599 = vadd.f32 0.0, %v2598
    %v2600 = vpop.f32.mrb[0].mxu0
    %2601 = vdwg.mxu0
    %v2603 = vrot.slane %v2599, 3
    %v2605 = vadd.f32 %v259, %v2603
    %v2606 = vmax.f32 %v2605, 0.0
    %v2608 = vrot.slane %v2606, 5
    %v2609 = vsel %vm107, %v2608, 0
    %2611 = vmatprep.subr.mxu0 0.0
    %2612 = vmatpush1.msra.mxu0 %v271
    %2613 = vmatprep.subr.mxu0 0.0
    %2614 = vmatpush1.msra.mxu0 %v272
    %2615 = vmatprep.subr.mxu0 0.0
    %2616 = vmatpush1.msra.mxu0 %v273
    %2617 = vmatprep.subr.mxu0 0.0
    %2618 = vmatpush1.msra.mxu0 %v274
    %2619 = vmatprep.subr.mxu0 0.0
    %2620 = vmatpush1.msra.mxu0 0.0
    %2621 = vmatprep.subr.mxu0 0.0
    %2622 = vmatpush1.msra.mxu0 0.0
    %2623 = vmatprep.subr.mxu0 0.0
    %2624 = vmatpush1.msra.mxu0 0.0
    %2625 = vmatprep.subr.mxu0 0.0
    %2626 = vmatpush1.msra.mxu0 0.0
    %2627 = vmatprep.subr.mxu0 0.0
    %2628 = vmatpush1.msra.mxu0 0.0
    %2629 = vmatprep.subr.mxu0 0.0
    %2630 = vmatpush1.msra.mxu0 0.0
    %2631 = vmatprep.subr.mxu0 0.0
    %2632 = vmatpush1.msra.mxu0 0.0
    %2633 = vmatprep.subr.mxu0 0.0
    %2634 = vmatpush1.msra.mxu0 0.0
    %2635 = vmatprep.subr.mxu0 0.0
    %2636 = vmatpush1.msra.mxu0 0.0
    %2637 = vmatprep.subr.mxu0 0.0
    %2638 = vmatpush1.msra.mxu0 0.0
    %2639 = vmatprep.subr.mxu0 0.0
    %2640 = vmatpush1.msra.mxu0 0.0
    %2641 = vmatprep.subr.mxu0 0.0
    %2642 = vmatpush1.msra.mxu0 0.0
    %2643 = vmatprep.subr.mxu0 0.0
    %2644 = vmatpush1.msra.mxu0 0.0
    %2645 = vmatprep.subr.mxu0 0.0
    %2646 = vmatpush1.msra.mxu0 0.0
    %2647 = vmatprep.subr.mxu0 0.0
    %2648 = vmatpush1.msra.mxu0 0.0
    %2649 = vmatprep.subr.mxu0 0.0
    %2650 = vmatpush1.msra.mxu0 0.0
    %2651 = vmatprep.subr.mxu0 0.0
    %2652 = vmatpush1.msra.mxu0 0.0
    %2653 = vmatprep.subr.mxu0 0.0
    %2654 = vmatpush1.msra.mxu0 0.0
    %2655 = vmatprep.subr.mxu0 0.0
    %2656 = vmatpush1.msra.mxu0 0.0
    %2657 = vmatprep.subr.mxu0 0.0
    %2658 = vmatpush1.msra.mxu0 0.0
    %2659 = vmatprep.subr.mxu0 0.0
    %2660 = vmatpush1.msra.mxu0 0.0
    %2661 = vmatprep.subr.mxu0 0.0
    %2662 = vmatpush1.msra.mxu0 0.0
    %2663 = vmatprep.subr.mxu0 0.0
    %2664 = vmatpush1.msra.mxu0 0.0
    %2665 = vmatprep.subr.mxu0 0.0
    %2666 = vmatpush1.msra.mxu0 0.0
    %2667 = vmatprep.subr.mxu0 0.0
    %2668 = vmatpush1.msra.mxu0 0.0
    %2669 = vmatprep.subr.mxu0 0.0
    %2670 = vmatpush1.msra.mxu0 0.0
    %2671 = vmatprep.subr.mxu0 0.0
    %2672 = vmatpush1.msra.mxu0 0.0
    %2673 = vmatprep.subr.mxu0 0.0
    %2674 = vmatpush1.msra.mxu0 0.0
    %2675 = vmatprep.mubr.f32.mxu0 0.0
    %2676 = vmatmul.mubr.f32.gmra.mrb[0].mxu0 %v2609
    %v2677 = vpop.f32.mrb[0].mxu0
    %v2678 = vadd.f32 %v275, %v2677
    %v2679 = vpop.f32.mrb[0].mxu0
    %2680 = vdwg.mxu0
    %2681 = vmatprep.subr.mxu0 0.0
    %2682 = vmatpush1.msra.mxu0 %v276
    %2683 = vmatprep.subr.mxu0 0.0
    %2684 = vmatpush1.msra.mxu0 %v277
    %2685 = vmatprep.subr.mxu0 0.0
    %2686 = vmatpush1.msra.mxu0 %v278
    %2687 = vmatprep.subr.mxu0 0.0
    %2688 = vmatpush1.msra.mxu0 %v279
    %2689 = vmatprep.subr.mxu0 0.0
    %2690 = vmatpush1.msra.mxu0 0.0
    %2691 = vmatprep.subr.mxu0 0.0
    %2692 = vmatpush1.msra.mxu0 0.0
    %2693 = vmatprep.subr.mxu0 0.0
    %2694 = vmatpush1.msra.mxu0 0.0
    %2695 = vmatprep.subr.mxu0 0.0
    %2696 = vmatpush1.msra.mxu0 0.0
    %2697 = vmatprep.subr.mxu0 0.0
    %2698 = vmatpush1.msra.mxu0 0.0
    %2699 = vmatprep.subr.mxu0 0.0
    %2700 = vmatpush1.msra.mxu0 0.0
    %2701 = vmatprep.subr.mxu0 0.0
    %2702 = vmatpush1.msra.mxu0 0.0
    %2703 = vmatprep.subr.mxu0 0.0
    %2704 = vmatpush1.msra.mxu0 0.0
    %2705 = vmatprep.subr.mxu0 0.0
    %2706 = vmatpush1.msra.mxu0 0.0
    %2707 = vmatprep.subr.mxu0 0.0
    %2708 = vmatpush1.msra.mxu0 0.0
    %2709 = vmatprep.subr.mxu0 0.0
    %2710 = vmatpush1.msra.mxu0 0.0
    %2711 = vmatprep.subr.mxu0 0.0
    %2712 = vmatpush1.msra.mxu0 0.0
    %2713 = vmatprep.subr.mxu0 0.0
    %2714 = vmatpush1.msra.mxu0 0.0
    %2715 = vmatprep.subr.mxu0 0.0
    %2716 = vmatpush1.msra.mxu0 0.0
    %2717 = vmatprep.subr.mxu0 0.0
    %2718 = vmatpush1.msra.mxu0 0.0
    %2719 = vmatprep.subr.mxu0 0.0
    %2720 = vmatpush1.msra.mxu0 0.0
    %2721 = vmatprep.subr.mxu0 0.0
    %2722 = vmatpush1.msra.mxu0 0.0
    %2723 = vmatprep.subr.mxu0 0.0
    %2724 = vmatpush1.msra.mxu0 0.0
    %2725 = vmatprep.subr.mxu0 0.0
    %2726 = vmatpush1.msra.mxu0 0.0
    %2727 = vmatprep.subr.mxu0 0.0
    %2728 = vmatpush1.msra.mxu0 0.0
    %2729 = vmatprep.subr.mxu0 0.0
    %2730 = vmatpush1.msra.mxu0 0.0
    %2731 = vmatprep.subr.mxu0 0.0
    %2732 = vmatpush1.msra.mxu0 0.0
    %2733 = vmatprep.subr.mxu0 0.0
    %2734 = vmatpush1.msra.mxu0 0.0
    %2735 = vmatprep.subr.mxu0 0.0
    %2736 = vmatpush1.msra.mxu0 0.0
    %2737 = vmatprep.subr.mxu0 0.0
    %2738 = vmatpush1.msra.mxu0 0.0
    %2739 = vmatprep.subr.mxu0 0.0
    %2740 = vmatpush1.msra.mxu0 0.0
    %2741 = vmatprep.subr.mxu0 0.0
    %2742 = vmatpush1.msra.mxu0 0.0
    %2743 = vmatprep.subr.mxu0 0.0
    %2744 = vmatpush1.msra.mxu0 0.0
    %2745 = vmatprep.mubr.f32.mxu0 0.0
    %2746 = vmatmul.mubr.f32.gmra.mrb[0].mxu0 %v2367
    %v2747 = vpop.f32.mrb[0].mxu0
    %v2748 = vadd.f32 %v280, %v2747
    %v2749 = vpop.f32.mrb[0].mxu0
    %2750 = vdwg.mxu0
    %v2751 = vadd.f32 %v2678, %v2748
    %v2752 = vxor.u32 %v2751, 2147483648
    %v2753 = vmul.f32 %v2752, 1.442695
    %v2754 = vpow.pop %v2753
    %v2755 = vadd.f32 %v2754, 1.0
    %v2756 = vrcp.pop %v2755
    %v2757 = vmul.f32 1.0, %v2756
    %2759 = vrot.lane.b32.xlu0 %v2748, 64
    %v2760 = vpop.permute.xlu0 %2759
    %v2762 = vmul.f32 %v2757, %v2760
    %2764 = vrot.lane.b32.xlu0 %v2762, 64
    %v2765 = vpop.permute.xlu0 %2764
    %v2767 = vadd.f32 %v2678, %v2765
    %v2768 = vtanh.pop %v2767
    %v2769 = vsub.f32 1.0, %v2757
    %2771 = vrot.lane.b32.xlu0 %v2768, 96
    %v2772 = vpop.permute.xlu0 %2771
    %v2774 = vmul.f32 %v2769, %v2772
    %v2775 = vmul.f32 %v2757, %v2360
    %v2776 = vadd.f32 %v2774, %v2775
    %2778 = vrot.lane.b32.xlu0 %v2776, 96
    %v2779 = vpop.permute.xlu0 %2778
    %2781 = vst.msk [vmem:[#allocation7 + $0x5] sm:$0x1] %vm65, %v2779
    %2782 = vst.msk [vmem:[#allocation9] sm:$0x20] %vm2443, %v2454
    %v2783 = vsel %vm107, %v2779, 0
    %2785 = vmatprep.subr.mxu0 0.0
    %2786 = vmatpush1.msra.mxu0 %v263
    %2787 = vmatprep.subr.mxu0 0.0
    %2788 = vmatpush1.msra.mxu0 %v264
    %2789 = vmatprep.subr.mxu0 0.0
    %2790 = vmatpush1.msra.mxu0 %v265
    %2791 = vmatprep.subr.mxu0 0.0
    %2792 = vmatpush1.msra.mxu0 %v266
    %2793 = vmatprep.subr.mxu0 0.0
    %2794 = vmatpush1.msra.mxu0 0.0
    %2795 = vmatprep.subr.mxu0 0.0
    %2796 = vmatpush1.msra.mxu0 0.0
    %2797 = vmatprep.subr.mxu0 0.0
    %2798 = vmatpush1.msra.mxu0 0.0
    %2799 = vmatprep.subr.mxu0 0.0
    %2800 = vmatpush1.msra.mxu0 0.0
    %2801 = vmatprep.subr.mxu0 0.0
    %2802 = vmatpush1.msra.mxu0 0.0
    %2803 = vmatprep.subr.mxu0 0.0
    %2804 = vmatpush1.msra.mxu0 0.0
    %2805 = vmatprep.subr.mxu0 0.0
    %2806 = vmatpush1.msra.mxu0 0.0
    %2807 = vmatprep.subr.mxu0 0.0
    %2808 = vmatpush1.msra.mxu0 0.0
    %2809 = vmatprep.subr.mxu0 0.0
    %2810 = vmatpush1.msra.mxu0 0.0
    %2811 = vmatprep.subr.mxu0 0.0
    %2812 = vmatpush1.msra.mxu0 0.0
    %2813 = vmatprep.subr.mxu0 0.0
    %2814 = vmatpush1.msra.mxu0 0.0
    %2815 = vmatprep.subr.mxu0 0.0
    %2816 = vmatpush1.msra.mxu0 0.0
    %2817 = vmatprep.subr.mxu0 0.0
    %2818 = vmatpush1.msra.mxu0 0.0
    %2819 = vmatprep.subr.mxu0 0.0
    %2820 = vmatpush1.msra.mxu0 0.0
    %2821 = vmatprep.subr.mxu0 0.0
    %2822 = vmatpush1.msra.mxu0 0.0
    %2823 = vmatprep.subr.mxu0 0.0
    %2824 = vmatpush1.msra.mxu0 0.0
    %2825 = vmatprep.subr.mxu0 0.0
    %2826 = vmatpush1.msra.mxu0 0.0
    %2827 = vmatprep.subr.mxu0 0.0
    %2828 = vmatpush1.msra.mxu0 0.0
    %2829 = vmatprep.subr.mxu0 0.0
    %2830 = vmatpush1.msra.mxu0 0.0
    %2831 = vmatprep.subr.mxu0 0.0
    %2832 = vmatpush1.msra.mxu0 0.0
    %2833 = vmatprep.subr.mxu0 0.0
    %2834 = vmatpush1.msra.mxu0 0.0
    %2835 = vmatprep.subr.mxu0 0.0
    %2836 = vmatpush1.msra.mxu0 0.0
    %2837 = vmatprep.subr.mxu0 0.0
    %2838 = vmatpush1.msra.mxu0 0.0
    %2839 = vmatprep.subr.mxu0 0.0
    %2840 = vmatpush1.msra.mxu0 0.0
    %2841 = vmatprep.subr.mxu0 0.0
    %2842 = vmatpush1.msra.mxu0 0.0
    %2843 = vmatprep.subr.mxu0 0.0
    %2844 = vmatpush1.msra.mxu0 0.0
    %2845 = vmatprep.subr.mxu0 0.0
    %2846 = vmatpush1.msra.mxu0 0.0
    %2847 = vmatprep.subr.mxu0 0.0
    %2848 = vmatpush1.msra.mxu0 0.0
    %2849 = vmatprep.mubr.f32.mxu0 0.0
    %2850 = vmatmul.mubr.f32.gmra.mrb[0].mxu0 %v2783
    %v2851 = vpop.f32.mrb[0].mxu0
    %v2852 = vadd.f32 0.0, %v2851
    %v2853 = vpop.f32.mrb[0].mxu0
    %2854 = vdwg.mxu0
    %v2856 = vrot.slane %v2852, 2
    %v2858 = vadd.f32 %v178, %v2856
    %vm2859 = vcmask 38918
    %v2860 = vsel %vm2859, %v2858, -inf
    %2861 = vmax.xlane.f32.xlu0 %v2860
    %v2862 = vpop.xlane.xlu0 %2861
    %v2863 = vsub.f32 %v2858, %v2862
    %v2864 = vmul.f32 %v2863, 1.442695
    %v2865 = vpow.pop %v2864
    %v2866 = vsel %vm2859, %v2865, 0.0
    %2867 = vadd.xlane.f32.xlu0 %v2866
    %v2868 = vpop.xlane.xlu0 %2867
    %v2869 = vrcp.pop %v2868
    %v2870 = vmul.f32 %v2865, %v2869
    %v2872 = vrot.slane %v2870, 6
    %v2873 = vsel %vm368, %v2872, 0
    %2875 = vmatprep.subr.mxu0 0.0
    %2876 = vmatpush1.msra.mxu0 %v374
    %2877 = vmatprep.subr.mxu0 0.0
    %2878 = vmatpush1.msra.mxu0 0.0
    %2879 = vmatprep.subr.mxu0 0.0
    %2880 = vmatpush1.msra.mxu0 0.0
    %2881 = vmatprep.subr.mxu0 0.0
    %2882 = vmatpush1.msra.mxu0 0.0
    %2883 = vmatprep.subr.mxu0 0.0
    %2884 = vmatpush1.msra.mxu0 0.0
    %2885 = vmatprep.subr.mxu0 0.0
    %2886 = vmatpush1.msra.mxu0 0.0
    %2887 = vmatprep.subr.mxu0 0.0
    %2888 = vmatpush1.msra.mxu0 0.0
    %2889 = vmatprep.subr.mxu0 0.0
    %2890 = vmatpush1.msra.mxu0 0.0
    %2891 = vmatprep.subr.mxu0 0.0
    %2892 = vmatpush1.msra.mxu0 0.0
    %2893 = vmatprep.subr.mxu0 0.0
    %2894 = vmatpush1.msra.mxu0 0.0
    %2895 = vmatprep.subr.mxu0 0.0
    %2896 = vmatpush1.msra.mxu0 0.0
    %2897 = vmatprep.subr.mxu0 0.0
    %2898 = vmatpush1.msra.mxu0 0.0
    %2899 = vmatprep.subr.mxu0 0.0
    %2900 = vmatpush1.msra.mxu0 0.0
    %2901 = vmatprep.subr.mxu0 0.0
    %2902 = vmatpush1.msra.mxu0 0.0
    %2903 = vmatprep.subr.mxu0 0.0
    %2904 = vmatpush1.msra.mxu0 0.0
    %2905 = vmatprep.subr.mxu0 0.0
    %2906 = vmatpush1.msra.mxu0 0.0
    %2907 = vmatprep.subr.mxu0 0.0
    %2908 = vmatpush1.msra.mxu0 0.0
    %2909 = vmatprep.subr.mxu0 0.0
    %2910 = vmatpush1.msra.mxu0 0.0
    %2911 = vmatprep.subr.mxu0 0.0
    %2912 = vmatpush1.msra.mxu0 0.0
    %2913 = vmatprep.subr.mxu0 0.0
    %2914 = vmatpush1.msra.mxu0 0.0
    %2915 = vmatprep.subr.mxu0 0.0
    %2916 = vmatpush1.msra.mxu0 0.0
    %2917 = vmatprep.subr.mxu0 0.0
    %2918 = vmatpush1.msra.mxu0 0.0
    %2919 = vmatprep.subr.mxu0 0.0
    %2920 = vmatpush1.msra.mxu0 0.0
    %2921 = vmatprep.subr.mxu0 0.0
    %2922 = vmatpush1.msra.mxu0 0.0
    %2923 = vmatprep.subr.mxu0 0.0
    %2924 = vmatpush1.msra.mxu0 0.0
    %2925 = vmatprep.subr.mxu0 0.0
    %2926 = vmatpush1.msra.mxu0 0.0
    %2927 = vmatprep.subr.mxu0 0.0
    %2928 = vmatpush1.msra.mxu0 0.0
    %2929 = vmatprep.subr.mxu0 0.0
    %2930 = vmatpush1.msra.mxu0 0.0
    %2931 = vmatprep.subr.mxu0 0.0
    %2932 = vmatpush1.msra.mxu0 0.0
    %2933 = vmatprep.subr.mxu0 0.0
    %2934 = vmatpush1.msra.mxu0 0.0
    %2935 = vmatprep.subr.mxu0 0.0
    %2936 = vmatpush1.msra.mxu0 0.0
    %2937 = vmatprep.subr.mxu0 0.0
    %2938 = vmatpush1.msra.mxu0 0.0
    %2939 = vmatprep.mubr.f32.mxu0 0.0
    %2940 = vmatmul.mubr.f32.gmra.mrb[0].mxu0 %v2873
    %v2941 = vpop.f32.mrb[0].mxu0
    %v2942 = vadd.f32 0.0, %v2941
    %v2943 = vpop.f32.mrb[0].mxu0
    %2944 = vdwg.mxu0
    %v2946 = vsel %vm107, %v2942, 0
    %2948 = vmatprep.subr.mxu0 0.0
    %2949 = vmatpush1.msra.mxu0 %v267
    %2950 = vmatprep.subr.mxu0 0.0
    %2951 = vmatpush1.msra.mxu0 %v268
    %2952 = vmatprep.subr.mxu0 0.0
    %2953 = vmatpush1.msra.mxu0 %v269
    %2954 = vmatprep.subr.mxu0 0.0
    %2955 = vmatpush1.msra.mxu0 %v270
    %2956 = vmatprep.subr.mxu0 0.0
    %2957 = vmatpush1.msra.mxu0 0.0
    %2958 = vmatprep.subr.mxu0 0.0
    %2959 = vmatpush1.msra.mxu0 0.0
    %2960 = vmatprep.subr.mxu0 0.0
    %2961 = vmatpush1.msra.mxu0 0.0
    %2962 = vmatprep.subr.mxu0 0.0
    %2963 = vmatpush1.msra.mxu0 0.0
    %2964 = vmatprep.subr.mxu0 0.0
    %2965 = vmatpush1.msra.mxu0 0.0
    %2966 = vmatprep.subr.mxu0 0.0
    %2967 = vmatpush1.msra.mxu0 0.0
    %2968 = vmatprep.subr.mxu0 0.0
    %2969 = vmatpush1.msra.mxu0 0.0
    %2970 = vmatprep.subr.mxu0 0.0
    %2971 = vmatpush1.msra.mxu0 0.0
    %2972 = vmatprep.subr.mxu0 0.0
    %2973 = vmatpush1.msra.mxu0 0.0
    %2974 = vmatprep.subr.mxu0 0.0
    %2975 = vmatpush1.msra.mxu0 0.0
    %2976 = vmatprep.subr.mxu0 0.0
    %2977 = vmatpush1.msra.mxu0 0.0
    %2978 = vmatprep.subr.mxu0 0.0
    %2979 = vmatpush1.msra.mxu0 0.0
    %2980 = vmatprep.subr.mxu0 0.0
    %2981 = vmatpush1.msra.mxu0 0.0
    %2982 = vmatprep.subr.mxu0 0.0
    %2983 = vmatpush1.msra.mxu0 0.0
    %2984 = vmatprep.subr.mxu0 0.0
    %2985 = vmatpush1.msra.mxu0 0.0
    %2986 = vmatprep.subr.mxu0 0.0
    %2987 = vmatpush1.msra.mxu0 0.0
    %2988 = vmatprep.subr.mxu0 0.0
    %2989 = vmatpush1.msra.mxu0 0.0
    %2990 = vmatprep.subr.mxu0 0.0
    %2991 = vmatpush1.msra.mxu0 0.0
    %2992 = vmatprep.subr.mxu0 0.0
    %2993 = vmatpush1.msra.mxu0 0.0
    %2994 = vmatprep.subr.mxu0 0.0
    %2995 = vmatpush1.msra.mxu0 0.0
    %2996 = vmatprep.subr.mxu0 0.0
    %2997 = vmatpush1.msra.mxu0 0.0
    %2998 = vmatprep.subr.mxu0 0.0
    %2999 = vmatpush1.msra.mxu0 0.0
    %3000 = vmatprep.subr.mxu0 0.0
    %3001 = vmatpush1.msra.mxu0 0.0
    %3002 = vmatprep.subr.mxu0 0.0
    %3003 = vmatpush1.msra.mxu0 0.0
    %3004 = vmatprep.subr.mxu0 0.0
    %3005 = vmatpush1.msra.mxu0 0.0
    %3006 = vmatprep.subr.mxu0 0.0
    %3007 = vmatpush1.msra.mxu0 0.0
    %3008 = vmatprep.subr.mxu0 0.0
    %3009 = vmatpush1.msra.mxu0 0.0
    %3010 = vmatprep.subr.mxu0 0.0
    %3011 = vmatpush1.msra.mxu0 0.0
    %3012 = vmatprep.mubr.f32.mxu0 0.0
    %3013 = vmatmul.mubr.f32.gmra.mrb[0].mxu0 %v2946
    %v3014 = vpop.f32.mrb[0].mxu0
    %v3015 = vadd.f32 0.0, %v3014
    %v3016 = vpop.f32.mrb[0].mxu0
    %3017 = vdwg.mxu0
    %v3019 = vrot.slane %v3015, 2
    %v3021 = vadd.f32 %v259, %v3019
    %v3022 = vmax.f32 %v3021, 0.0
    %v3024 = vrot.slane %v3022, 6
    %v3025 = vsel %vm107, %v3024, 0
    %3027 = vmatprep.subr.mxu0 0.0
    %3028 = vmatpush1.msra.mxu0 %v271
    %3029 = vmatprep.subr.mxu0 0.0
    %3030 = vmatpush1.msra.mxu0 %v272
    %3031 = vmatprep.subr.mxu0 0.0
    %3032 = vmatpush1.msra.mxu0 %v273
    %3033 = vmatprep.subr.mxu0 0.0
    %3034 = vmatpush1.msra.mxu0 %v274
    %3035 = vmatprep.subr.mxu0 0.0
    %3036 = vmatpush1.msra.mxu0 0.0
    %3037 = vmatprep.subr.mxu0 0.0
    %3038 = vmatpush1.msra.mxu0 0.0
    %3039 = vmatprep.subr.mxu0 0.0
    %3040 = vmatpush1.msra.mxu0 0.0
    %3041 = vmatprep.subr.mxu0 0.0
    %3042 = vmatpush1.msra.mxu0 0.0
    %3043 = vmatprep.subr.mxu0 0.0
    %3044 = vmatpush1.msra.mxu0 0.0
    %3045 = vmatprep.subr.mxu0 0.0
    %3046 = vmatpush1.msra.mxu0 0.0
    %3047 = vmatprep.subr.mxu0 0.0
    %3048 = vmatpush1.msra.mxu0 0.0
    %3049 = vmatprep.subr.mxu0 0.0
    %3050 = vmatpush1.msra.mxu0 0.0
    %3051 = vmatprep.subr.mxu0 0.0
    %3052 = vmatpush1.msra.mxu0 0.0
    %3053 = vmatprep.subr.mxu0 0.0
    %3054 = vmatpush1.msra.mxu0 0.0
    %3055 = vmatprep.subr.mxu0 0.0
    %3056 = vmatpush1.msra.mxu0 0.0
    %3057 = vmatprep.subr.mxu0 0.0
    %3058 = vmatpush1.msra.mxu0 0.0
    %3059 = vmatprep.subr.mxu0 0.0
    %3060 = vmatpush1.msra.mxu0 0.0
    %3061 = vmatprep.subr.mxu0 0.0
    %3062 = vmatpush1.msra.mxu0 0.0
    %3063 = vmatprep.subr.mxu0 0.0
    %3064 = vmatpush1.msra.mxu0 0.0
    %3065 = vmatprep.subr.mxu0 0.0
    %3066 = vmatpush1.msra.mxu0 0.0
    %3067 = vmatprep.subr.mxu0 0.0
    %3068 = vmatpush1.msra.mxu0 0.0
    %3069 = vmatprep.subr.mxu0 0.0
    %3070 = vmatpush1.msra.mxu0 0.0
    %3071 = vmatprep.subr.mxu0 0.0
    %3072 = vmatpush1.msra.mxu0 0.0
    %3073 = vmatprep.subr.mxu0 0.0
    %3074 = vmatpush1.msra.mxu0 0.0
    %3075 = vmatprep.subr.mxu0 0.0
    %3076 = vmatpush1.msra.mxu0 0.0
    %3077 = vmatprep.subr.mxu0 0.0
    %3078 = vmatpush1.msra.mxu0 0.0
    %3079 = vmatprep.subr.mxu0 0.0
    %3080 = vmatpush1.msra.mxu0 0.0
    %3081 = vmatprep.subr.mxu0 0.0
    %3082 = vmatpush1.msra.mxu0 0.0
    %3083 = vmatprep.subr.mxu0 0.0
    %3084 = vmatpush1.msra.mxu0 0.0
    %3085 = vmatprep.subr.mxu0 0.0
    %3086 = vmatpush1.msra.mxu0 0.0
    %3087 = vmatprep.subr.mxu0 0.0
    %3088 = vmatpush1.msra.mxu0 0.0
    %3089 = vmatprep.subr.mxu0 0.0
    %3090 = vmatpush1.msra.mxu0 0.0
    %3091 = vmatprep.mubr.f32.mxu0 0.0
    %3092 = vmatmul.mubr.f32.gmra.mrb[0].mxu0 %v3025
    %v3093 = vpop.f32.mrb[0].mxu0
    %v3094 = vadd.f32 %v275, %v3093
    %v3095 = vpop.f32.mrb[0].mxu0
    %3096 = vdwg.mxu0
    %3097 = vmatprep.subr.mxu0 0.0
    %3098 = vmatpush1.msra.mxu0 %v276
    %3099 = vmatprep.subr.mxu0 0.0
    %3100 = vmatpush1.msra.mxu0 %v277
    %3101 = vmatprep.subr.mxu0 0.0
    %3102 = vmatpush1.msra.mxu0 %v278
    %3103 = vmatprep.subr.mxu0 0.0
    %3104 = vmatpush1.msra.mxu0 %v279
    %3105 = vmatprep.subr.mxu0 0.0
    %3106 = vmatpush1.msra.mxu0 0.0
    %3107 = vmatprep.subr.mxu0 0.0
    %3108 = vmatpush1.msra.mxu0 0.0
    %3109 = vmatprep.subr.mxu0 0.0
    %3110 = vmatpush1.msra.mxu0 0.0
    %3111 = vmatprep.subr.mxu0 0.0
    %3112 = vmatpush1.msra.mxu0 0.0
    %3113 = vmatprep.subr.mxu0 0.0
    %3114 = vmatpush1.msra.mxu0 0.0
    %3115 = vmatprep.subr.mxu0 0.0
    %3116 = vmatpush1.msra.mxu0 0.0
    %3117 = vmatprep.subr.mxu0 0.0
    %3118 = vmatpush1.msra.mxu0 0.0
    %3119 = vmatprep.subr.mxu0 0.0
    %3120 = vmatpush1.msra.mxu0 0.0
    %3121 = vmatprep.subr.mxu0 0.0
    %3122 = vmatpush1.msra.mxu0 0.0
    %3123 = vmatprep.subr.mxu0 0.0
    %3124 = vmatpush1.msra.mxu0 0.0
    %3125 = vmatprep.subr.mxu0 0.0
    %3126 = vmatpush1.msra.mxu0 0.0
    %3127 = vmatprep.subr.mxu0 0.0
    %3128 = vmatpush1.msra.mxu0 0.0
    %3129 = vmatprep.subr.mxu0 0.0
    %3130 = vmatpush1.msra.mxu0 0.0
    %3131 = vmatprep.subr.mxu0 0.0
    %3132 = vmatpush1.msra.mxu0 0.0
    %3133 = vmatprep.subr.mxu0 0.0
    %3134 = vmatpush1.msra.mxu0 0.0
    %3135 = vmatprep.subr.mxu0 0.0
    %3136 = vmatpush1.msra.mxu0 0.0
    %3137 = vmatprep.subr.mxu0 0.0
    %3138 = vmatpush1.msra.mxu0 0.0
    %3139 = vmatprep.subr.mxu0 0.0
    %3140 = vmatpush1.msra.mxu0 0.0
    %3141 = vmatprep.subr.mxu0 0.0
    %3142 = vmatpush1.msra.mxu0 0.0
    %3143 = vmatprep.subr.mxu0 0.0
    %3144 = vmatpush1.msra.mxu0 0.0
    %3145 = vmatprep.subr.mxu0 0.0
    %3146 = vmatpush1.msra.mxu0 0.0
    %3147 = vmatprep.subr.mxu0 0.0
    %3148 = vmatpush1.msra.mxu0 0.0
    %3149 = vmatprep.subr.mxu0 0.0
    %3150 = vmatpush1.msra.mxu0 0.0
    %3151 = vmatprep.subr.mxu0 0.0
    %3152 = vmatpush1.msra.mxu0 0.0
    %3153 = vmatprep.subr.mxu0 0.0
    %3154 = vmatpush1.msra.mxu0 0.0
    %3155 = vmatprep.subr.mxu0 0.0
    %3156 = vmatpush1.msra.mxu0 0.0
    %3157 = vmatprep.subr.mxu0 0.0
    %3158 = vmatpush1.msra.mxu0 0.0
    %3159 = vmatprep.subr.mxu0 0.0
    %3160 = vmatpush1.msra.mxu0 0.0
    %3161 = vmatprep.mubr.f32.mxu0 0.0
    %3162 = vmatmul.mubr.f32.gmra.mrb[0].mxu0 %v2783
    %v3163 = vpop.f32.mrb[0].mxu0
    %v3164 = vadd.f32 %v280, %v3163
    %v3165 = vpop.f32.mrb[0].mxu0
    %3166 = vdwg.mxu0
    %v3167 = vadd.f32 %v3094, %v3164
    %v3168 = vxor.u32 %v3167, 2147483648
    %v3169 = vmul.f32 %v3168, 1.442695
    %v3170 = vpow.pop %v3169
    %v3171 = vadd.f32 %v3170, 1.0
    %v3172 = vrcp.pop %v3171
    %v3173 = vmul.f32 1.0, %v3172
    %3175 = vrot.lane.b32.xlu0 %v3164, 64
    %v3176 = vpop.permute.xlu0 %3175
    %v3178 = vmul.f32 %v3173, %v3176
    %3180 = vrot.lane.b32.xlu0 %v3178, 64
    %v3181 = vpop.permute.xlu0 %3180
    %v3183 = vadd.f32 %v3094, %v3181
    %v3184 = vtanh.pop %v3183
    %v3185 = vsub.f32 1.0, %v3173
    %3187 = vrot.lane.b32.xlu0 %v3184, 96
    %v3188 = vpop.permute.xlu0 %3187
    %v3190 = vmul.f32 %v3185, %v3188
    %v3191 = vmul.f32 %v3173, %v2776
    %v3192 = vadd.f32 %v3190, %v3191
    %3194 = vrot.lane.b32.xlu0 %v3192, 96
    %v3195 = vpop.permute.xlu0 %3194
    %3197 = vst.msk [vmem:[#allocation7 + $0x6] sm:$0x1] %vm65, %v3195
    %3198 = vst.msk [vmem:[#allocation9] sm:$0x40] %vm2859, %v2870
    %v3199 = vsel %vm107, %v3195, 0
    %3201 = vmatprep.subr.mxu0 0.0
    %3202 = vmatpush1.msra.mxu0 %v263
    %3203 = vmatprep.subr.mxu0 0.0
    %3204 = vmatpush1.msra.mxu0 %v264
    %3205 = vmatprep.subr.mxu0 0.0
    %3206 = vmatpush1.msra.mxu0 %v265
    %3207 = vmatprep.subr.mxu0 0.0
    %3208 = vmatpush1.msra.mxu0 %v266
    %3209 = vmatprep.subr.mxu0 0.0
    %3210 = vmatpush1.msra.mxu0 0.0
    %3211 = vmatprep.subr.mxu0 0.0
    %3212 = vmatpush1.msra.mxu0 0.0
    %3213 = vmatprep.subr.mxu0 0.0
    %3214 = vmatpush1.msra.mxu0 0.0
    %3215 = vmatprep.subr.mxu0 0.0
    %3216 = vmatpush1.msra.mxu0 0.0
    %3217 = vmatprep.subr.mxu0 0.0
    %3218 = vmatpush1.msra.mxu0 0.0
    %3219 = vmatprep.subr.mxu0 0.0
    %3220 = vmatpush1.msra.mxu0 0.0
    %3221 = vmatprep.subr.mxu0 0.0
    %3222 = vmatpush1.msra.mxu0 0.0
    %3223 = vmatprep.subr.mxu0 0.0
    %3224 = vmatpush1.msra.mxu0 0.0
    %3225 = vmatprep.subr.mxu0 0.0
    %3226 = vmatpush1.msra.mxu0 0.0
    %3227 = vmatprep.subr.mxu0 0.0
    %3228 = vmatpush1.msra.mxu0 0.0
    %3229 = vmatprep.subr.mxu0 0.0
    %3230 = vmatpush1.msra.mxu0 0.0
    %3231 = vmatprep.subr.mxu0 0.0
    %3232 = vmatpush1.msra.mxu0 0.0
    %3233 = vmatprep.subr.mxu0 0.0
    %3234 = vmatpush1.msra.mxu0 0.0
    %3235 = vmatprep.subr.mxu0 0.0
    %3236 = vmatpush1.msra.mxu0 0.0
    %3237 = vmatprep.subr.mxu0 0.0
    %3238 = vmatpush1.msra.mxu0 0.0
    %3239 = vmatprep.subr.mxu0 0.0
    %3240 = vmatpush1.msra.mxu0 0.0
    %3241 = vmatprep.subr.mxu0 0.0
    %3242 = vmatpush1.msra.mxu0 0.0
    %3243 = vmatprep.subr.mxu0 0.0
    %3244 = vmatpush1.msra.mxu0 0.0
    %3245 = vmatprep.subr.mxu0 0.0
    %3246 = vmatpush1.msra.mxu0 0.0
    %3247 = vmatprep.subr.mxu0 0.0
    %3248 = vmatpush1.msra.mxu0 0.0
    %3249 = vmatprep.subr.mxu0 0.0
    %3250 = vmatpush1.msra.mxu0 0.0
    %3251 = vmatprep.subr.mxu0 0.0
    %3252 = vmatpush1.msra.mxu0 0.0
    %3253 = vmatprep.subr.mxu0 0.0
    %3254 = vmatpush1.msra.mxu0 0.0
    %3255 = vmatprep.subr.mxu0 0.0
    %3256 = vmatpush1.msra.mxu0 0.0
    %3257 = vmatprep.subr.mxu0 0.0
    %3258 = vmatpush1.msra.mxu0 0.0
    %3259 = vmatprep.subr.mxu0 0.0
    %3260 = vmatpush1.msra.mxu0 0.0
    %3261 = vmatprep.subr.mxu0 0.0
    %3262 = vmatpush1.msra.mxu0 0.0
    %3263 = vmatprep.subr.mxu0 0.0
    %3264 = vmatpush1.msra.mxu0 0.0
    %3265 = vmatprep.mubr.f32.mxu0 0.0
    %3266 = vmatmul.mubr.f32.gmra.mrb[0].mxu0 %v3199
    %v3267 = vpop.f32.mrb[0].mxu0
    %v3268 = vadd.f32 0.0, %v3267
    %v3269 = vpop.f32.mrb[0].mxu0
    %3270 = vdwg.mxu0
    %v3272 = vrot.slane %v3268, 1
    %v3274 = vadd.f32 %v178, %v3272
    %vm3275 = vcmask 39943
    %v3276 = vsel %vm3275, %v3274, -inf
    %3277 = vmax.xlane.f32.xlu0 %v3276
    %v3278 = vpop.xlane.xlu0 %3277
    %v3279 = vsub.f32 %v3274, %v3278
    %v3280 = vmul.f32 %v3279, 1.442695
    %v3281 = vpow.pop %v3280
    %v3282 = vsel %vm3275, %v3281, 0.0
    %3283 = vadd.xlane.f32.xlu0 %v3282
    %v3284 = vpop.xlane.xlu0 %3283
    %v3285 = vrcp.pop %v3284
    %v3286 = vmul.f32 %v3281, %v3285
    %v3288 = vrot.slane %v3286, 7
    %v3289 = vsel %vm368, %v3288, 0
    %3291 = vmatprep.subr.mxu0 0.0
    %3292 = vmatpush1.msra.mxu0 %v374
    %3293 = vmatprep.subr.mxu0 0.0
    %3294 = vmatpush1.msra.mxu0 0.0
    %3295 = vmatprep.subr.mxu0 0.0
    %3296 = vmatpush1.msra.mxu0 0.0
    %3297 = vmatprep.subr.mxu0 0.0
    %3298 = vmatpush1.msra.mxu0 0.0
    %3299 = vmatprep.subr.mxu0 0.0
    %3300 = vmatpush1.msra.mxu0 0.0
    %3301 = vmatprep.subr.mxu0 0.0
    %3302 = vmatpush1.msra.mxu0 0.0
    %3303 = vmatprep.subr.mxu0 0.0
    %3304 = vmatpush1.msra.mxu0 0.0
    %3305 = vmatprep.subr.mxu0 0.0
    %3306 = vmatpush1.msra.mxu0 0.0
    %3307 = vmatprep.subr.mxu0 0.0
    %3308 = vmatpush1.msra.mxu0 0.0
    %3309 = vmatprep.subr.mxu0 0.0
    %3310 = vmatpush1.msra.mxu0 0.0
    %3311 = vmatprep.subr.mxu0 0.0
    %3312 = vmatpush1.msra.mxu0 0.0
    %3313 = vmatprep.subr.mxu0 0.0
    %3314 = vmatpush1.msra.mxu0 0.0
    %3315 = vmatprep.subr.mxu0 0.0
    %3316 = vmatpush1.msra.mxu0 0.0
    %3317 = vmatprep.subr.mxu0 0.0
    %3318 = vmatpush1.msra.mxu0 0.0
    %3319 = vmatprep.subr.mxu0 0.0
    %3320 = vmatpush1.msra.mxu0 0.0
    %3321 = vmatprep.subr.mxu0 0.0
    %3322 = vmatpush1.msra.mxu0 0.0
    %3323 = vmatprep.subr.mxu0 0.0
    %3324 = vmatpush1.msra.mxu0 0.0
    %3325 = vmatprep.subr.mxu0 0.0
    %3326 = vmatpush1.msra.mxu0 0.0
    %3327 = vmatprep.subr.mxu0 0.0
    %3328 = vmatpush1.msra.mxu0 0.0
    %3329 = vmatprep.subr.mxu0 0.0
    %3330 = vmatpush1.msra.mxu0 0.0
    %3331 = vmatprep.subr.mxu0 0.0
    %3332 = vmatpush1.msra.mxu0 0.0
    %3333 = vmatprep.subr.mxu0 0.0
    %3334 = vmatpush1.msra.mxu0 0.0
    %3335 = vmatprep.subr.mxu0 0.0
    %3336 = vmatpush1.msra.mxu0 0.0
    %3337 = vmatprep.subr.mxu0 0.0
    %3338 = vmatpush1.msra.mxu0 0.0
    %3339 = vmatprep.subr.mxu0 0.0
    %3340 = vmatpush1.msra.mxu0 0.0
    %3341 = vmatprep.subr.mxu0 0.0
    %3342 = vmatpush1.msra.mxu0 0.0
    %3343 = vmatprep.subr.mxu0 0.0
    %3344 = vmatpush1.msra.mxu0 0.0
    %3345 = vmatprep.subr.mxu0 0.0
    %3346 = vmatpush1.msra.mxu0 0.0
    %3347 = vmatprep.subr.mxu0 0.0
    %3348 = vmatpush1.msra.mxu0 0.0
    %3349 = vmatprep.subr.mxu0 0.0
    %3350 = vmatpush1.msra.mxu0 0.0
    %3351 = vmatprep.subr.mxu0 0.0
    %3352 = vmatpush1.msra.mxu0 0.0
    %3353 = vmatprep.subr.mxu0 0.0
    %3354 = vmatpush1.msra.mxu0 0.0
    %3355 = vmatprep.mubr.f32.mxu0 0.0
    %3356 = vmatmul.mubr.f32.gmra.mrb[0].mxu0 %v3289
    %v3357 = vpop.f32.mrb[0].mxu0
    %v3358 = vadd.f32 0.0, %v3357
    %v3359 = vpop.f32.mrb[0].mxu0
    %3360 = vdwg.mxu0
    %v3362 = vsel %vm107, %v3358, 0
    %3364 = vmatprep.subr.mxu0 0.0
    %3365 = vmatpush1.msra.mxu0 %v267
    %3366 = vmatprep.subr.mxu0 0.0
    %3367 = vmatpush1.msra.mxu0 %v268
    %3368 = vmatprep.subr.mxu0 0.0
    %3369 = vmatpush1.msra.mxu0 %v269
    %3370 = vmatprep.subr.mxu0 0.0
    %3371 = vmatpush1.msra.mxu0 %v270
    %3372 = vmatprep.subr.mxu0 0.0
    %3373 = vmatpush1.msra.mxu0 0.0
    %3374 = vmatprep.subr.mxu0 0.0
    %3375 = vmatpush1.msra.mxu0 0.0
    %3376 = vmatprep.subr.mxu0 0.0
    %3377 = vmatpush1.msra.mxu0 0.0
    %3378 = vmatprep.subr.mxu0 0.0
    %3379 = vmatpush1.msra.mxu0 0.0
    %3380 = vmatprep.subr.mxu0 0.0
    %3381 = vmatpush1.msra.mxu0 0.0
    %3382 = vmatprep.subr.mxu0 0.0
    %3383 = vmatpush1.msra.mxu0 0.0
    %3384 = vmatprep.subr.mxu0 0.0
    %3385 = vmatpush1.msra.mxu0 0.0
    %3386 = vmatprep.subr.mxu0 0.0
    %3387 = vmatpush1.msra.mxu0 0.0
    %3388 = vmatprep.subr.mxu0 0.0
    %3389 = vmatpush1.msra.mxu0 0.0
    %3390 = vmatprep.subr.mxu0 0.0
    %3391 = vmatpush1.msra.mxu0 0.0
    %3392 = vmatprep.subr.mxu0 0.0
    %3393 = vmatpush1.msra.mxu0 0.0
    %3394 = vmatprep.subr.mxu0 0.0
    %3395 = vmatpush1.msra.mxu0 0.0
    %3396 = vmatprep.subr.mxu0 0.0
    %3397 = vmatpush1.msra.mxu0 0.0
    %3398 = vmatprep.subr.mxu0 0.0
    %3399 = vmatpush1.msra.mxu0 0.0
    %3400 = vmatprep.subr.mxu0 0.0
    %3401 = vmatpush1.msra.mxu0 0.0
    %3402 = vmatprep.subr.mxu0 0.0
    %3403 = vmatpush1.msra.mxu0 0.0
    %3404 = vmatprep.subr.mxu0 0.0
    %3405 = vmatpush1.msra.mxu0 0.0
    %3406 = vmatprep.subr.mxu0 0.0
    %3407 = vmatpush1.msra.mxu0 0.0
    %3408 = vmatprep.subr.mxu0 0.0
    %3409 = vmatpush1.msra.mxu0 0.0
    %3410 = vmatprep.subr.mxu0 0.0
    %3411 = vmatpush1.msra.mxu0 0.0
    %3412 = vmatprep.subr.mxu0 0.0
    %3413 = vmatpush1.msra.mxu0 0.0
    %3414 = vmatprep.subr.mxu0 0.0
    %3415 = vmatpush1.msra.mxu0 0.0
    %3416 = vmatprep.subr.mxu0 0.0
    %3417 = vmatpush1.msra.mxu0 0.0
    %3418 = vmatprep.subr.mxu0 0.0
    %3419 = vmatpush1.msra.mxu0 0.0
    %3420 = vmatprep.subr.mxu0 0.0
    %3421 = vmatpush1.msra.mxu0 0.0
    %3422 = vmatprep.subr.mxu0 0.0
    %3423 = vmatpush1.msra.mxu0 0.0
    %3424 = vmatprep.subr.mxu0 0.0
    %3425 = vmatpush1.msra.mxu0 0.0
    %3426 = vmatprep.subr.mxu0 0.0
    %3427 = vmatpush1.msra.mxu0 0.0
    %3428 = vmatprep.mubr.f32.mxu0 0.0
    %3429 = vmatmul.mubr.f32.gmra.mrb[0].mxu0 %v3362
    %v3430 = vpop.f32.mrb[0].mxu0
    %v3431 = vadd.f32 0.0, %v3430
    %v3432 = vpop.f32.mrb[0].mxu0
    %3433 = vdwg.mxu0
    %v3435 = vrot.slane %v3431, 1
    %v3437 = vadd.f32 %v259, %v3435
    %v3438 = vmax.f32 %v3437, 0.0
    %v3440 = vrot.slane %v3438, 7
    %v3441 = vsel %vm107, %v3440, 0
    %3443 = vmatprep.subr.mxu0 0.0
    %3444 = vmatpush1.msra.mxu0 %v271
    %3445 = vmatprep.subr.mxu0 0.0
    %3446 = vmatpush1.msra.mxu0 %v272
    %3447 = vmatprep.subr.mxu0 0.0
    %3448 = vmatpush1.msra.mxu0 %v273
    %3449 = vmatprep.subr.mxu0 0.0
    %3450 = vmatpush1.msra.mxu0 %v274
    %3451 = vmatprep.subr.mxu0 0.0
    %3452 = vmatpush1.msra.mxu0 0.0
    %3453 = vmatprep.subr.mxu0 0.0
    %3454 = vmatpush1.msra.mxu0 0.0
    %3455 = vmatprep.subr.mxu0 0.0
    %3456 = vmatpush1.msra.mxu0 0.0
    %3457 = vmatprep.subr.mxu0 0.0
    %3458 = vmatpush1.msra.mxu0 0.0
    %3459 = vmatprep.subr.mxu0 0.0
    %3460 = vmatpush1.msra.mxu0 0.0
    %3461 = vmatprep.subr.mxu0 0.0
    %3462 = vmatpush1.msra.mxu0 0.0
    %3463 = vmatprep.subr.mxu0 0.0
    %3464 = vmatpush1.msra.mxu0 0.0
    %3465 = vmatprep.subr.mxu0 0.0
    %3466 = vmatpush1.msra.mxu0 0.0
    %3467 = vmatprep.subr.mxu0 0.0
    %3468 = vmatpush1.msra.mxu0 0.0
    %3469 = vmatprep.subr.mxu0 0.0
    %3470 = vmatpush1.msra.mxu0 0.0
    %3471 = vmatprep.subr.mxu0 0.0
    %3472 = vmatpush1.msra.mxu0 0.0
    %3473 = vmatprep.subr.mxu0 0.0
    %3474 = vmatpush1.msra.mxu0 0.0
    %3475 = vmatprep.subr.mxu0 0.0
    %3476 = vmatpush1.msra.mxu0 0.0
    %3477 = vmatprep.subr.mxu0 0.0
    %3478 = vmatpush1.msra.mxu0 0.0
    %3479 = vmatprep.subr.mxu0 0.0
    %3480 = vmatpush1.msra.mxu0 0.0
    %3481 = vmatprep.subr.mxu0 0.0
    %3482 = vmatpush1.msra.mxu0 0.0
    %3483 = vmatprep.subr.mxu0 0.0
    %3484 = vmatpush1.msra.mxu0 0.0
    %3485 = vmatprep.subr.mxu0 0.0
    %3486 = vmatpush1.msra.mxu0 0.0
    %3487 = vmatprep.subr.mxu0 0.0
    %3488 = vmatpush1.msra.mxu0 0.0
    %3489 = vmatprep.subr.mxu0 0.0
    %3490 = vmatpush1.msra.mxu0 0.0
    %3491 = vmatprep.subr.mxu0 0.0
    %3492 = vmatpush1.msra.mxu0 0.0
    %3493 = vmatprep.subr.mxu0 0.0
    %3494 = vmatpush1.msra.mxu0 0.0
    %3495 = vmatprep.subr.mxu0 0.0
    %3496 = vmatpush1.msra.mxu0 0.0
    %3497 = vmatprep.subr.mxu0 0.0
    %3498 = vmatpush1.msra.mxu0 0.0
    %3499 = vmatprep.subr.mxu0 0.0
    %3500 = vmatpush1.msra.mxu0 0.0
    %3501 = vmatprep.subr.mxu0 0.0
    %3502 = vmatpush1.msra.mxu0 0.0
    %3503 = vmatprep.subr.mxu0 0.0
    %3504 = vmatpush1.msra.mxu0 0.0
    %3505 = vmatprep.subr.mxu0 0.0
    %3506 = vmatpush1.msra.mxu0 0.0
    %3507 = vmatprep.mubr.f32.mxu0 0.0
    %3508 = vmatmul.mubr.f32.gmra.mrb[0].mxu0 %v3441
    %v3509 = vpop.f32.mrb[0].mxu0
    %v3510 = vadd.f32 %v275, %v3509
    %v3511 = vpop.f32.mrb[0].mxu0
    %3512 = vdwg.mxu0
    %3513 = vmatprep.subr.mxu0 0.0
    %3514 = vmatpush1.msra.mxu0 %v276
    %3515 = vmatprep.subr.mxu0 0.0
    %3516 = vmatpush1.msra.mxu0 %v277
    %3517 = vmatprep.subr.mxu0 0.0
    %3518 = vmatpush1.msra.mxu0 %v278
    %3519 = vmatprep.subr.mxu0 0.0
    %3520 = vmatpush1.msra.mxu0 %v279
    %3521 = vmatprep.subr.mxu0 0.0
    %3522 = vmatpush1.msra.mxu0 0.0
    %3523 = vmatprep.subr.mxu0 0.0
    %3524 = vmatpush1.msra.mxu0 0.0
    %3525 = vmatprep.subr.mxu0 0.0
    %3526 = vmatpush1.msra.mxu0 0.0
    %3527 = vmatprep.subr.mxu0 0.0
    %3528 = vmatpush1.msra.mxu0 0.0
    %3529 = vmatprep.subr.mxu0 0.0
    %3530 = vmatpush1.msra.mxu0 0.0
    %3531 = vmatprep.subr.mxu0 0.0
    %3532 = vmatpush1.msra.mxu0 0.0
    %3533 = vmatprep.subr.mxu0 0.0
    %3534 = vmatpush1.msra.mxu0 0.0
    %3535 = vmatprep.subr.mxu0 0.0
    %3536 = vmatpush1.msra.mxu0 0.0
    %3537 = vmatprep.subr.mxu0 0.0
    %3538 = vmatpush1.msra.mxu0 0.0
    %3539 = vmatprep.subr.mxu0 0.0
    %3540 = vmatpush1.msra.mxu0 0.0
    %3541 = vmatprep.subr.mxu0 0.0
    %3542 = vmatpush1.msra.mxu0 0.0
    %3543 = vmatprep.subr.mxu0 0.0
    %3544 = vmatpush1.msra.mxu0 0.0
    %3545 = vmatprep.subr.mxu0 0.0
    %3546 = vmatpush1.msra.mxu0 0.0
    %3547 = vmatprep.subr.mxu0 0.0
    %3548 = vmatpush1.msra.mxu0 0.0
    %3549 = vmatprep.subr.mxu0 0.0
    %3550 = vmatpush1.msra.mxu0 0.0
    %3551 = vmatprep.subr.mxu0 0.0
    %3552 = vmatpush1.msra.mxu0 0.0
    %3553 = vmatprep.subr.mxu0 0.0
    %3554 = vmatpush1.msra.mxu0 0.0
    %3555 = vmatprep.subr.mxu0 0.0
    %3556 = vmatpush1.msra.mxu0 0.0
    %3557 = vmatprep.subr.mxu0 0.0
    %3558 = vmatpush1.msra.mxu0 0.0
    %3559 = vmatprep.subr.mxu0 0.0
    %3560 = vmatpush1.msra.mxu0 0.0
    %3561 = vmatprep.subr.mxu0 0.0
    %3562 = vmatpush1.msra.mxu0 0.0
    %3563 = vmatprep.subr.mxu0 0.0
    %3564 = vmatpush1.msra.mxu0 0.0
    %3565 = vmatprep.subr.mxu0 0.0
    %3566 = vmatpush1.msra.mxu0 0.0
    %3567 = vmatprep.subr.mxu0 0.0
    %3568 = vmatpush1.msra.mxu0 0.0
    %3569 = vmatprep.subr.mxu0 0.0
    %3570 = vmatpush1.msra.mxu0 0.0
    %3571 = vmatprep.subr.mxu0 0.0
    %3572 = vmatpush1.msra.mxu0 0.0
    %3573 = vmatprep.subr.mxu0 0.0
    %3574 = vmatpush1.msra.mxu0 0.0
    %3575 = vmatprep.subr.mxu0 0.0
    %3576 = vmatpush1.msra.mxu0 0.0
    %3577 = vmatprep.mubr.f32.mxu0 0.0
    %3578 = vmatmul.mubr.f32.gmra.mrb[0].mxu0 %v3199
    %v3579 = vpop.f32.mrb[0].mxu0
    %v3580 = vadd.f32 %v280, %v3579
    %v3581 = vpop.f32.mrb[0].mxu0
    %3582 = vdwg.mxu0
    %v3583 = vadd.f32 %v3510, %v3580
    %v3584 = vxor.u32 %v3583, 2147483648
    %v3585 = vmul.f32 %v3584, 1.442695
    %v3586 = vpow.pop %v3585
    %v3587 = vadd.f32 %v3586, 1.0
    %v3588 = vrcp.pop %v3587
    %v3589 = vmul.f32 1.0, %v3588
    %3591 = vrot.lane.b32.xlu0 %v3580, 64
    %v3592 = vpop.permute.xlu0 %3591
    %v3594 = vmul.f32 %v3589, %v3592
    %3596 = vrot.lane.b32.xlu0 %v3594, 64
    %v3597 = vpop.permute.xlu0 %3596
    %v3599 = vadd.f32 %v3510, %v3597
    %v3600 = vtanh.pop %v3599
    %v3601 = vsub.f32 1.0, %v3589
    %3603 = vrot.lane.b32.xlu0 %v3600, 96
    %v3604 = vpop.permute.xlu0 %3603
    %v3606 = vmul.f32 %v3601, %v3604
    %v3607 = vmul.f32 %v3589, %v3192
    %v3608 = vadd.f32 %v3606, %v3607
    %3610 = vrot.lane.b32.xlu0 %v3608, 96
    %v3611 = vpop.permute.xlu0 %3610
    %3613 = vst.msk [vmem:[#allocation7 + $0x7] sm:$0x1] %vm65, %v3611
    %3614 = vst.msk [vmem:[#allocation9] sm:$0x80] %vm3275, %v3286
    %v3615 = vld [vmem:[#allocation7] sm:$0xff]
    %v3616 = vld [vmem:[%s14] sm:$0xff]
    %v3617 = vld [vmem:[%s14 + $0x8] sm:$0xff]
    %v3618 = vld [vmem:[%s14 + $0x10] sm:$0xff]
    %v3619 = vld [vmem:[%s14 + $0x18] sm:$0xff]
    %v3620 = vld [vmem:[%s15] sm:$0x1]
    %v3622 = vlaneseq
    %v3623 = vshrl.u32 %v3622, 7
    %v3624 = vsub.s32 0, %v3623
    %v3625 = vrot.slane %v3620, %v3624
    %v3628 = vsel %vm107, %v3615, 0
    %3630 = vmatprep.subr.mxu0 0.0
    %3631 = vmatpush1.msra.mxu0 %v3616
    %3632 = vmatprep.subr.mxu0 0.0
    %3633 = vmatpush1.msra.mxu0 %v3617
    %3634 = vmatprep.subr.mxu0 0.0
    %3635 = vmatpush1.msra.mxu0 %v3618
    %3636 = vmatprep.subr.mxu0 0.0
    %3637 = vmatpush1.msra.mxu0 %v3619
    %3638 = vmatprep.subr.mxu0 0.0
    %3639 = vmatpush1.msra.mxu0 0.0
    %3640 = vmatprep.subr.mxu0 0.0
    %3641 = vmatpush1.msra.mxu0 0.0
    %3642 = vmatprep.subr.mxu0 0.0
    %3643 = vmatpush1.msra.mxu0 0.0
    %3644 = vmatprep.subr.mxu0 0.0
    %3645 = vmatpush1.msra.mxu0 0.0
    %3646 = vmatprep.subr.mxu0 0.0
    %3647 = vmatpush1.msra.mxu0 0.0
    %3648 = vmatprep.subr.mxu0 0.0
    %3649 = vmatpush1.msra.mxu0 0.0
    %3650 = vmatprep.subr.mxu0 0.0
    %3651 = vmatpush1.msra.mxu0 0.0
    %3652 = vmatprep.subr.mxu0 0.0
    %3653 = vmatpush1.msra.mxu0 0.0
    %3654 = vmatprep.subr.mxu0 0.0
    %3655 = vmatpush1.msra.mxu0 0.0
    %3656 = vmatprep.subr.mxu0 0.0
    %3657 = vmatpush1.msra.mxu0 0.0
    %3658 = vmatprep.subr.mxu0 0.0
    %3659 = vmatpush1.msra.mxu0 0.0
    %3660 = vmatprep.subr.mxu0 0.0
    %3661 = vmatpush1.msra.mxu0 0.0
    %3662 = vmatprep.subr.mxu0 0.0
    %3663 = vmatpush1.msra.mxu0 0.0
    %3664 = vmatprep.subr.mxu0 0.0
    %3665 = vmatpush1.msra.mxu0 0.0
    %3666 = vmatprep.subr.mxu0 0.0
    %3667 = vmatpush1.msra.mxu0 0.0
    %3668 = vmatprep.subr.mxu0 0.0
    %3669 = vmatpush1.msra.mxu0 0.0
    %3670 = vmatprep.subr.mxu0 0.0
    %3671 = vmatpush1.msra.mxu0 0.0
    %3672 = vmatprep.subr.mxu0 0.0
    %3673 = vmatpush1.msra.mxu0 0.0
    %3674 = vmatprep.subr.mxu0 0.0
    %3675 = vmatpush1.msra.mxu0 0.0
    %3676 = vmatprep.subr.mxu0 0.0
    %3677 = vmatpush1.msra.mxu0 0.0
    %3678 = vmatprep.subr.mxu0 0.0
    %3679 = vmatpush1.msra.mxu0 0.0
    %3680 = vmatprep.subr.mxu0 0.0
    %3681 = vmatpush1.msra.mxu0 0.0
    %3682 = vmatprep.subr.mxu0 0.0
    %3683 = vmatpush1.msra.mxu0 0.0
    %3684 = vmatprep.subr.mxu0 0.0
    %3685 = vmatpush1.msra.mxu0 0.0
    %3686 = vmatprep.subr.mxu0 0.0
    %3687 = vmatpush1.msra.mxu0 0.0
    %3688 = vmatprep.subr.mxu0 0.0
    %3689 = vmatpush1.msra.mxu0 0.0
    %3690 = vmatprep.subr.mxu0 0.0
    %3691 = vmatpush1.msra.mxu0 0.0
    %3692 = vmatprep.subr.mxu0 0.0
    %3693 = vmatpush1.msra.mxu0 0.0
    %3694 = vmatprep.mubr.f32.mxu0 0.0
    %3695 = vmatmul.mubr.f32.gmra.mrb[0].mxu0 %v3628
    %v3696 = vpop.f32.mrb[0].mxu0
    %v3697 = vadd.f32 %v3625, %v3696
    %v3698 = vpop.f32.mrb[0].mxu0
    %3699 = vdwg.mxu0
    %vm3700 = vcmask 162816
    %v3701 = vsel %vm3700, %v3697, -inf
    %3702 = vmax.xlane.f32.xlu0 %v3701
    %v3703 = vpop.xlane.xlu0 %3702
    %v3704 = vsub.f32 %v3697, %v3703
    %v3705 = vmul.f32 %v3704, 1.442695
    %v3706 = vpow.pop %v3705
    %v3707 = vsel %vm3700, %v3706, 0.0
    %3708 = vadd.xlane.f32.xlu0 %v3707
    %v3709 = vpop.xlane.xlu0 %3708
    %v3710 = vlog2.pop %v3709
    %v3711 = vmul.f32 %v3710, 0.6931472
    %v3712 = vadd.f32 %v3711, %v3703
    %v3713 = vsub.f32 %v3697, %v3712
    %3714 = vst.msk [vmem:[#allocation5] sm:$0xff] %vm3700, %v3713
    // Predicated region
    $region62: #{attention_decoder_decode.1} parent=1 // pred_check
      _
    $region63: #{attention_decoder_decode.1} parent=1 // pred_check_branch
      %3716 = sbr.rel (0) target = $region65
    $region64: #{attention_decoder_decode.1} parent=1 // pred_region
      %s3718 = ssub.s32 128, 128
      %3719 = vsyncadd [#allocation6], %s3718
      %s3721 = sshll.u32 [#allocation5], 4
      %s3722 = int_to_ptr.vmem [resolvable:$true] %s3721
      %3724 = dma.vmem_to_hbm [thread:$0]  %s3722, 128, %s16, [#allocation6]
    $region65: #{attention_decoder_decode.1} parent=1 // pred_fallthru
      _
    // Predicated region
    $region66: #{attention_decoder_decode.1} parent=1 // pred_check
      _
    $region67: #{attention_decoder_decode.1} parent=1 // pred_check_branch
      %3726 = sbr.rel (0) target = $region69
    $region68: #{attention_decoder_decode.1} parent=1 // pred_region
      %s3728 = ssub.s32 128, 128
      %3729 = vsyncadd [#allocation8], %s3728
      %s3731 = sshll.u32 [#allocation7], 4
      %s3732 = int_to_ptr.vmem [resolvable:$true] %s3731
      %3734 = dma.vmem_to_hbm [thread:$0]  %s3732, 128, %s17, [#allocation8]
    $region69: #{attention_decoder_decode.1} parent=1 // pred_fallthru
      _
    // Predicated region
    $region70: #{attention_decoder_decode.1} parent=1 // pred_check
      _
    $region71: #{attention_decoder_decode.1} parent=1 // pred_check_branch
      %3736 = sbr.rel (0) target = $region73
    $region72: #{attention_decoder_decode.1} parent=1 // pred_region
      %s3738 = ssub.s32 128, 128
      %3739 = vsyncadd [#allocation8], %s3738
      %s3741 = sshll.u32 [#allocation9], 4
      %s3742 = int_to_ptr.vmem [resolvable:$true] %s3741
      %3744 = dma.vmem_to_hbm [thread:$0]  %s3742, 128, %s18, [#allocation8]
    $region73: #{attention_decoder_decode.1} parent=1 // pred_fallthru
      _
    // Predicated region
    $region74: #{attention_decoder_decode.1} parent=1 // pred_check
      _
    $region75: #{attention_decoder_decode.1} parent=1 // pred_check_branch
      %3746 = sbr.rel (0) target = $region77
    $region76: #{attention_decoder_decode.1} parent=1 // pred_region
      %3747 = dma.done [#allocation6], 128
    $region77: #{attention_decoder_decode.1} parent=1 // pred_fallthru
      _
    // Predicated region
    $region78: #{attention_decoder_decode.1} parent=1 // pred_check
      _
    $region79: #{attention_decoder_decode.1} parent=1 // pred_check_branch
      %3749 = sbr.rel (0) target = $region81
    $region80: #{attention_decoder_decode.1} parent=1 // pred_region
      %3750 = dma.done [#allocation8], 128
    $region81: #{attention_decoder_decode.1} parent=1 // pred_fallthru
      _
    // Predicated region
    $region82: #{attention_decoder_decode.1} parent=1 // pred_check
      _
    $region83: #{attention_decoder_decode.1} parent=1 // pred_check_branch
      %3752 = sbr.rel (0) target = $region85
    $region84: #{attention_decoder_decode.1} parent=1 // pred_region
      %3753 = dma.done [#allocation8], 128
    $region85: #{attention_decoder_decode.1} parent=1 // pred_fallthru
      _
    %3754 = vsyncpa [#allocation6], 1
    %3755 = vsyncpa [#allocation8], 1

</llo_original>
